<compile_context>
chip_gen: v7x
topology: tpu7x:2x2x1
jax: 0.10.0
libtpu: 0.0.40
codegen_flags: <defaults>
</compile_context>

<pallas_src>
import numpy as np
import jax
import jax.numpy as jnp
from jax.experimental import pallas as pl
from jax.experimental.pallas import tpu as pltpu

_EPS = 1e-5  # torch.nn.InstanceNorm1d default


def _point_resnet_kernel(x_ref, w_in_ref, b_in_ref, wa_ref, w2_ref, out_ref):
    # x_ref:   (1, cin_p, N)   one batch element, channels-first (PyTorch layout)
    # w_in:    (F, cin_p)      b_in: (F, 1)
    # wa:      (L, M, F)       folded W1 @ W_pre
    # w2:      (L, F, M)
    # out_ref: (1, F, N)       doubles as the residual-stream accumulator h
    x = x_ref[0]                                                     # (cin_p, N)

    # conv_in stem (1x1 conv == per-point matmul, channels-first: y = W @ x + b).
    out_ref[0] = (jnp.dot(w_in_ref[...], x, preferred_element_type=jnp.float32)
                  + b_in_ref[...])

    def inst_norm(t):
        # InstanceNorm1d(affine=False): per-channel stats over the point (lane) dim.
        mean = jnp.mean(t, axis=1, keepdims=True)                    # (C, 1)
        var = jnp.mean(jnp.square(t - mean), axis=1, keepdims=True)  # (C, 1)
        return (t - mean) * jax.lax.rsqrt(var + _EPS)

    def layer(l, carry):
        h = out_ref[0]                                               # (F, N) residual input
        # preconv + conv1 folded into one matmul (biases cancelled by the norm).
        u = inst_norm(jnp.dot(wa_ref[l], h, preferred_element_type=jnp.float32))
        t = inst_norm(jnp.dot(w2_ref[l], u, preferred_element_type=jnp.float32))
        out_ref[0] = jnp.maximum(t, 0.0) + h                         # ReLU + residual
        return carry

    jax.lax.fori_loop(0, wa_ref.shape[0], layer, 0)


def init_point_resnet_params(key, in_channel, feat_channel=128, mid_channel=128,
                             num_layers=12):
    """Deterministic random parameters in PyTorch Conv1d layout: weight (C_out, C_in),
    bias stored as (C_out, 1) for channels-first broadcasting."""
    ks = jax.random.split(key, 8)

    def w(k, shape, fan_in):
        return jax.random.normal(k, shape, dtype=jnp.float32) / np.sqrt(fan_in)

    return dict(
        w_in=w(ks[0], (feat_channel, in_channel), in_channel),
        b_in=w(ks[1], (feat_channel, 1), feat_channel),
        w_pre=w(ks[2], (num_layers, mid_channel, feat_channel), feat_channel),
        b_pre=w(ks[3], (num_layers, mid_channel, 1), mid_channel),
        w1=w(ks[4], (num_layers, mid_channel, mid_channel), mid_channel),
        b1=w(ks[5], (num_layers, mid_channel, 1), mid_channel),
        w2=w(ks[6], (num_layers, feat_channel, mid_channel), mid_channel),
        b2=w(ks[7], (num_layers, feat_channel, 1), feat_channel),
    )


def _vmem_limit_bytes():
    try:
        cap = int(pltpu.get_tpu_info().vmem_capacity_bytes)
    except Exception:
        cap = 64 << 20                      # conservative (v7x per-core physical)
    return max(32 << 20, cap - (16 << 20))  # leave headroom below physical VMEM


def point_resnet_forward(x, params):
    """x: (B, C_in, N) float32 (PyTorch Conv1d layout). Returns (B, feat_channel, N)."""
    B, cin, N = x.shape
    feat = params["w_in"].shape[0]
    L, mid, _ = params["w_pre"].shape
    hp = jax.lax.Precision.HIGHEST

    # Weight fold (done once, high precision): Wa = W1 @ W_pre.  Biases b_pre/b1/b2 are
    # provably cancelled by InstanceNorm(affine=False) and are not passed to the kernel.
    wa = jnp.einsum("lij,ljk->lik", params["w1"], params["w_pre"], precision=hp)  # (L,M,F)
    w2 = params["w2"]                                                              # (L,F,M)

    # Pad Cin only to a sublane multiple of 8 (not 128) — cheap, keeps the stem matmul
    # K-dim aligned without inflating input HBM traffic.
    cin_p = -(-cin // 8) * 8
    xk = x.astype(jnp.float32)
    w_in = params["w_in"]
    if cin_p != cin:
        xk = jnp.pad(xk, ((0, 0), (0, cin_p - cin), (0, 0)))
        w_in = jnp.pad(w_in, ((0, 0), (0, cin_p - cin)))
    b_in = params["b_in"]

    def build(single_buffer_weights):
        def wspec(shape):
            idx = (lambda b: (0, 0)) if len(shape) == 2 else (lambda b: (0, 0, 0))
            if single_buffer_weights:
                # constant index_map -> fetched once; no need for double buffering
                return pl.BlockSpec(shape, idx, pipeline_mode=pl.Buffered(1))
            return pl.BlockSpec(shape, idx)

        return pl.pallas_call(
            _point_resnet_kernel,
            out_shape=jax.ShapeDtypeStruct((B, feat, N), jnp.float32),
            grid_spec=pltpu.PrefetchScalarGridSpec(
                num_scalar_prefetch=0,
                grid=(B,),
                in_specs=[
                    pl.BlockSpec((1, cin_p, N), lambda b: (b, 0, 0)),  # x: one batch slab
                    wspec((feat, cin_p)),                              # weights: VMEM resident
                    wspec((feat, 1)),
                    wspec((L, mid, feat)),
                    wspec((L, feat, mid)),
                ],
                out_specs=pl.BlockSpec((1, feat, N), lambda b: (b, 0, 0)),
            ),
            compiler_params=pltpu.CompilerParams(
                dimension_semantics=("parallel",),        # batch shards across TCs (v7x)
                vmem_limit_bytes=_vmem_limit_bytes(),     # portable across v5e/v6e/v7x
            ),
        )

    args = (xk, w_in, b_in, wa, w2)
    try:
        return build(True)(*args)
    except Exception:
        # Fallback if this JAX/Mosaic version rejects pipeline_mode=pl.Buffered(1).
        return build(False)(*args)


def _reference_forward(x, params):
    """Pure-JAX mirror of PointResNet.forward (defaults: ins-norm, relu, residual),
    including the biases that the kernel drops (they must cancel)."""
    hp = jax.lax.Precision.HIGHEST

    def conv(t, w, b):  # t: (B, Cin, N), w: (Cout, Cin), b: (Cout, 1)
        return jnp.einsum("oi,bin->bon", w, t, precision=hp) + b

    def inst_norm(t):
        mean = jnp.mean(t, axis=2, keepdims=True)
        var = jnp.mean(jnp.square(t - mean), axis=2, keepdims=True)
        return (t - mean) / jnp.sqrt(var + _EPS)

    h = conv(x.astype(jnp.float32), params["w_in"], params["b_in"])
    L = params["w_pre"].shape[0]
    for l in range(L):
        t = conv(h, params["w_pre"][l], params["b_pre"][l])
        t = inst_norm(conv(t, params["w1"][l], params["b1"][l]))
        t = inst_norm(conv(t, params["w2"][l], params["b2"][l]))
        h = jnp.maximum(t, 0.0) + h
    return h


if __name__ == "__main__":
    key = jax.random.PRNGKey(0)
    k_x, k_p = jax.random.split(key)

    # Small test config: module defaults feat=mid=128 (lane-dense channel dims), fewer layers.
    B, Cin, N = 2, 4, 256
    feat, mid, L = 128, 128, 3

    x = jax.random.normal(k_x, (B, Cin, N), dtype=jnp.float32)
    params = init_point_resnet_params(k_p, Cin, feat_channel=feat,
                                      mid_channel=mid, num_layers=L)

    out = jax.block_until_ready(point_resnet_forward(x, params))
    assert out.shape == (B, feat, N), out.shape

    ref = _reference_forward(x, params)
    # Slightly relaxed tolerance: the W1@W_pre fold reassociates one f32 matmul per layer.
    np.testing.assert_allclose(np.asarray(out), np.asarray(ref), rtol=2e-3, atol=2e-3)

    print("KERNEL_OK")
</pallas_src>

<mosaic_0001>
module attributes {stable_mosaic.version = 11 : i64} {
  func.func @_point_resnet_kernel(%arg0: i32, %arg1: memref<1x8x256xf32, #tpu.memory_space<vmem>>, %arg2: memref<128x8xf32, #tpu.memory_space<vmem>>, %arg3: memref<128x1xf32, #tpu.memory_space<vmem>>, %arg4: memref<3x128x128xf32, #tpu.memory_space<vmem>>, %arg5: memref<3x128x128xf32, #tpu.memory_space<vmem>>, %arg6: memref<1x128x256xf32, #tpu.memory_space<vmem>>) attributes {dimension_semantics = [#tpu.dimension_semantics<parallel>], iteration_bounds = array<i64: 2>, scalar_prefetch = 0 : i64, scratch_operands = 0 : i64, tpu.core_type = #tpu.core_type<tc>, window_params = [{transform_indices = @transform_0, window_bounds = array<i64: 1, 8, 256>}, {pipeline_mode = #tpu.pipeline_mode<synchronous>, transform_indices = @transform_1, window_bounds = array<i64: 128, 8>}, {pipeline_mode = #tpu.pipeline_mode<synchronous>, transform_indices = @transform_2, window_bounds = array<i64: 128, 1>}, {pipeline_mode = #tpu.pipeline_mode<synchronous>, transform_indices = @transform_3, window_bounds = array<i64: 3, 128, 128>}, {pipeline_mode = #tpu.pipeline_mode<synchronous>, transform_indices = @transform_4, window_bounds = array<i64: 3, 128, 128>}, {transform_indices = @transform_5, window_bounds = array<i64: 1, 128, 256>}]} {
    %c0 = arith.constant 0 : index
    %c0_0 = arith.constant 0 : index
    %c0_1 = arith.constant 0 : index
    %0 = vector.load %arg1[%c0, %c0_0, %c0_1] : memref<1x8x256xf32, #tpu.memory_space<vmem>>, vector<1x8x256xf32>
    %1 = vector.shape_cast %0 : vector<1x8x256xf32> to vector<8x256xf32>
    %c0_2 = arith.constant 0 : index
    %c0_3 = arith.constant 0 : index
    %2 = vector.load %arg2[%c0_2, %c0_3] : memref<128x8xf32, #tpu.memory_space<vmem>>, vector<128x8xf32>
    %cst = arith.constant dense<0.000000e+00> : vector<128x256xf32>
    %3 = tpu.matmul %2, %1, %cst {dimension_numbers = #tpu.dot_dimension_numbers<[1], [0], [0], [1], [0, 0, 1, 1], [], []>} : vector<128x8xf32>, vector<8x256xf32>, vector<128x256xf32> -> vector<128x256xf32>
    %c0_4 = arith.constant 0 : index
    %c0_5 = arith.constant 0 : index
    %4 = vector.load %arg3[%c0_4, %c0_5] : memref<128x1xf32, #tpu.memory_space<vmem>>, vector<128x1xf32>
    %5 = vector.broadcast %4 : vector<128x1xf32> to vector<128x256xf32>
    %6 = arith.addf %3, %5 : vector<128x256xf32>
    %c0_6 = arith.constant 0 : index
    %c0_7 = arith.constant 0 : index
    %c0_8 = arith.constant 0 : index
    %7 = vector.load %arg6[%c0_6, %c0_7, %c0_8] : memref<1x128x256xf32, #tpu.memory_space<vmem>>, vector<1x128x256xf32>
    %8 = vector.shape_cast %7 : vector<1x128x256xf32> to vector<128x256xf32>
    %9 = vector.shape_cast %6 : vector<128x256xf32> to vector<1x128x256xf32>
    tpu.vector_store %arg6[%c0_6, %c0_7, %c0_8], %9 {strides = array<i32>} : memref<1x128x256xf32, #tpu.memory_space<vmem>>, vector<1x128x256xf32>,
    %c0_i32 = arith.constant 0 : i32
    %c3_i32 = arith.constant 3 : i32
    %10 = arith.addi %c0_i32, %c3_i32 : i32
    %c1_i32 = arith.constant 1 : i32
    scf.for %arg7 = %c0_i32 to %10 step %c1_i32  : i32 {
      %c0_10 = arith.constant 0 : index
      %c0_11 = arith.constant 0 : index
      %c0_12 = arith.constant 0 : index
      %11 = vector.load %arg6[%c0_10, %c0_11, %c0_12] : memref<1x128x256xf32, #tpu.memory_space<vmem>>, vector<1x128x256xf32>
      %12 = vector.shape_cast %11 : vector<1x128x256xf32> to vector<128x256xf32>
      %13 = arith.index_cast %arg7 : i32 to index
      %c0_13 = arith.constant 0 : index
      %c0_14 = arith.constant 0 : index
      %14 = vector.load %arg4[%13, %c0_13, %c0_14] : memref<3x128x128xf32, #tpu.memory_space<vmem>>, vector<1x128x128xf32>
      %15 = vector.shape_cast %14 : vector<1x128x128xf32> to vector<128x128xf32>
      %cst_15 = arith.constant dense<0.000000e+00> : vector<128x256xf32>
      %16 = tpu.matmul %15, %12, %cst_15 {dimension_numbers = #tpu.dot_dimension_numbers<[1], [0], [0], [1], [0, 0, 1, 1], [], []>} : vector<128x128xf32>, vector<128x256xf32>, vector<128x256xf32> -> vector<128x256xf32>
      %cst_16 = arith.constant dense<0.000000e+00> : vector<128xf32>
      %17 = vector.multi_reduction <add>, %16, %cst_16 [1] : vector<128x256xf32> to vector<128xf32>
      %18 = vector.shape_cast %17 : vector<128xf32> to vector<128x1xf32>
      %cst_17 = arith.constant 2.560000e+02 : f32
      %19 = vector.broadcast %cst_17 : f32 to vector<128x1xf32>
      %20 = arith.divf %18, %19 : vector<128x1xf32>
      %21 = vector.broadcast %20 : vector<128x1xf32> to vector<128x256xf32>
      %22 = arith.subf %16, %21 : vector<128x256xf32>
      %23 = arith.mulf %22, %22 : vector<128x256xf32>
      %cst_18 = arith.constant dense<0.000000e+00> : vector<128xf32>
      %24 = vector.multi_reduction <add>, %23, %cst_18 [1] : vector<128x256xf32> to vector<128xf32>
      %25 = vector.shape_cast %24 : vector<128xf32> to vector<128x1xf32>
      %cst_19 = arith.constant 2.560000e+02 : f32
      %26 = vector.broadcast %cst_19 : f32 to vector<128x1xf32>
      %27 = arith.divf %25, %26 : vector<128x1xf32>
      %28 = vector.broadcast %20 : vector<128x1xf32> to vector<128x256xf32>
      %29 = arith.subf %16, %28 : vector<128x256xf32>
      %cst_20 = arith.constant 9.99999974E-6 : f32
      %30 = vector.broadcast %cst_20 : f32 to vector<128x1xf32>
      %31 = arith.addf %27, %30 : vector<128x1xf32>
      %32 = math.rsqrt %31 : vector<128x1xf32>
      %33 = vector.broadcast %32 : vector<128x1xf32> to vector<128x256xf32>
      %34 = arith.mulf %29, %33 : vector<128x256xf32>
      %35 = arith.index_cast %arg7 : i32 to index
      %c0_21 = arith.constant 0 : index
      %c0_22 = arith.constant 0 : index
      %36 = vector.load %arg5[%35, %c0_21, %c0_22] : memref<3x128x128xf32, #tpu.memory_space<vmem>>, vector<1x128x128xf32>
      %37 = vector.shape_cast %36 : vector<1x128x128xf32> to vector<128x128xf32>
      %cst_23 = arith.constant dense<0.000000e+00> : vector<128x256xf32>
      %38 = tpu.matmul %37, %34, %cst_23 {dimension_numbers = #tpu.dot_dimension_numbers<[1], [0], [0], [1], [0, 0, 1, 1], [], []>} : vector<128x128xf32>, vector<128x256xf32>, vector<128x256xf32> -> vector<128x256xf32>
      %cst_24 = arith.constant dense<0.000000e+00> : vector<128xf32>
      %39 = vector.multi_reduction <add>, %38, %cst_24 [1] : vector<128x256xf32> to vector<128xf32>
      %40 = vector.shape_cast %39 : vector<128xf32> to vector<128x1xf32>
      %cst_25 = arith.constant 2.560000e+02 : f32
      %41 = vector.broadcast %cst_25 : f32 to vector<128x1xf32>
      %42 = arith.divf %40, %41 : vector<128x1xf32>
      %43 = vector.broadcast %42 : vector<128x1xf32> to vector<128x256xf32>
      %44 = arith.subf %38, %43 : vector<128x256xf32>
      %45 = arith.mulf %44, %44 : vector<128x256xf32>
      %cst_26 = arith.constant dense<0.000000e+00> : vector<128xf32>
      %46 = vector.multi_reduction <add>, %45, %cst_26 [1] : vector<128x256xf32> to vector<128xf32>
      %47 = vector.shape_cast %46 : vector<128xf32> to vector<128x1xf32>
      %cst_27 = arith.constant 2.560000e+02 : f32
      %48 = vector.broadcast %cst_27 : f32 to vector<128x1xf32>
      %49 = arith.divf %47, %48 : vector<128x1xf32>
      %50 = vector.broadcast %42 : vector<128x1xf32> to vector<128x256xf32>
      %51 = arith.subf %38, %50 : vector<128x256xf32>
      %cst_28 = arith.constant 9.99999974E-6 : f32
      %52 = vector.broadcast %cst_28 : f32 to vector<128x1xf32>
      %53 = arith.addf %49, %52 : vector<128x1xf32>
      %54 = math.rsqrt %53 : vector<128x1xf32>
      %55 = vector.broadcast %54 : vector<128x1xf32> to vector<128x256xf32>
      %56 = arith.mulf %51, %55 : vector<128x256xf32>
      %cst_29 = arith.constant 0.000000e+00 : f32
      %57 = vector.broadcast %cst_29 : f32 to vector<128x256xf32>
      %58 = arith.maximumf %56, %57 : vector<128x256xf32>
      %59 = arith.addf %58, %12 : vector<128x256xf32>
      %c0_30 = arith.constant 0 : index
      %c0_31 = arith.constant 0 : index
      %c0_32 = arith.constant 0 : index
      %60 = vector.load %arg6[%c0_30, %c0_31, %c0_32] : memref<1x128x256xf32, #tpu.memory_space<vmem>>, vector<1x128x256xf32>
      %61 = vector.shape_cast %60 : vector<1x128x256xf32> to vector<128x256xf32>
      %62 = vector.shape_cast %59 : vector<128x256xf32> to vector<1x128x256xf32>
      tpu.vector_store %arg6[%c0_30, %c0_31, %c0_32], %62 {strides = array<i32>} : memref<1x128x256xf32, #tpu.memory_space<vmem>>, vector<1x128x256xf32>,
    }
    %c3_i32_9 = arith.constant 3 : i32
    return
  }
  func.func @transform_0(%arg0: i32) -> (i32, i32, i32) {
    %c0_i32 = arith.constant 0 : i32
    %c0_i32_0 = arith.constant 0 : i32
    %c0_i32_1 = arith.constant 0 : i32
    return %arg0, %c0_i32, %c0_i32_0 : i32, i32, i32
  }
  func.func @transform_1(%arg0: i32) -> (i32, i32) {
    %c0_i32 = arith.constant 0 : i32
    %c0_i32_0 = arith.constant 0 : i32
    %c0_i32_1 = arith.constant 0 : i32
    return %c0_i32, %c0_i32_0 : i32, i32
  }
  func.func @transform_2(%arg0: i32) -> (i32, i32) {
    %c0_i32 = arith.constant 0 : i32
    %c0_i32_0 = arith.constant 0 : i32
    %c0_i32_1 = arith.constant 0 : i32
    return %c0_i32, %c0_i32_0 : i32, i32
  }
  func.func @transform_3(%arg0: i32) -> (i32, i32, i32) {
    %c0_i32 = arith.constant 0 : i32
    %c0_i32_0 = arith.constant 0 : i32
    %c0_i32_1 = arith.constant 0 : i32
    %c0_i32_2 = arith.constant 0 : i32
    return %c0_i32, %c0_i32_0, %c0_i32_1 : i32, i32, i32
  }
  func.func @transform_4(%arg0: i32) -> (i32, i32, i32) {
    %c0_i32 = arith.constant 0 : i32
    %c0_i32_0 = arith.constant 0 : i32
    %c0_i32_1 = arith.constant 0 : i32
    %c0_i32_2 = arith.constant 0 : i32
    return %c0_i32, %c0_i32_0, %c0_i32_1 : i32, i32, i32
  }
  func.func @transform_5(%arg0: i32) -> (i32, i32, i32) {
    %c0_i32 = arith.constant 0 : i32
    %c0_i32_0 = arith.constant 0 : i32
    %c0_i32_1 = arith.constant 0 : i32
    return %arg0, %c0_i32, %c0_i32_0 : i32, i32, i32
  }
}

module attributes {stable_mosaic.version = 11 : i64} {
  func.func @_point_resnet_kernel(%arg0: i32, %arg1: memref<1x8x256xf32, #tpu.memory_space<vmem>>, %arg2: memref<128x8xf32, #tpu.memory_space<vmem>>, %arg3: memref<128x1xf32, #tpu.memory_space<vmem>>, %arg4: memref<3x128x128xf32, #tpu.memory_space<vmem>>, %arg5: memref<3x128x128xf32, #tpu.memory_space<vmem>>, %arg6: memref<1x128x256xf32, #tpu.memory_space<vmem>>) attributes {dimension_semantics = [#tpu.dimension_semantics<parallel>], iteration_bounds = array<i64: 2>, scalar_prefetch = 0 : i64, scratch_operands = 0 : i64, tpu.core_type = #tpu.core_type<tc>, window_params = [{transform_indices = @transform_0, window_bounds = array<i64: 1, 8, 256>}, {pipeline_mode = #tpu.pipeline_mode<synchronous>, transform_indices = @transform_1, window_bounds = array<i64: 128, 8>}, {pipeline_mode = #tpu.pipeline_mode<synchronous>, transform_indices = @transform_2, window_bounds = array<i64: 128, 1>}, {pipeline_mode = #tpu.pipeline_mode<synchronous>, transform_indices = @transform_3, window_bounds = array<i64: 3, 128, 128>}, {pipeline_mode = #tpu.pipeline_mode<synchronous>, transform_indices = @transform_4, window_bounds = array<i64: 3, 128, 128>}, {transform_indices = @transform_5, window_bounds = array<i64: 1, 128, 256>}]} {
    %c0 = arith.constant 0 : index
    %c0_0 = arith.constant 0 : index
    %c0_1 = arith.constant 0 : index
    %0 = vector.load %arg1[%c0, %c0_0, %c0_1] : memref<1x8x256xf32, #tpu.memory_space<vmem>>, vector<1x8x256xf32>
    %1 = vector.shape_cast %0 : vector<1x8x256xf32> to vector<8x256xf32>
    %c0_2 = arith.constant 0 : index
    %c0_3 = arith.constant 0 : index
    %2 = vector.load %arg2[%c0_2, %c0_3] : memref<128x8xf32, #tpu.memory_space<vmem>>, vector<128x8xf32>
    %cst = arith.constant dense<0.000000e+00> : vector<128x256xf32>
    %3 = tpu.matmul %2, %1, %cst {dimension_numbers = #tpu.dot_dimension_numbers<[1], [0], [0], [1], [0, 0, 1, 1], [], []>} : vector<128x8xf32>, vector<8x256xf32>, vector<128x256xf32> -> vector<128x256xf32>
    %c0_4 = arith.constant 0 : index
    %c0_5 = arith.constant 0 : index
    %4 = vector.load %arg3[%c0_4, %c0_5] : memref<128x1xf32, #tpu.memory_space<vmem>>, vector<128x1xf32>
    %5 = vector.broadcast %4 : vector<128x1xf32> to vector<128x256xf32>
    %6 = arith.addf %3, %5 : vector<128x256xf32>
    %c0_6 = arith.constant 0 : index
    %c0_7 = arith.constant 0 : index
    %c0_8 = arith.constant 0 : index
    %7 = vector.load %arg6[%c0_6, %c0_7, %c0_8] : memref<1x128x256xf32, #tpu.memory_space<vmem>>, vector<1x128x256xf32>
    %8 = vector.shape_cast %7 : vector<1x128x256xf32> to vector<128x256xf32>
    %9 = vector.shape_cast %6 : vector<128x256xf32> to vector<1x128x256xf32>
    tpu.vector_store %arg6[%c0_6, %c0_7, %c0_8], %9 {strides = array<i32>} : memref<1x128x256xf32, #tpu.memory_space<vmem>>, vector<1x128x256xf32>,
    %c0_i32 = arith.constant 0 : i32
    %c3_i32 = arith.constant 3 : i32
    %10 = arith.addi %c0_i32, %c3_i32 : i32
    %c1_i32 = arith.constant 1 : i32
    scf.for %arg7 = %c0_i32 to %10 step %c1_i32  : i32 {
      %c0_10 = arith.constant 0 : index
      %c0_11 = arith.constant 0 : index
      %c0_12 = arith.constant 0 : index
      %11 = vector.load %arg6[%c0_10, %c0_11, %c0_12] : memref<1x128x256xf32, #tpu.memory_space<vmem>>, vector<1x128x256xf32>
      %12 = vector.shape_cast %11 : vector<1x128x256xf32> to vector<128x256xf32>
      %13 = arith.index_cast %arg7 : i32 to index
      %c0_13 = arith.constant 0 : index
      %c0_14 = arith.constant 0 : index
      %14 = vector.load %arg4[%13, %c0_13, %c0_14] : memref<3x128x128xf32, #tpu.memory_space<vmem>>, vector<1x128x128xf32>
      %15 = vector.shape_cast %14 : vector<1x128x128xf32> to vector<128x128xf32>
      %cst_15 = arith.constant dense<0.000000e+00> : vector<128x256xf32>
      %16 = tpu.matmul %15, %12, %cst_15 {dimension_numbers = #tpu.dot_dimension_numbers<[1], [0], [0], [1], [0, 0, 1, 1], [], []>} : vector<128x128xf32>, vector<128x256xf32>, vector<128x256xf32> -> vector<128x256xf32>
      %cst_16 = arith.constant dense<0.000000e+00> : vector<128xf32>
      %17 = vector.multi_reduction <add>, %16, %cst_16 [1] : vector<128x256xf32> to vector<128xf32>
      %18 = vector.shape_cast %17 : vector<128xf32> to vector<128x1xf32>
      %cst_17 = arith.constant 2.560000e+02 : f32
      %19 = vector.broadcast %cst_17 : f32 to vector<128x1xf32>
      %20 = arith.divf %18, %19 : vector<128x1xf32>
      %21 = vector.broadcast %20 : vector<128x1xf32> to vector<128x256xf32>
      %22 = arith.subf %16, %21 : vector<128x256xf32>
      %23 = arith.mulf %22, %22 : vector<128x256xf32>
      %cst_18 = arith.constant dense<0.000000e+00> : vector<128xf32>
      %24 = vector.multi_reduction <add>, %23, %cst_18 [1] : vector<128x256xf32> to vector<128xf32>
      %25 = vector.shape_cast %24 : vector<128xf32> to vector<128x1xf32>
      %cst_19 = arith.constant 2.560000e+02 : f32
      %26 = vector.broadcast %cst_19 : f32 to vector<128x1xf32>
      %27 = arith.divf %25, %26 : vector<128x1xf32>
      %28 = vector.broadcast %20 : vector<128x1xf32> to vector<128x256xf32>
      %29 = arith.subf %16, %28 : vector<128x256xf32>
      %cst_20 = arith.constant 9.99999974E-6 : f32
      %30 = vector.broadcast %cst_20 : f32 to vector<128x1xf32>
      %31 = arith.addf %27, %30 : vector<128x1xf32>
      %32 = math.rsqrt %31 : vector<128x1xf32>
      %33 = vector.broadcast %32 : vector<128x1xf32> to vector<128x256xf32>
      %34 = arith.mulf %29, %33 : vector<128x256xf32>
      %35 = arith.index_cast %arg7 : i32 to index
      %c0_21 = arith.constant 0 : index
      %c0_22 = arith.constant 0 : index
      %36 = vector.load %arg5[%35, %c0_21, %c0_22] : memref<3x128x128xf32, #tpu.memory_space<vmem>>, vector<1x128x128xf32>
      %37 = vector.shape_cast %36 : vector<1x128x128xf32> to vector<128x128xf32>
      %cst_23 = arith.constant dense<0.000000e+00> : vector<128x256xf32>
      %38 = tpu.matmul %37, %34, %cst_23 {dimension_numbers = #tpu.dot_dimension_numbers<[1], [0], [0], [1], [0, 0, 1, 1], [], []>} : vector<128x128xf32>, vector<128x256xf32>, vector<128x256xf32> -> vector<128x256xf32>
      %cst_24 = arith.constant dense<0.000000e+00> : vector<128xf32>
      %39 = vector.multi_reduction <add>, %38, %cst_24 [1] : vector<128x256xf32> to vector<128xf32>
      %40 = vector.shape_cast %39 : vector<128xf32> to vector<128x1xf32>
      %cst_25 = arith.constant 2.560000e+02 : f32
      %41 = vector.broadcast %cst_25 : f32 to vector<128x1xf32>
      %42 = arith.divf %40, %41 : vector<128x1xf32>
      %43 = vector.broadcast %42 : vector<128x1xf32> to vector<128x256xf32>
      %44 = arith.subf %38, %43 : vector<128x256xf32>
      %45 = arith.mulf %44, %44 : vector<128x256xf32>
      %cst_26 = arith.constant dense<0.000000e+00> : vector<128xf32>
      %46 = vector.multi_reduction <add>, %45, %cst_26 [1] : vector<128x256xf32> to vector<128xf32>
      %47 = vector.shape_cast %46 : vector<128xf32> to vector<128x1xf32>
      %cst_27 = arith.constant 2.560000e+02 : f32
      %48 = vector.broadcast %cst_27 : f32 to vector<128x1xf32>
      %49 = arith.divf %47, %48 : vector<128x1xf32>
      %50 = vector.broadcast %42 : vector<128x1xf32> to vector<128x256xf32>
      %51 = arith.subf %38, %50 : vector<128x256xf32>
      %cst_28 = arith.constant 9.99999974E-6 : f32
      %52 = vector.broadcast %cst_28 : f32 to vector<128x1xf32>
      %53 = arith.addf %49, %52 : vector<128x1xf32>
      %54 = math.rsqrt %53 : vector<128x1xf32>
      %55 = vector.broadcast %54 : vector<128x1xf32> to vector<128x256xf32>
      %56 = arith.mulf %51, %55 : vector<128x256xf32>
      %cst_29 = arith.constant 0.000000e+00 : f32
      %57 = vector.broadcast %cst_29 : f32 to vector<128x256xf32>
      %58 = arith.maximumf %56, %57 : vector<128x256xf32>
      %59 = arith.addf %58, %12 : vector<128x256xf32>
      %c0_30 = arith.constant 0 : index
      %c0_31 = arith.constant 0 : index
      %c0_32 = arith.constant 0 : index
      %60 = vector.load %arg6[%c0_30, %c0_31, %c0_32] : memref<1x128x256xf32, #tpu.memory_space<vmem>>, vector<1x128x256xf32>
      %61 = vector.shape_cast %60 : vector<1x128x256xf32> to vector<128x256xf32>
      %62 = vector.shape_cast %59 : vector<128x256xf32> to vector<1x128x256xf32>
      tpu.vector_store %arg6[%c0_30, %c0_31, %c0_32], %62 {strides = array<i32>} : memref<1x128x256xf32, #tpu.memory_space<vmem>>, vector<1x128x256xf32>,
    }
    %c3_i32_9 = arith.constant 3 : i32
    return
  }
  func.func @transform_0(%arg0: i32) -> (i32, i32, i32) {
    %c0_i32 = arith.constant 0 : i32
    %c0_i32_0 = arith.constant 0 : i32
    %c0_i32_1 = arith.constant 0 : i32
    return %arg0, %c0_i32, %c0_i32_0 : i32, i32, i32
  }
  func.func @transform_1(%arg0: i32) -> (i32, i32) {
    %c0_i32 = arith.constant 0 : i32
    %c0_i32_0 = arith.constant 0 : i32
    %c0_i32_1 = arith.constant 0 : i32
    return %c0_i32, %c0_i32_0 : i32, i32
  }
  func.func @transform_2(%arg0: i32) -> (i32, i32) {
    %c0_i32 = arith.constant 0 : i32
    %c0_i32_0 = arith.constant 0 : i32
    %c0_i32_1 = arith.constant 0 : i32
    return %c0_i32, %c0_i32_0 : i32, i32
  }
  func.func @transform_3(%arg0: i32) -> (i32, i32, i32) {
    %c0_i32 = arith.constant 0 : i32
    %c0_i32_0 = arith.constant 0 : i32
    %c0_i32_1 = arith.constant 0 : i32
    %c0_i32_2 = arith.constant 0 : i32
    return %c0_i32, %c0_i32_0, %c0_i32_1 : i32, i32, i32
  }
  func.func @transform_4(%arg0: i32) -> (i32, i32, i32) {
    %c0_i32 = arith.constant 0 : i32
    %c0_i32_0 = arith.constant 0 : i32
    %c0_i32_1 = arith.constant 0 : i32
    %c0_i32_2 = arith.constant 0 : i32
    return %c0_i32, %c0_i32_0, %c0_i32_1 : i32, i32, i32
  }
  func.func @transform_5(%arg0: i32) -> (i32, i32, i32) {
    %c0_i32 = arith.constant 0 : i32
    %c0_i32_0 = arith.constant 0 : i32
    %c0_i32_1 = arith.constant 0 : i32
    return %arg0, %c0_i32, %c0_i32_0 : i32, i32, i32
  }
}

</mosaic_0001>

<llo_original>
// kernel: tpu_custom_call.1
$region0: #{tpu_custom_call.1}
  #allocation0 [shape = 'u32[]', space=smem, size = 0x4, offset = 0x4, fixed_abs, tag = 'smem constant byte address 0x4 - core index']
  #allocation1 [shape = 'u32[144,128]{1,0:T(1,128)}', space=vmem, size = 0x12000, scoped, tag = 'internal scratch']
  %s0 = inlined_call_operand.vmem [shape: f32[2,8,256], index: 0, kind: input, shape index: {}]
  %s1 = inlined_call_operand.vmem [shape: f32[128,8], index: 1, kind: input, shape index: {}]
  %s2 = inlined_call_operand.vmem [shape: f32[128,1], index: 2, kind: input, shape index: {}]
  %s3 = inlined_call_operand.hbm [shape: f32[3,128,128], index: 3, kind: input, shape index: {}]
  %s4 = inlined_call_operand.hbm [shape: f32[3,128,128], index: 4, kind: input, shape index: {}]
  %s5 = inlined_call_operand.hbm [shape: f32[2,128,256], index: 5, kind: output, shape index: {}]
  %s6 = sld [smem:[#allocation0]]
  $region68: #{tpu_custom_call.1} parent=0
    _
  %s8 = ssub.s32 1, %s6
  %s9 = scalar_select 0, %s8, %s6
  $region1: #{tpu_custom_call.1} parent=0
    #allocation2 [shape = 'u8[196608]{0}', space=vmem, size = 0x30000, scoped, tag = 'input window, operand 3, single buffered']
    #allocation3 [shape = 's32[2]{0}', space=sflag, size = 0x8, scoped, tag = 'scoped memory for tpu_custom_call.1']
    #allocation4 [shape = 's32[2]{0}', space=sflag, size = 0x8, scoped, tag = 'scoped memory for tpu_custom_call.1']
    #allocation5 [shape = 'u8[196608]{0}', space=vmem, size = 0x30000, scoped, tag = 'input window, operand 4, single buffered']
    #allocation6 [shape = 's32[1]{0}', space=sflag, size = 0x4, scoped, tag = 'scoped memory for tpu_custom_call.1']
    #allocation7 [shape = 'u8[262144]{0}', space=vmem, size = 0x40000, scoped, tag = 'output window, operand 0']
    %10 = vsyncpa [#allocation3], 0
    %11 = vsyncpa [#allocation6], 0
    %12 = vsyncpa [#allocation4], 0
    %s13 = scalar_lea.sflag [#allocation4], 1
    %14 = vsyncpa %s13, 0
    loop: start=0, step=1, limit=4
    $region2: #{tpu_custom_call.1} parent=1 // loop_pre_header
      _
    $region3: #{tpu_custom_call.1} parent=1 // loop_header
      %s16 = sphi 0, %s20
      %p17 = scmp.ge.s32.totalorder %s16, 4
      %s26 = sphi 0, %s28
      %s29 = sphi 0, %s26
      %s30 = sphi 0, %s29
      %s46 = sphi 0, %s30
      %s50 = sphi 0, %s50
      %s52 = sphi 0, %s50
      %s53 = sphi 0, %s52
      %s67 = sphi 0, %s53
      %s71 = sphi 0, %s71
      %s73 = sphi 0, %s71
      %s74 = sphi 0, %s73
      %s88 = sphi 0, %s74
      %s92 = sphi 0, %s92
      %s94 = sphi 0, %s92
      %s95 = sphi 0, %s94
      %s109 = sphi 0, %s95
      %s113 = sphi 0, %s113
      %s115 = sphi 0, %s113
      %s116 = sphi 0, %s115
      %s130 = sphi 0, %s116
      %s136 = sphi 0, %s138
      %s139 = sphi 0, %s136
      %s140 = sphi 0, %s139
      %s156 = sphi 0, %s140
    $region4: #{tpu_custom_call.1} parent=1 // loop_header_branch
      %19 = sbr.rel (%p17) target = $region8
    $region5: #{tpu_custom_call.1} parent=1 // loop_body
      %s21 = ssub.s32 %s16, 1
      %s22 = ssub.s32 %s16, 2
      %s23 = sadd.s32 %s16, 1
      %s24 = ssub.s32 %s16, %s23
      %p25 = scmp.eq.s32.totalorder %s24, 0
      %s27 = sadd.s32 %s26, 1
      %s28 = scalar_select %p25, %s26, %s27
      %p31 = pneg %p25
      %p32 = scmp.eq.s32.totalorder %s16, 1
      %p33 = por %p31, %p32
      %p34 = scmp.ne.s32.totalorder %s26, %s29
      %p35 = scmp.eq.s32.totalorder %s16, 0
      %p36 = por %p34, %p35
      %p37 = scmp.ne.s32.totalorder %s26, %s29
      %p38 = scmp.eq.s32.totalorder %s21, 1
      %p39 = por %p37, %p38
      %p40 = scmp.ne.s32.totalorder %s29, %s30
      %p41 = scmp.eq.s32.totalorder %s21, 0
      %p42 = por %p40, %p41
      %p43 = scmp.ne.s32.totalorder %s29, %s30
      %p44 = scmp.eq.s32.totalorder %s22, 1
      %p45 = por %p43, %p44
      %p47 = scmp.ne.s32.totalorder %s30, %s46
      %p48 = scmp.eq.s32.totalorder %s22, 0
      %p49 = por %p47, %p48
      %s51 = sadd.s32 %s50, 1
      %p54 = scmp.eq.s32.totalorder %s16, 1
      %p55 = scmp.ne.s32.totalorder %s50, %s52
      %p56 = scmp.eq.s32.totalorder %s16, 0
      %p57 = por %p55, %p56
      %p58 = scmp.ne.s32.totalorder %s50, %s52
      %p59 = scmp.eq.s32.totalorder %s21, 1
      %p60 = por %p58, %p59
      %p61 = scmp.ne.s32.totalorder %s52, %s53
      %p62 = scmp.eq.s32.totalorder %s21, 0
      %p63 = por %p61, %p62
      %p64 = scmp.ne.s32.totalorder %s52, %s53
      %p65 = scmp.eq.s32.totalorder %s22, 1
      %p66 = por %p64, %p65
      %p68 = scmp.ne.s32.totalorder %s53, %s67
      %p69 = scmp.eq.s32.totalorder %s22, 0
      %p70 = por %p68, %p69
      %s72 = sadd.s32 %s71, 1
      %p75 = scmp.eq.s32.totalorder %s16, 1
      %p76 = scmp.ne.s32.totalorder %s71, %s73
      %p77 = scmp.eq.s32.totalorder %s16, 0
      %p78 = por %p76, %p77
      %p79 = scmp.ne.s32.totalorder %s71, %s73
      %p80 = scmp.eq.s32.totalorder %s21, 1
      %p81 = por %p79, %p80
      %p82 = scmp.ne.s32.totalorder %s73, %s74
      %p83 = scmp.eq.s32.totalorder %s21, 0
      %p84 = por %p82, %p83
      %p85 = scmp.ne.s32.totalorder %s73, %s74
      %p86 = scmp.eq.s32.totalorder %s22, 1
      %p87 = por %p85, %p86
      %p89 = scmp.ne.s32.totalorder %s74, %s88
      %p90 = scmp.eq.s32.totalorder %s22, 0
      %p91 = por %p89, %p90
      %s93 = sadd.s32 %s92, 1
      %p96 = scmp.eq.s32.totalorder %s16, 1
      %p97 = scmp.ne.s32.totalorder %s92, %s94
      %p98 = scmp.eq.s32.totalorder %s16, 0
      %p99 = por %p97, %p98
      %p100 = scmp.ne.s32.totalorder %s92, %s94
      %p101 = scmp.eq.s32.totalorder %s21, 1
      %p102 = por %p100, %p101
      %p103 = scmp.ne.s32.totalorder %s94, %s95
      %p104 = scmp.eq.s32.totalorder %s21, 0
      %p105 = por %p103, %p104
      %p106 = scmp.ne.s32.totalorder %s94, %s95
      %p107 = scmp.eq.s32.totalorder %s22, 1
      %p108 = por %p106, %p107
      %p110 = scmp.ne.s32.totalorder %s95, %s109
      %p111 = scmp.eq.s32.totalorder %s22, 0
      %p112 = por %p110, %p111
      %s114 = sadd.s32 %s113, 1
      %p117 = scmp.eq.s32.totalorder %s16, 1
      %p118 = scmp.ne.s32.totalorder %s113, %s115
      %p119 = scmp.eq.s32.totalorder %s16, 0
      %p120 = por %p118, %p119
      %p121 = scmp.ne.s32.totalorder %s113, %s115
      %p122 = scmp.eq.s32.totalorder %s21, 1
      %p123 = por %p121, %p122
      %p124 = scmp.ne.s32.totalorder %s115, %s116
      %p125 = scmp.eq.s32.totalorder %s21, 0
      %p126 = por %p124, %p125
      %p127 = scmp.ne.s32.totalorder %s115, %s116
      %p128 = scmp.eq.s32.totalorder %s22, 1
      %p129 = por %p127, %p128
      %p131 = scmp.ne.s32.totalorder %s116, %s130
      %p132 = scmp.eq.s32.totalorder %s22, 0
      %p133 = por %p131, %p132
      %s134 = ssub.s32 %s16, %s23
      %p135 = scmp.eq.s32.totalorder %s134, 0
      %s137 = sadd.s32 %s136, 1
      %s138 = scalar_select %p135, %s136, %s137
      %p141 = pneg %p135
      %p142 = scmp.eq.s32.totalorder %s16, 1
      %p143 = por %p141, %p142
      %p144 = scmp.ne.s32.totalorder %s136, %s139
      %p145 = scmp.eq.s32.totalorder %s16, 0
      %p146 = por %p144, %p145
      %p147 = scmp.ne.s32.totalorder %s136, %s139
      %p148 = scmp.eq.s32.totalorder %s21, 1
      %p149 = por %p147, %p148
      %p150 = scmp.ne.s32.totalorder %s139, %s140
      %p151 = scmp.eq.s32.totalorder %s21, 0
      %p152 = por %p150, %p151
      %p153 = scmp.ne.s32.totalorder %s139, %s140
      %p154 = scmp.eq.s32.totalorder %s22, 1
      %p155 = por %p153, %p154
      %p157 = scmp.ne.s32.totalorder %s140, %s156
      %p158 = scmp.eq.s32.totalorder %s22, 0
      %p159 = por %p157, %p158
      %p160 = scmp.le.s32.totalorder 1, %s16
      %p161 = scmp.lt.s32.totalorder %s16, 3
      %p162 = pnand %p160, %p161
      %p163 = pneg %p162
      // Predicated region
      $region9: #{tpu_custom_call.1} parent=5 // pred_check
        _
      $region10: #{tpu_custom_call.1} parent=5 // pred_check_branch
        %165 = sbr.rel (%p162) target = $region12
      $region11: #{tpu_custom_call.1} parent=5 // pred_region
        %s166 = ssub.s32 %s16, 1
        // Predicated region
        $region13: #{tpu_custom_call.1} parent=11 // pred_check
          %p167 = pneg %p63
        $region14: #{tpu_custom_call.1} parent=11 // pred_check_branch
          %169 = sbr.rel (%p167) target = $region16
        $region15: #{tpu_custom_call.1} parent=11 // pred_region
          _
        $region16: #{tpu_custom_call.1} parent=11 // pred_fallthru
          _
        // Predicated region
        $region17: #{tpu_custom_call.1} parent=11 // pred_check
          %p170 = pneg %p84
        $region18: #{tpu_custom_call.1} parent=11 // pred_check_branch
          %172 = sbr.rel (%p170) target = $region20
        $region19: #{tpu_custom_call.1} parent=11 // pred_region
          _
        $region20: #{tpu_custom_call.1} parent=11 // pred_fallthru
          _
        // Predicated region
        $region21: #{tpu_custom_call.1} parent=11 // pred_check
          %p173 = pneg %p105
        $region22: #{tpu_custom_call.1} parent=11 // pred_check_branch
          %175 = sbr.rel (%p173) target = $region24
        $region23: #{tpu_custom_call.1} parent=11 // pred_region
          %s177 = ssub.s32 6144, 6144
          %178 = vsyncadd [#allocation3], %s177
          %s179 = sshll.u32 [#allocation2], 4
          %s180 = int_to_ptr.vmem [resolvable:$true] %s179
          %185 = dma.hbm_to_vmem [thread:$0]  %s3, 6144, %s180, [#allocation3], 128, 128, 8
        $region24: #{tpu_custom_call.1} parent=11 // pred_fallthru
          _
        // Predicated region
        $region25: #{tpu_custom_call.1} parent=11 // pred_check
          %p186 = pneg %p126
        $region26: #{tpu_custom_call.1} parent=11 // pred_check_branch
          %188 = sbr.rel (%p186) target = $region28
        $region27: #{tpu_custom_call.1} parent=11 // pred_region
          %s190 = ssub.s32 6144, 6144
          %191 = vsyncadd [#allocation6], %s190
          %s192 = sshll.u32 [#allocation5], 4
          %s193 = int_to_ptr.vmem [resolvable:$true] %s192
          %198 = dma.hbm_to_vmem [thread:$0]  %s4, 6144, %s193, [#allocation6], 128, 128, 8
        $region28: #{tpu_custom_call.1} parent=11 // pred_fallthru
          _
      $region12: #{tpu_custom_call.1} parent=5 // pred_fallthru
        _
      %p199 = scmp.lt.s32.totalorder %s16, 2
      // Predicated region
      $region29: #{tpu_custom_call.1} parent=5 // pred_check
        %p200 = pneg %p199
      $region30: #{tpu_custom_call.1} parent=5 // pred_check_branch
        %202 = sbr.rel (%p200) target = $region32
      $region31: #{tpu_custom_call.1} parent=5 // pred_region
        // Predicated region
        $region33: #{tpu_custom_call.1} parent=31 // pred_check
          %p203 = pneg %p36
        $region34: #{tpu_custom_call.1} parent=31 // pred_check_branch
          %205 = sbr.rel (%p203) target = $region36
        $region35: #{tpu_custom_call.1} parent=31 // pred_region
          %p206 = scmp.lt.s32.totalorder %s16, 1
          %s207 = scalar_select %p206, %s16, 1
          %s208 = smul.addr %s207, 2
          %s209 = smul.addr %s208, 8
          %s210 = scalar_lea.vmem %s0, %s209
        $region36: #{tpu_custom_call.1} parent=31 // pred_fallthru
          _
      $region32: #{tpu_custom_call.1} parent=5 // pred_fallthru
        _
      %p211 = scmp.le.s32.totalorder 1, %s16
      %p212 = scmp.lt.s32.totalorder %s16, 3
      %p213 = pnand %p211, %p212
      %p214 = pneg %p213
      // Predicated region
      $region37: #{tpu_custom_call.1} parent=5 // pred_check
        _
      $region38: #{tpu_custom_call.1} parent=5 // pred_check_branch
        %216 = sbr.rel (%p213) target = $region40
      $region39: #{tpu_custom_call.1} parent=5 // pred_region
        %s217 = ssub.s32 %s16, 1
        // Predicated region
        $region41: #{tpu_custom_call.1} parent=39 // pred_check
          %p218 = pneg %p105
        $region42: #{tpu_custom_call.1} parent=39 // pred_check_branch
          %220 = sbr.rel (%p218) target = $region44
        $region43: #{tpu_custom_call.1} parent=39 // pred_region
          %221 = dma.done [#allocation3], 6144
        $region44: #{tpu_custom_call.1} parent=39 // pred_fallthru
          _
        // Predicated region
        $region45: #{tpu_custom_call.1} parent=39 // pred_check
          %p222 = pneg %p126
        $region46: #{tpu_custom_call.1} parent=39 // pred_check_branch
          %224 = sbr.rel (%p222) target = $region48
        $region47: #{tpu_custom_call.1} parent=39 // pred_region
          %225 = dma.done [#allocation6], 6144
        $region48: #{tpu_custom_call.1} parent=39 // pred_fallthru
          _
        %p226 = scmp.lt.s32.totalorder %s21, 1
        %s227 = scalar_select %p226, %s21, 1
        %s228 = smul.addr %s227, 2
        %s229 = smul.addr %s228, 8
        %s230 = scalar_lea.vmem %s0, %s229
        %p231 = pneg %p42
        %p232 = pneg %p39
        %p233 = pneg %p63
        %p234 = pneg %p60
        %p235 = pneg %p84
        %p236 = pneg %p81
        %p237 = pneg %p105
        %p238 = pneg %p102
        %p239 = pneg %p126
        %p240 = pneg %p123
        %p241 = pneg %p152
        %p242 = pneg %p149
        %s243 = sand.u32 %s139, 1
        %s244 = scalar_lea.sflag [#allocation4], %s243
        %s245 = sand.u32 %s139, 1
        %s246 = smul.addr %s245, 256
        %s247 = scalar_lea.vmem [#allocation7], %s246
        %p248 = scmp.lt.s32.totalorder %s21, 1
        %s249 = scalar_select %p248, %s21, 1
        %s250 = smul.addr %s249, 2
        %s251 = smul.addr %s250, 8
        %s252 = scalar_lea.vmem %s0, %s251
        %v253 = vld [vmem:[%s252] sm:$0xff]
        %v254 = vld [vmem:[%s252 + $0x8] sm:$0xff]
        %v255 = vld [vmem:[%s1] sm:$0xff]
        %v256 = vld [vmem:[%s1 + $0x8] sm:$0xff]
        %v257 = vld [vmem:[%s1 + $0x10] sm:$0xff]
        %v258 = vld [vmem:[%s1 + $0x18] sm:$0xff]
        %v259 = vld [vmem:[%s1 + $0x20] sm:$0xff]
        %v260 = vld [vmem:[%s1 + $0x28] sm:$0xff]
        %v261 = vld [vmem:[%s1 + $0x30] sm:$0xff]
        %v262 = vld [vmem:[%s1 + $0x38] sm:$0xff]
        %v263 = vld [vmem:[%s1 + $0x40] sm:$0xff]
        %v264 = vld [vmem:[%s1 + $0x48] sm:$0xff]
        %v265 = vld [vmem:[%s1 + $0x50] sm:$0xff]
        %v266 = vld [vmem:[%s1 + $0x58] sm:$0xff]
        %v267 = vld [vmem:[%s1 + $0x60] sm:$0xff]
        %v268 = vld [vmem:[%s1 + $0x68] sm:$0xff]
        %v269 = vld [vmem:[%s1 + $0x70] sm:$0xff]
        %v270 = vld [vmem:[%s1 + $0x78] sm:$0xff]
        %v271 = vld [vmem:[%s2] sm:$0xff]
        %v272 = vld [vmem:[%s2 + $0x8] sm:$0xff]
        %v273 = vld [vmem:[%s2 + $0x10] sm:$0xff]
        %v274 = vld [vmem:[%s2 + $0x18] sm:$0xff]
        %v275 = vld [vmem:[%s2 + $0x20] sm:$0xff]
        %v276 = vld [vmem:[%s2 + $0x28] sm:$0xff]
        %v277 = vld [vmem:[%s2 + $0x30] sm:$0xff]
        %v278 = vld [vmem:[%s2 + $0x38] sm:$0xff]
        %v279 = vld [vmem:[%s2 + $0x40] sm:$0xff]
        %v280 = vld [vmem:[%s2 + $0x48] sm:$0xff]
        %v281 = vld [vmem:[%s2 + $0x50] sm:$0xff]
        %v282 = vld [vmem:[%s2 + $0x58] sm:$0xff]
        %v283 = vld [vmem:[%s2 + $0x60] sm:$0xff]
        %v284 = vld [vmem:[%s2 + $0x68] sm:$0xff]
        %v285 = vld [vmem:[%s2 + $0x70] sm:$0xff]
        %v286 = vld [vmem:[%s2 + $0x78] sm:$0xff]
        %288 = vset.pattern.permute.xlu0 0
        %289 = vperm.xlu0 %288, %v271
        %v290 = vpop.permute.xlu0 %289
        %293 = vset.pattern.permute.xlu0 0
        %294 = vperm.xlu0 %293, %v272
        %v295 = vpop.permute.xlu0 %294
        %298 = vset.pattern.permute.xlu0 0
        %299 = vperm.xlu0 %298, %v273
        %v300 = vpop.permute.xlu0 %299
        %303 = vset.pattern.permute.xlu0 0
        %304 = vperm.xlu0 %303, %v274
        %v305 = vpop.permute.xlu0 %304
        %308 = vset.pattern.permute.xlu0 0
        %309 = vperm.xlu0 %308, %v275
        %v310 = vpop.permute.xlu0 %309
        %313 = vset.pattern.permute.xlu0 0
        %314 = vperm.xlu0 %313, %v276
        %v315 = vpop.permute.xlu0 %314
        %318 = vset.pattern.permute.xlu0 0
        %319 = vperm.xlu0 %318, %v277
        %v320 = vpop.permute.xlu0 %319
        %323 = vset.pattern.permute.xlu0 0
        %324 = vperm.xlu0 %323, %v278
        %v325 = vpop.permute.xlu0 %324
        %328 = vset.pattern.permute.xlu0 0
        %329 = vperm.xlu0 %328, %v279
        %v330 = vpop.permute.xlu0 %329
        %333 = vset.pattern.permute.xlu0 0
        %334 = vperm.xlu0 %333, %v280
        %v335 = vpop.permute.xlu0 %334
        %338 = vset.pattern.permute.xlu0 0
        %339 = vperm.xlu0 %338, %v281
        %v340 = vpop.permute.xlu0 %339
        %343 = vset.pattern.permute.xlu0 0
        %344 = vperm.xlu0 %343, %v282
        %v345 = vpop.permute.xlu0 %344
        %348 = vset.pattern.permute.xlu0 0
        %349 = vperm.xlu0 %348, %v283
        %v350 = vpop.permute.xlu0 %349
        %353 = vset.pattern.permute.xlu0 0
        %354 = vperm.xlu0 %353, %v284
        %v355 = vpop.permute.xlu0 %354
        %358 = vset.pattern.permute.xlu0 0
        %359 = vperm.xlu0 %358, %v285
        %v360 = vpop.permute.xlu0 %359
        %363 = vset.pattern.permute.xlu0 0
        %364 = vperm.xlu0 %363, %v286
        %v365 = vpop.permute.xlu0 %364
        %vm367 = vcmask 64512
        %v369 = vsel %vm367, %v255, 0
        %v372 = vsel %vm367, %v256, 0
        %v375 = vsel %vm367, %v257, 0
        %v378 = vsel %vm367, %v258, 0
        %v381 = vsel %vm367, %v259, 0
        %v384 = vsel %vm367, %v260, 0
        %v387 = vsel %vm367, %v261, 0
        %v390 = vsel %vm367, %v262, 0
        %v393 = vsel %vm367, %v263, 0
        %v396 = vsel %vm367, %v264, 0
        %v399 = vsel %vm367, %v265, 0
        %v402 = vsel %vm367, %v266, 0
        %v405 = vsel %vm367, %v267, 0
        %v408 = vsel %vm367, %v268, 0
        %v411 = vsel %vm367, %v269, 0
        %v414 = vsel %vm367, %v270, 0
        %416 = vmatprep.subr.mxu0 %v254
        %417 = vmatpush1.msra.mxu0 %v253
        %418 = vmatprep.subr.mxu0 0.0
        %419 = vmatpush1.msra.mxu0 0.0
        %420 = vmatprep.subr.mxu0 0.0
        %421 = vmatpush1.msra.mxu0 0.0
        %422 = vmatprep.subr.mxu0 0.0
        %423 = vmatpush1.msra.mxu0 0.0
        %424 = vmatprep.subr.mxu0 0.0
        %425 = vmatpush1.msra.mxu0 0.0
        %426 = vmatprep.subr.mxu0 0.0
        %427 = vmatpush1.msra.mxu0 0.0
        %428 = vmatprep.subr.mxu0 0.0
        %429 = vmatpush1.msra.mxu0 0.0
        %430 = vmatprep.subr.mxu0 0.0
        %431 = vmatpush1.msra.mxu0 0.0
        %432 = vmatprep.subr.mxu0 0.0
        %433 = vmatpush1.msra.mxu0 0.0
        %434 = vmatprep.subr.mxu0 0.0
        %435 = vmatpush1.msra.mxu0 0.0
        %436 = vmatprep.subr.mxu0 0.0
        %437 = vmatpush1.msra.mxu0 0.0
        %438 = vmatprep.subr.mxu0 0.0
        %439 = vmatpush1.msra.mxu0 0.0
        %440 = vmatprep.subr.mxu0 0.0
        %441 = vmatpush1.msra.mxu0 0.0
        %442 = vmatprep.subr.mxu0 0.0
        %443 = vmatpush1.msra.mxu0 0.0
        %444 = vmatprep.subr.mxu0 0.0
        %445 = vmatpush1.msra.mxu0 0.0
        %446 = vmatprep.subr.mxu0 0.0
        %447 = vmatpush1.msra.mxu0 0.0
        %448 = vmatprep.subr.mxu0 0.0
        %449 = vmatpush1.msra.mxu0 0.0
        %450 = vmatprep.subr.mxu0 0.0
        %451 = vmatpush1.msra.mxu0 0.0
        %452 = vmatprep.subr.mxu0 0.0
        %453 = vmatpush1.msra.mxu0 0.0
        %454 = vmatprep.subr.mxu0 0.0
        %455 = vmatpush1.msra.mxu0 0.0
        %456 = vmatprep.subr.mxu0 0.0
        %457 = vmatpush1.msra.mxu0 0.0
        %458 = vmatprep.subr.mxu0 0.0
        %459 = vmatpush1.msra.mxu0 0.0
        %460 = vmatprep.subr.mxu0 0.0
        %461 = vmatpush1.msra.mxu0 0.0
        %462 = vmatprep.subr.mxu0 0.0
        %463 = vmatpush1.msra.mxu0 0.0
        %464 = vmatprep.subr.mxu0 0.0
        %465 = vmatpush1.msra.mxu0 0.0
        %466 = vmatprep.subr.mxu0 0.0
        %467 = vmatpush1.msra.mxu0 0.0
        %468 = vmatprep.subr.mxu0 0.0
        %469 = vmatpush1.msra.mxu0 0.0
        %470 = vmatprep.subr.mxu0 0.0
        %471 = vmatpush1.msra.mxu0 0.0
        %472 = vmatprep.subr.mxu0 0.0
        %473 = vmatpush1.msra.mxu0 0.0
        %474 = vmatprep.subr.mxu0 0.0
        %475 = vmatpush1.msra.mxu0 0.0
        %476 = vmatprep.subr.mxu0 0.0
        %477 = vmatpush1.msra.mxu0 0.0
        %478 = vmatprep.subr.mxu0 0.0
        %479 = vmatpush1.msra.mxu0 0.0
        %480 = vmatprep.mubr.f32.mxu0 0.0
        %481 = vmatmul.mubr.f32.gmra.mrb[0].mxu0 %v369
        %v482 = vpop.f32.mrb[0].mxu0
        %v483 = vadd.f32 %v290, %v482
        %v484 = vpop.f32.mrb[0].mxu0
        %v485 = vadd.f32 %v290, %v484
        %486 = vmatprep.mubr.f32.mxu0 0.0
        %487 = vmatmul.mubr.f32.gmra.mrb[0].mxu0 %v372
        %v488 = vpop.f32.mrb[0].mxu0
        %v489 = vadd.f32 %v295, %v488
        %v490 = vpop.f32.mrb[0].mxu0
        %v491 = vadd.f32 %v295, %v490
        %492 = vmatprep.mubr.f32.mxu0 0.0
        %493 = vmatmul.mubr.f32.gmra.mrb[0].mxu0 %v375
        %v494 = vpop.f32.mrb[0].mxu0
        %v495 = vadd.f32 %v300, %v494
        %v496 = vpop.f32.mrb[0].mxu0
        %v497 = vadd.f32 %v300, %v496
        %498 = vmatprep.mubr.f32.mxu0 0.0
        %499 = vmatmul.mubr.f32.gmra.mrb[0].mxu0 %v378
        %v500 = vpop.f32.mrb[0].mxu0
        %v501 = vadd.f32 %v305, %v500
        %v502 = vpop.f32.mrb[0].mxu0
        %v503 = vadd.f32 %v305, %v502
        %504 = vmatprep.mubr.f32.mxu0 0.0
        %505 = vmatmul.mubr.f32.gmra.mrb[0].mxu0 %v381
        %v506 = vpop.f32.mrb[0].mxu0
        %v507 = vadd.f32 %v310, %v506
        %v508 = vpop.f32.mrb[0].mxu0
        %v509 = vadd.f32 %v310, %v508
        %510 = vmatprep.mubr.f32.mxu0 0.0
        %511 = vmatmul.mubr.f32.gmra.mrb[0].mxu0 %v384
        %v512 = vpop.f32.mrb[0].mxu0
        %v513 = vadd.f32 %v315, %v512
        %v514 = vpop.f32.mrb[0].mxu0
        %v515 = vadd.f32 %v315, %v514
        %516 = vmatprep.mubr.f32.mxu0 0.0
        %517 = vmatmul.mubr.f32.gmra.mrb[0].mxu0 %v387
        %v518 = vpop.f32.mrb[0].mxu0
        %v519 = vadd.f32 %v320, %v518
        %v520 = vpop.f32.mrb[0].mxu0
        %v521 = vadd.f32 %v320, %v520
        %522 = vmatprep.mubr.f32.mxu0 0.0
        %523 = vmatmul.mubr.f32.gmra.mrb[0].mxu0 %v390
        %v524 = vpop.f32.mrb[0].mxu0
        %v525 = vadd.f32 %v325, %v524
        %v526 = vpop.f32.mrb[0].mxu0
        %v527 = vadd.f32 %v325, %v526
        %528 = vmatprep.mubr.f32.mxu0 0.0
        %529 = vmatmul.mubr.f32.gmra.mrb[0].mxu0 %v393
        %v530 = vpop.f32.mrb[0].mxu0
        %v531 = vadd.f32 %v330, %v530
        %v532 = vpop.f32.mrb[0].mxu0
        %v533 = vadd.f32 %v330, %v532
        %534 = vmatprep.mubr.f32.mxu0 0.0
        %535 = vmatmul.mubr.f32.gmra.mrb[0].mxu0 %v396
        %v536 = vpop.f32.mrb[0].mxu0
        %v537 = vadd.f32 %v335, %v536
        %v538 = vpop.f32.mrb[0].mxu0
        %v539 = vadd.f32 %v335, %v538
        %540 = vmatprep.mubr.f32.mxu0 0.0
        %541 = vmatmul.mubr.f32.gmra.mrb[0].mxu0 %v399
        %v542 = vpop.f32.mrb[0].mxu0
        %v543 = vadd.f32 %v340, %v542
        %v544 = vpop.f32.mrb[0].mxu0
        %v545 = vadd.f32 %v340, %v544
        %546 = vmatprep.mubr.f32.mxu0 0.0
        %547 = vmatmul.mubr.f32.gmra.mrb[0].mxu0 %v402
        %v548 = vpop.f32.mrb[0].mxu0
        %v549 = vadd.f32 %v345, %v548
        %v550 = vpop.f32.mrb[0].mxu0
        %v551 = vadd.f32 %v345, %v550
        %552 = vmatprep.mubr.f32.mxu0 0.0
        %553 = vmatmul.mubr.f32.gmra.mrb[0].mxu0 %v405
        %v554 = vpop.f32.mrb[0].mxu0
        %v555 = vadd.f32 %v350, %v554
        %v556 = vpop.f32.mrb[0].mxu0
        %v557 = vadd.f32 %v350, %v556
        %558 = vmatprep.mubr.f32.mxu0 0.0
        %559 = vmatmul.mubr.f32.gmra.mrb[0].mxu0 %v408
        %v560 = vpop.f32.mrb[0].mxu0
        %v561 = vadd.f32 %v355, %v560
        %v562 = vpop.f32.mrb[0].mxu0
        %v563 = vadd.f32 %v355, %v562
        %564 = vmatprep.mubr.f32.mxu0 0.0
        %565 = vmatmul.mubr.f32.gmra.mrb[0].mxu0 %v411
        %v566 = vpop.f32.mrb[0].mxu0
        %v567 = vadd.f32 %v360, %v566
        %v568 = vpop.f32.mrb[0].mxu0
        %v569 = vadd.f32 %v360, %v568
        %570 = vmatprep.mubr.f32.mxu0 0.0
        %571 = vmatmul.mubr.f32.gmra.mrb[0].mxu0 %v414
        %v572 = vpop.f32.mrb[0].mxu0
        %v573 = vadd.f32 %v365, %v572
        %v574 = vpop.f32.mrb[0].mxu0
        %v575 = vadd.f32 %v365, %v574
        %576 = vdwg.mxu0
        %577 = vst [vmem:[%s247] sm:$0xff] %v483
        %578 = vst [vmem:[%s247 + $0x8] sm:$0xff] %v485
        %579 = vst [vmem:[%s247 + $0x10] sm:$0xff] %v489
        %580 = vst [vmem:[%s247 + $0x18] sm:$0xff] %v491
        %581 = vst [vmem:[%s247 + $0x20] sm:$0xff] %v495
        %582 = vst [vmem:[%s247 + $0x28] sm:$0xff] %v497
        %583 = vst [vmem:[%s247 + $0x30] sm:$0xff] %v501
        %584 = vst [vmem:[%s247 + $0x38] sm:$0xff] %v503
        %585 = vst [vmem:[%s247 + $0x40] sm:$0xff] %v507
        %586 = vst [vmem:[%s247 + $0x48] sm:$0xff] %v509
        %587 = vst [vmem:[%s247 + $0x50] sm:$0xff] %v513
        %588 = vst [vmem:[%s247 + $0x58] sm:$0xff] %v515
        %589 = vst [vmem:[%s247 + $0x60] sm:$0xff] %v519
        %590 = vst [vmem:[%s247 + $0x68] sm:$0xff] %v521
        %591 = vst [vmem:[%s247 + $0x70] sm:$0xff] %v525
        %592 = vst [vmem:[%s247 + $0x78] sm:$0xff] %v527
        %593 = vst [vmem:[%s247 + $0x80] sm:$0xff] %v531
        %594 = vst [vmem:[%s247 + $0x88] sm:$0xff] %v533
        %595 = vst [vmem:[%s247 + $0x90] sm:$0xff] %v537
        %596 = vst [vmem:[%s247 + $0x98] sm:$0xff] %v539
        %597 = vst [vmem:[%s247 + $0xa0] sm:$0xff] %v543
        %598 = vst [vmem:[%s247 + $0xa8] sm:$0xff] %v545
        %599 = vst [vmem:[%s247 + $0xb0] sm:$0xff] %v549
        %600 = vst [vmem:[%s247 + $0xb8] sm:$0xff] %v551
        %601 = vst [vmem:[%s247 + $0xc0] sm:$0xff] %v555
        %602 = vst [vmem:[%s247 + $0xc8] sm:$0xff] %v557
        %603 = vst [vmem:[%s247 + $0xd0] sm:$0xff] %v561
        %604 = vst [vmem:[%s247 + $0xd8] sm:$0xff] %v563
        %605 = vst [vmem:[%s247 + $0xe0] sm:$0xff] %v567
        %606 = vst [vmem:[%s247 + $0xe8] sm:$0xff] %v569
        %607 = vst [vmem:[%s247 + $0xf0] sm:$0xff] %v573
        %608 = vst [vmem:[%s247 + $0xf8] sm:$0xff] %v575
        loop: start=0, step=1, limit=3
        $region49: #{tpu_custom_call.1} parent=39 // loop_pre_header
          _
        $region50: #{tpu_custom_call.1} parent=39 // loop_header
          %s610 = sphi 0, %s614
          %p611 = scmp.ge.s32.totalorder %s610, 3
        $region51: #{tpu_custom_call.1} parent=39 // loop_header_branch
          %613 = sbr.rel (%p611) target = $region55
        $region52: #{tpu_custom_call.1} parent=39 // loop_body
          %v615 = vld [vmem:[%s247] sm:$0xff]
          %v616 = vld [vmem:[%s247 + $0x8] sm:$0xff]
          %v617 = vld [vmem:[%s247 + $0x10] sm:$0xff]
          %v618 = vld [vmem:[%s247 + $0x18] sm:$0xff]
          %v619 = vld [vmem:[%s247 + $0x20] sm:$0xff]
          %v620 = vld [vmem:[%s247 + $0x28] sm:$0xff]
          %v621 = vld [vmem:[%s247 + $0x30] sm:$0xff]
          %v622 = vld [vmem:[%s247 + $0x38] sm:$0xff]
          %v623 = vld [vmem:[%s247 + $0x40] sm:$0xff]
          %v624 = vld [vmem:[%s247 + $0x48] sm:$0xff]
          %v625 = vld [vmem:[%s247 + $0x50] sm:$0xff]
          %v626 = vld [vmem:[%s247 + $0x58] sm:$0xff]
          %v627 = vld [vmem:[%s247 + $0x60] sm:$0xff]
          %v628 = vld [vmem:[%s247 + $0x68] sm:$0xff]
          %v629 = vld [vmem:[%s247 + $0x70] sm:$0xff]
          %v630 = vld [vmem:[%s247 + $0x78] sm:$0xff]
          %v631 = vld [vmem:[%s247 + $0x80] sm:$0xff]
          %v632 = vld [vmem:[%s247 + $0x88] sm:$0xff]
          %v633 = vld [vmem:[%s247 + $0x90] sm:$0xff]
          %v634 = vld [vmem:[%s247 + $0x98] sm:$0xff]
          %v635 = vld [vmem:[%s247 + $0xa0] sm:$0xff]
          %v636 = vld [vmem:[%s247 + $0xa8] sm:$0xff]
          %v637 = vld [vmem:[%s247 + $0xb0] sm:$0xff]
          %v638 = vld [vmem:[%s247 + $0xb8] sm:$0xff]
          %v639 = vld [vmem:[%s247 + $0xc0] sm:$0xff]
          %v640 = vld [vmem:[%s247 + $0xc8] sm:$0xff]
          %v641 = vld [vmem:[%s247 + $0xd0] sm:$0xff]
          %v642 = vld [vmem:[%s247 + $0xd8] sm:$0xff]
          %v643 = vld [vmem:[%s247 + $0xe0] sm:$0xff]
          %v644 = vld [vmem:[%s247 + $0xe8] sm:$0xff]
          %v645 = vld [vmem:[%s247 + $0xf0] sm:$0xff]
          %v646 = vld [vmem:[%s247 + $0xf8] sm:$0xff]
          %s647 = smul.u32 %s610, 128
          %s648 = scalar_lea.vmem [#allocation2], %s647
          %v649 = vld [vmem:[%s648] sm:$0xff]
          %v650 = vld [vmem:[%s648 + $0x8] sm:$0xff]
          %v651 = vld [vmem:[%s648 + $0x10] sm:$0xff]
          %v652 = vld [vmem:[%s648 + $0x18] sm:$0xff]
          %v653 = vld [vmem:[%s648 + $0x20] sm:$0xff]
          %v654 = vld [vmem:[%s648 + $0x28] sm:$0xff]
          %v655 = vld [vmem:[%s648 + $0x30] sm:$0xff]
          %v656 = vld [vmem:[%s648 + $0x38] sm:$0xff]
          %v657 = vld [vmem:[%s648 + $0x40] sm:$0xff]
          %v658 = vld [vmem:[%s648 + $0x48] sm:$0xff]
          %v659 = vld [vmem:[%s648 + $0x50] sm:$0xff]
          %v660 = vld [vmem:[%s648 + $0x58] sm:$0xff]
          %v661 = vld [vmem:[%s648 + $0x60] sm:$0xff]
          %v662 = vld [vmem:[%s648 + $0x68] sm:$0xff]
          %v663 = vld [vmem:[%s648 + $0x70] sm:$0xff]
          %v664 = vld [vmem:[%s648 + $0x78] sm:$0xff]
          %665 = vmatprep.subr.mxu0 %v616
          %666 = vmatpush1.msra.mxu0 %v615
          %667 = vmatprep.subr.mxu0 %v618
          %668 = vmatpush1.msra.mxu0 %v617
          %669 = vmatprep.subr.mxu0 %v620
          %670 = vmatpush1.msra.mxu0 %v619
          %671 = vmatprep.subr.mxu0 %v622
          %672 = vmatpush1.msra.mxu0 %v621
          %673 = vmatprep.subr.mxu0 %v624
          %674 = vmatpush1.msra.mxu0 %v623
          %675 = vmatprep.subr.mxu0 %v626
          %676 = vmatpush1.msra.mxu0 %v625
          %677 = vmatprep.subr.mxu0 %v628
          %678 = vmatpush1.msra.mxu0 %v627
          %679 = vmatprep.subr.mxu0 %v630
          %680 = vmatpush1.msra.mxu0 %v629
          %681 = vmatprep.subr.mxu0 %v632
          %682 = vmatpush1.msra.mxu0 %v631
          %683 = vmatprep.subr.mxu0 %v634
          %684 = vmatpush1.msra.mxu0 %v633
          %685 = vmatprep.subr.mxu0 %v636
          %686 = vmatpush1.msra.mxu0 %v635
          %687 = vmatprep.subr.mxu0 %v638
          %688 = vmatpush1.msra.mxu0 %v637
          %689 = vmatprep.subr.mxu0 %v640
          %690 = vmatpush1.msra.mxu0 %v639
          %691 = vmatprep.subr.mxu0 %v642
          %692 = vmatpush1.msra.mxu0 %v641
          %693 = vmatprep.subr.mxu0 %v644
          %694 = vmatpush1.msra.mxu0 %v643
          %695 = vmatprep.subr.mxu0 %v646
          %696 = vmatpush1.msra.mxu0 %v645
          %697 = vmatprep.subr.mxu0 0.0
          %698 = vmatpush1.msra.mxu0 0.0
          %699 = vmatprep.subr.mxu0 0.0
          %700 = vmatpush1.msra.mxu0 0.0
          %701 = vmatprep.subr.mxu0 0.0
          %702 = vmatpush1.msra.mxu0 0.0
          %703 = vmatprep.subr.mxu0 0.0
          %704 = vmatpush1.msra.mxu0 0.0
          %705 = vmatprep.subr.mxu0 0.0
          %706 = vmatpush1.msra.mxu0 0.0
          %707 = vmatprep.subr.mxu0 0.0
          %708 = vmatpush1.msra.mxu0 0.0
          %709 = vmatprep.subr.mxu0 0.0
          %710 = vmatpush1.msra.mxu0 0.0
          %711 = vmatprep.subr.mxu0 0.0
          %712 = vmatpush1.msra.mxu0 0.0
          %713 = vmatprep.subr.mxu0 0.0
          %714 = vmatpush1.msra.mxu0 0.0
          %715 = vmatprep.subr.mxu0 0.0
          %716 = vmatpush1.msra.mxu0 0.0
          %717 = vmatprep.subr.mxu0 0.0
          %718 = vmatpush1.msra.mxu0 0.0
          %719 = vmatprep.subr.mxu0 0.0
          %720 = vmatpush1.msra.mxu0 0.0
          %721 = vmatprep.subr.mxu0 0.0
          %722 = vmatpush1.msra.mxu0 0.0
          %723 = vmatprep.subr.mxu0 0.0
          %724 = vmatpush1.msra.mxu0 0.0
          %725 = vmatprep.subr.mxu0 0.0
          %726 = vmatpush1.msra.mxu0 0.0
          %727 = vmatprep.subr.mxu0 0.0
          %728 = vmatpush1.msra.mxu0 0.0
          %729 = vmatprep.mubr.f32.mxu0 0.0
          %730 = vmatmul.mubr.f32.gmra.mrb[0].mxu0 %v649
          %v731 = vpop.f32.mrb[0].mxu0
          %v732 = vadd.f32 0.0, %v731
          %v733 = vpop.f32.mrb[0].mxu0
          %v734 = vadd.f32 0.0, %v733
          %735 = vmatprep.mubr.f32.mxu0 0.0
          %736 = vmatmul.mubr.f32.gmra.mrb[0].mxu0 %v650
          %v737 = vpop.f32.mrb[0].mxu0
          %v738 = vadd.f32 0.0, %v737
          %v739 = vpop.f32.mrb[0].mxu0
          %v740 = vadd.f32 0.0, %v739
          %741 = vmatprep.mubr.f32.mxu0 0.0
          %742 = vmatmul.mubr.f32.gmra.mrb[0].mxu0 %v651
          %v743 = vpop.f32.mrb[0].mxu0
          %v744 = vadd.f32 0.0, %v743
          %v745 = vpop.f32.mrb[0].mxu0
          %v746 = vadd.f32 0.0, %v745
          %747 = vmatprep.mubr.f32.mxu0 0.0
          %748 = vmatmul.mubr.f32.gmra.mrb[0].mxu0 %v652
          %v749 = vpop.f32.mrb[0].mxu0
          %v750 = vadd.f32 0.0, %v749
          %v751 = vpop.f32.mrb[0].mxu0
          %v752 = vadd.f32 0.0, %v751
          %753 = vmatprep.mubr.f32.mxu0 0.0
          %754 = vmatmul.mubr.f32.gmra.mrb[0].mxu0 %v653
          %v755 = vpop.f32.mrb[0].mxu0
          %v756 = vadd.f32 0.0, %v755
          %v757 = vpop.f32.mrb[0].mxu0
          %v758 = vadd.f32 0.0, %v757
          %759 = vmatprep.mubr.f32.mxu0 0.0
          %760 = vmatmul.mubr.f32.gmra.mrb[0].mxu0 %v654
          %v761 = vpop.f32.mrb[0].mxu0
          %v762 = vadd.f32 0.0, %v761
          %v763 = vpop.f32.mrb[0].mxu0
          %v764 = vadd.f32 0.0, %v763
          %765 = vmatprep.mubr.f32.mxu0 0.0
          %766 = vmatmul.mubr.f32.gmra.mrb[0].mxu0 %v655
          %v767 = vpop.f32.mrb[0].mxu0
          %v768 = vadd.f32 0.0, %v767
          %v769 = vpop.f32.mrb[0].mxu0
          %v770 = vadd.f32 0.0, %v769
          %771 = vmatprep.mubr.f32.mxu0 0.0
          %772 = vmatmul.mubr.f32.gmra.mrb[0].mxu0 %v656
          %v773 = vpop.f32.mrb[0].mxu0
          %v774 = vadd.f32 0.0, %v773
          %v775 = vpop.f32.mrb[0].mxu0
          %v776 = vadd.f32 0.0, %v775
          %777 = vmatprep.mubr.f32.mxu0 0.0
          %778 = vmatmul.mubr.f32.gmra.mrb[0].mxu0 %v657
          %v779 = vpop.f32.mrb[0].mxu0
          %v780 = vadd.f32 0.0, %v779
          %v781 = vpop.f32.mrb[0].mxu0
          %v782 = vadd.f32 0.0, %v781
          %783 = vmatprep.mubr.f32.mxu0 0.0
          %784 = vmatmul.mubr.f32.gmra.mrb[0].mxu0 %v658
          %v785 = vpop.f32.mrb[0].mxu0
          %v786 = vadd.f32 0.0, %v785
          %v787 = vpop.f32.mrb[0].mxu0
          %v788 = vadd.f32 0.0, %v787
          %789 = vmatprep.mubr.f32.mxu0 0.0
          %790 = vmatmul.mubr.f32.gmra.mrb[0].mxu0 %v659
          %v791 = vpop.f32.mrb[0].mxu0
          %v792 = vadd.f32 0.0, %v791
          %v793 = vpop.f32.mrb[0].mxu0
          %v794 = vadd.f32 0.0, %v793
          %795 = vmatprep.mubr.f32.mxu0 0.0
          %796 = vmatmul.mubr.f32.gmra.mrb[0].mxu0 %v660
          %v797 = vpop.f32.mrb[0].mxu0
          %v798 = vadd.f32 0.0, %v797
          %v799 = vpop.f32.mrb[0].mxu0
          %v800 = vadd.f32 0.0, %v799
          %801 = vmatprep.mubr.f32.mxu0 0.0
          %802 = vmatmul.mubr.f32.gmra.mrb[0].mxu0 %v661
          %v803 = vpop.f32.mrb[0].mxu0
          %v804 = vadd.f32 0.0, %v803
          %v805 = vpop.f32.mrb[0].mxu0
          %v806 = vadd.f32 0.0, %v805
          %807 = vmatprep.mubr.f32.mxu0 0.0
          %808 = vmatmul.mubr.f32.gmra.mrb[0].mxu0 %v662
          %v809 = vpop.f32.mrb[0].mxu0
          %v810 = vadd.f32 0.0, %v809
          %v811 = vpop.f32.mrb[0].mxu0
          %v812 = vadd.f32 0.0, %v811
          %813 = vmatprep.mubr.f32.mxu0 0.0
          %814 = vmatmul.mubr.f32.gmra.mrb[0].mxu0 %v663
          %v815 = vpop.f32.mrb[0].mxu0
          %v816 = vadd.f32 0.0, %v815
          %v817 = vpop.f32.mrb[0].mxu0
          %v818 = vadd.f32 0.0, %v817
          %819 = vmatprep.mubr.f32.mxu0 0.0
          %820 = vmatmul.mubr.f32.gmra.mrb[0].mxu0 %v664
          %v821 = vpop.f32.mrb[0].mxu0
          %v822 = vadd.f32 0.0, %v821
          %v823 = vpop.f32.mrb[0].mxu0
          %v824 = vadd.f32 0.0, %v823
          %825 = vdwg.mxu0
          %v826 = vadd.f32 %v732, %v734
          %827 = vadd.xlane.f32.xlu0 %v826
          %v828 = vpop.xlane.xlu0 %827
          %v829 = vadd.f32 %v738, %v740
          %830 = vadd.xlane.f32.xlu0 %v829
          %v831 = vpop.xlane.xlu0 %830
          %v832 = vadd.f32 %v744, %v746
          %833 = vadd.xlane.f32.xlu0 %v832
          %v834 = vpop.xlane.xlu0 %833
          %v835 = vadd.f32 %v750, %v752
          %836 = vadd.xlane.f32.xlu0 %v835
          %v837 = vpop.xlane.xlu0 %836
          %v838 = vadd.f32 %v756, %v758
          %839 = vadd.xlane.f32.xlu0 %v838
          %v840 = vpop.xlane.xlu0 %839
          %v841 = vadd.f32 %v762, %v764
          %842 = vadd.xlane.f32.xlu0 %v841
          %v843 = vpop.xlane.xlu0 %842
          %v844 = vadd.f32 %v768, %v770
          %845 = vadd.xlane.f32.xlu0 %v844
          %v846 = vpop.xlane.xlu0 %845
          %v847 = vadd.f32 %v774, %v776
          %848 = vadd.xlane.f32.xlu0 %v847
          %v849 = vpop.xlane.xlu0 %848
          %v850 = vadd.f32 %v780, %v782
          %851 = vadd.xlane.f32.xlu0 %v850
          %v852 = vpop.xlane.xlu0 %851
          %v853 = vadd.f32 %v786, %v788
          %854 = vadd.xlane.f32.xlu0 %v853
          %v855 = vpop.xlane.xlu0 %854
          %v856 = vadd.f32 %v792, %v794
          %857 = vadd.xlane.f32.xlu0 %v856
          %v858 = vpop.xlane.xlu0 %857
          %v859 = vadd.f32 %v798, %v800
          %860 = vadd.xlane.f32.xlu0 %v859
          %v861 = vpop.xlane.xlu0 %860
          %v862 = vadd.f32 %v804, %v806
          %863 = vadd.xlane.f32.xlu0 %v862
          %v864 = vpop.xlane.xlu0 %863
          %v865 = vadd.f32 %v810, %v812
          %866 = vadd.xlane.f32.xlu0 %v865
          %v867 = vpop.xlane.xlu0 %866
          %v868 = vadd.f32 %v816, %v818
          %869 = vadd.xlane.f32.xlu0 %v868
          %v870 = vpop.xlane.xlu0 %869
          %v871 = vadd.f32 %v822, %v824
          %872 = vadd.xlane.f32.xlu0 %v871
          %v873 = vpop.xlane.xlu0 %872
          %v874 = vrcp.pop 256.0
          %v875 = vmul.f32 %v828, %v874
          %v876 = vmul.f32 %v831, %v874
          %v877 = vmul.f32 %v834, %v874
          %v878 = vmul.f32 %v837, %v874
          %v879 = vmul.f32 %v840, %v874
          %v880 = vmul.f32 %v843, %v874
          %v881 = vmul.f32 %v846, %v874
          %v882 = vmul.f32 %v849, %v874
          %v883 = vmul.f32 %v852, %v874
          %v884 = vmul.f32 %v855, %v874
          %v885 = vmul.f32 %v858, %v874
          %v886 = vmul.f32 %v861, %v874
          %v887 = vmul.f32 %v864, %v874
          %v888 = vmul.f32 %v867, %v874
          %v889 = vmul.f32 %v870, %v874
          %v890 = vmul.f32 %v873, %v874
          %v891 = vsub.f32 %v732, %v875
          %v892 = vsub.f32 %v734, %v875
          %v893 = vsub.f32 %v738, %v876
          %v894 = vsub.f32 %v740, %v876
          %v895 = vsub.f32 %v744, %v877
          %v896 = vsub.f32 %v746, %v877
          %v897 = vsub.f32 %v750, %v878
          %v898 = vsub.f32 %v752, %v878
          %v899 = vsub.f32 %v756, %v879
          %v900 = vsub.f32 %v758, %v879
          %v901 = vsub.f32 %v762, %v880
          %v902 = vsub.f32 %v764, %v880
          %v903 = vsub.f32 %v768, %v881
          %v904 = vsub.f32 %v770, %v881
          %v905 = vsub.f32 %v774, %v882
          %v906 = vsub.f32 %v776, %v882
          %v907 = vsub.f32 %v780, %v883
          %v908 = vsub.f32 %v782, %v883
          %v909 = vsub.f32 %v786, %v884
          %v910 = vsub.f32 %v788, %v884
          %v911 = vsub.f32 %v792, %v885
          %v912 = vsub.f32 %v794, %v885
          %v913 = vsub.f32 %v798, %v886
          %v914 = vsub.f32 %v800, %v886
          %v915 = vsub.f32 %v804, %v887
          %v916 = vsub.f32 %v806, %v887
          %v917 = vsub.f32 %v810, %v888
          %v918 = vsub.f32 %v812, %v888
          %v919 = vsub.f32 %v816, %v889
          %v920 = vsub.f32 %v818, %v889
          %v921 = vsub.f32 %v822, %v890
          %v922 = vsub.f32 %v824, %v890
          %v923 = vmul.f32 %v891, %v891
          %v924 = vmul.f32 %v892, %v892
          %v925 = vmul.f32 %v893, %v893
          %v926 = vmul.f32 %v894, %v894
          %v927 = vmul.f32 %v895, %v895
          %v928 = vmul.f32 %v896, %v896
          %v929 = vmul.f32 %v897, %v897
          %v930 = vmul.f32 %v898, %v898
          %v931 = vmul.f32 %v899, %v899
          %v932 = vmul.f32 %v900, %v900
          %v933 = vmul.f32 %v901, %v901
          %v934 = vmul.f32 %v902, %v902
          %v935 = vmul.f32 %v903, %v903
          %v936 = vmul.f32 %v904, %v904
          %v937 = vmul.f32 %v905, %v905
          %v938 = vmul.f32 %v906, %v906
          %v939 = vmul.f32 %v907, %v907
          %v940 = vmul.f32 %v908, %v908
          %v941 = vmul.f32 %v909, %v909
          %v942 = vmul.f32 %v910, %v910
          %v943 = vmul.f32 %v911, %v911
          %v944 = vmul.f32 %v912, %v912
          %v945 = vmul.f32 %v913, %v913
          %v946 = vmul.f32 %v914, %v914
          %v947 = vmul.f32 %v915, %v915
          %v948 = vmul.f32 %v916, %v916
          %v949 = vmul.f32 %v917, %v917
          %v950 = vmul.f32 %v918, %v918
          %v951 = vmul.f32 %v919, %v919
          %v952 = vmul.f32 %v920, %v920
          %v953 = vmul.f32 %v921, %v921
          %v954 = vmul.f32 %v922, %v922
          %v955 = vadd.f32 %v923, %v924
          %956 = vadd.xlane.f32.xlu0 %v955
          %v957 = vpop.xlane.xlu0 %956
          %v958 = vadd.f32 %v925, %v926
          %959 = vadd.xlane.f32.xlu0 %v958
          %v960 = vpop.xlane.xlu0 %959
          %v961 = vadd.f32 %v927, %v928
          %962 = vadd.xlane.f32.xlu0 %v961
          %v963 = vpop.xlane.xlu0 %962
          %v964 = vadd.f32 %v929, %v930
          %965 = vadd.xlane.f32.xlu0 %v964
          %v966 = vpop.xlane.xlu0 %965
          %v967 = vadd.f32 %v931, %v932
          %968 = vadd.xlane.f32.xlu0 %v967
          %v969 = vpop.xlane.xlu0 %968
          %v970 = vadd.f32 %v933, %v934
          %971 = vadd.xlane.f32.xlu0 %v970
          %v972 = vpop.xlane.xlu0 %971
          %v973 = vadd.f32 %v935, %v936
          %974 = vadd.xlane.f32.xlu0 %v973
          %v975 = vpop.xlane.xlu0 %974
          %v976 = vadd.f32 %v937, %v938
          %977 = vadd.xlane.f32.xlu0 %v976
          %v978 = vpop.xlane.xlu0 %977
          %v979 = vadd.f32 %v939, %v940
          %980 = vadd.xlane.f32.xlu0 %v979
          %v981 = vpop.xlane.xlu0 %980
          %v982 = vadd.f32 %v941, %v942
          %983 = vadd.xlane.f32.xlu0 %v982
          %v984 = vpop.xlane.xlu0 %983
          %v985 = vadd.f32 %v943, %v944
          %986 = vadd.xlane.f32.xlu0 %v985
          %v987 = vpop.xlane.xlu0 %986
          %v988 = vadd.f32 %v945, %v946
          %989 = vadd.xlane.f32.xlu0 %v988
          %v990 = vpop.xlane.xlu0 %989
          %v991 = vadd.f32 %v947, %v948
          %992 = vadd.xlane.f32.xlu0 %v991
          %v993 = vpop.xlane.xlu0 %992
          %v994 = vadd.f32 %v949, %v950
          %995 = vadd.xlane.f32.xlu0 %v994
          %v996 = vpop.xlane.xlu0 %995
          %v997 = vadd.f32 %v951, %v952
          %998 = vadd.xlane.f32.xlu0 %v997
          %v999 = vpop.xlane.xlu0 %998
          %v1000 = vadd.f32 %v953, %v954
          %1001 = vadd.xlane.f32.xlu0 %v1000
          %v1002 = vpop.xlane.xlu0 %1001
          %v1003 = vmul.f32 %v957, %v874
          %v1004 = vmul.f32 %v960, %v874
          %v1005 = vmul.f32 %v963, %v874
          %v1006 = vmul.f32 %v966, %v874
          %v1007 = vmul.f32 %v969, %v874
          %v1008 = vmul.f32 %v972, %v874
          %v1009 = vmul.f32 %v975, %v874
          %v1010 = vmul.f32 %v978, %v874
          %v1011 = vmul.f32 %v981, %v874
          %v1012 = vmul.f32 %v984, %v874
          %v1013 = vmul.f32 %v987, %v874
          %v1014 = vmul.f32 %v990, %v874
          %v1015 = vmul.f32 %v993, %v874
          %v1016 = vmul.f32 %v996, %v874
          %v1017 = vmul.f32 %v999, %v874
          %v1018 = vmul.f32 %v1002, %v874
          %v1019 = vadd.f32 %v1003, 1e-05
          %v1020 = vadd.f32 %v1004, 1e-05
          %v1021 = vadd.f32 %v1005, 1e-05
          %v1022 = vadd.f32 %v1006, 1e-05
          %v1023 = vadd.f32 %v1007, 1e-05
          %v1024 = vadd.f32 %v1008, 1e-05
          %v1025 = vadd.f32 %v1009, 1e-05
          %v1026 = vadd.f32 %v1010, 1e-05
          %v1027 = vadd.f32 %v1011, 1e-05
          %v1028 = vadd.f32 %v1012, 1e-05
          %v1029 = vadd.f32 %v1013, 1e-05
          %v1030 = vadd.f32 %v1014, 1e-05
          %v1031 = vadd.f32 %v1015, 1e-05
          %v1032 = vadd.f32 %v1016, 1e-05
          %v1033 = vadd.f32 %v1017, 1e-05
          %v1034 = vadd.f32 %v1018, 1e-05
          %v1035 = vrsqrt.pop %v1019
          %v1036 = vrsqrt.pop %v1020
          %v1037 = vrsqrt.pop %v1021
          %v1038 = vrsqrt.pop %v1022
          %v1039 = vrsqrt.pop %v1023
          %v1040 = vrsqrt.pop %v1024
          %v1041 = vrsqrt.pop %v1025
          %v1042 = vrsqrt.pop %v1026
          %v1043 = vrsqrt.pop %v1027
          %v1044 = vrsqrt.pop %v1028
          %v1045 = vrsqrt.pop %v1029
          %v1046 = vrsqrt.pop %v1030
          %v1047 = vrsqrt.pop %v1031
          %v1048 = vrsqrt.pop %v1032
          %v1049 = vrsqrt.pop %v1033
          %v1050 = vrsqrt.pop %v1034
          %v1051 = vmul.f32 %v891, %v1035
          %v1052 = vmul.f32 %v892, %v1035
          %v1053 = vmul.f32 %v893, %v1036
          %v1054 = vmul.f32 %v894, %v1036
          %v1055 = vmul.f32 %v895, %v1037
          %v1056 = vmul.f32 %v896, %v1037
          %v1057 = vmul.f32 %v897, %v1038
          %v1058 = vmul.f32 %v898, %v1038
          %v1059 = vmul.f32 %v899, %v1039
          %v1060 = vmul.f32 %v900, %v1039
          %v1061 = vmul.f32 %v901, %v1040
          %v1062 = vmul.f32 %v902, %v1040
          %v1063 = vmul.f32 %v903, %v1041
          %v1064 = vmul.f32 %v904, %v1041
          %v1065 = vmul.f32 %v905, %v1042
          %v1066 = vmul.f32 %v906, %v1042
          %v1067 = vmul.f32 %v907, %v1043
          %v1068 = vmul.f32 %v908, %v1043
          %v1069 = vmul.f32 %v909, %v1044
          %v1070 = vmul.f32 %v910, %v1044
          %v1071 = vmul.f32 %v911, %v1045
          %v1072 = vmul.f32 %v912, %v1045
          %v1073 = vmul.f32 %v913, %v1046
          %v1074 = vmul.f32 %v914, %v1046
          %v1075 = vmul.f32 %v915, %v1047
          %v1076 = vmul.f32 %v916, %v1047
          %v1077 = vmul.f32 %v917, %v1048
          %v1078 = vmul.f32 %v918, %v1048
          %v1079 = vmul.f32 %v919, %v1049
          %v1080 = vmul.f32 %v920, %v1049
          %v1081 = vmul.f32 %v921, %v1050
          %v1082 = vmul.f32 %v922, %v1050
          %s1083 = scalar_lea.vmem [#allocation5], %s647
          %v1084 = vld [vmem:[%s1083] sm:$0xff]
          %v1085 = vld [vmem:[%s1083 + $0x8] sm:$0xff]
          %v1086 = vld [vmem:[%s1083 + $0x10] sm:$0xff]
          %v1087 = vld [vmem:[%s1083 + $0x18] sm:$0xff]
          %v1088 = vld [vmem:[%s1083 + $0x20] sm:$0xff]
          %v1089 = vld [vmem:[%s1083 + $0x28] sm:$0xff]
          %v1090 = vld [vmem:[%s1083 + $0x30] sm:$0xff]
          %v1091 = vld [vmem:[%s1083 + $0x38] sm:$0xff]
          %v1092 = vld [vmem:[%s1083 + $0x40] sm:$0xff]
          %v1093 = vld [vmem:[%s1083 + $0x48] sm:$0xff]
          %v1094 = vld [vmem:[%s1083 + $0x50] sm:$0xff]
          %v1095 = vld [vmem:[%s1083 + $0x58] sm:$0xff]
          %v1096 = vld [vmem:[%s1083 + $0x60] sm:$0xff]
          %v1097 = vld [vmem:[%s1083 + $0x68] sm:$0xff]
          %v1098 = vld [vmem:[%s1083 + $0x70] sm:$0xff]
          %v1099 = vld [vmem:[%s1083 + $0x78] sm:$0xff]
          %1100 = vmatprep.subr.mxu0 %v1052
          %1101 = vmatpush1.msra.mxu0 %v1051
          %1102 = vmatprep.subr.mxu0 %v1054
          %1103 = vmatpush1.msra.mxu0 %v1053
          %1104 = vmatprep.subr.mxu0 %v1056
          %1105 = vmatpush1.msra.mxu0 %v1055
          %1106 = vmatprep.subr.mxu0 %v1058
          %1107 = vmatpush1.msra.mxu0 %v1057
          %1108 = vmatprep.subr.mxu0 %v1060
          %1109 = vmatpush1.msra.mxu0 %v1059
          %1110 = vmatprep.subr.mxu0 %v1062
          %1111 = vmatpush1.msra.mxu0 %v1061
          %1112 = vmatprep.subr.mxu0 %v1064
          %1113 = vmatpush1.msra.mxu0 %v1063
          %1114 = vmatprep.subr.mxu0 %v1066
          %1115 = vmatpush1.msra.mxu0 %v1065
          %1116 = vmatprep.subr.mxu0 %v1068
          %1117 = vmatpush1.msra.mxu0 %v1067
          %1118 = vmatprep.subr.mxu0 %v1070
          %1119 = vmatpush1.msra.mxu0 %v1069
          %1120 = vmatprep.subr.mxu0 %v1072
          %1121 = vmatpush1.msra.mxu0 %v1071
          %1122 = vmatprep.subr.mxu0 %v1074
          %1123 = vmatpush1.msra.mxu0 %v1073
          %1124 = vmatprep.subr.mxu0 %v1076
          %1125 = vmatpush1.msra.mxu0 %v1075
          %1126 = vmatprep.subr.mxu0 %v1078
          %1127 = vmatpush1.msra.mxu0 %v1077
          %1128 = vmatprep.subr.mxu0 %v1080
          %1129 = vmatpush1.msra.mxu0 %v1079
          %1130 = vmatprep.subr.mxu0 %v1082
          %1131 = vmatpush1.msra.mxu0 %v1081
          %1132 = vmatprep.subr.mxu0 0.0
          %1133 = vmatpush1.msra.mxu0 0.0
          %1134 = vmatprep.subr.mxu0 0.0
          %1135 = vmatpush1.msra.mxu0 0.0
          %1136 = vmatprep.subr.mxu0 0.0
          %1137 = vmatpush1.msra.mxu0 0.0
          %1138 = vmatprep.subr.mxu0 0.0
          %1139 = vmatpush1.msra.mxu0 0.0
          %1140 = vmatprep.subr.mxu0 0.0
          %1141 = vmatpush1.msra.mxu0 0.0
          %1142 = vmatprep.subr.mxu0 0.0
          %1143 = vmatpush1.msra.mxu0 0.0
          %1144 = vmatprep.subr.mxu0 0.0
          %1145 = vmatpush1.msra.mxu0 0.0
          %1146 = vmatprep.subr.mxu0 0.0
          %1147 = vmatpush1.msra.mxu0 0.0
          %1148 = vmatprep.subr.mxu0 0.0
          %1149 = vmatpush1.msra.mxu0 0.0
          %1150 = vmatprep.subr.mxu0 0.0
          %1151 = vmatpush1.msra.mxu0 0.0
          %1152 = vmatprep.subr.mxu0 0.0
          %1153 = vmatpush1.msra.mxu0 0.0
          %1154 = vmatprep.subr.mxu0 0.0
          %1155 = vmatpush1.msra.mxu0 0.0
          %1156 = vmatprep.subr.mxu0 0.0
          %1157 = vmatpush1.msra.mxu0 0.0
          %1158 = vmatprep.subr.mxu0 0.0
          %1159 = vmatpush1.msra.mxu0 0.0
          %1160 = vmatprep.subr.mxu0 0.0
          %1161 = vmatpush1.msra.mxu0 0.0
          %1162 = vmatprep.subr.mxu0 0.0
          %1163 = vmatpush1.msra.mxu0 0.0
          %1164 = vmatprep.mubr.f32.mxu0 0.0
          %1165 = vmatmul.mubr.f32.gmra.mrb[0].mxu0 %v1084
          %v1166 = vpop.f32.mrb[0].mxu0
          %v1167 = vadd.f32 0.0, %v1166
          %v1168 = vpop.f32.mrb[0].mxu0
          %v1169 = vadd.f32 0.0, %v1168
          %1170 = vmatprep.mubr.f32.mxu0 0.0
          %1171 = vmatmul.mubr.f32.gmra.mrb[0].mxu0 %v1085
          %v1172 = vpop.f32.mrb[0].mxu0
          %v1173 = vadd.f32 0.0, %v1172
          %v1174 = vpop.f32.mrb[0].mxu0
          %v1175 = vadd.f32 0.0, %v1174
          %1176 = vmatprep.mubr.f32.mxu0 0.0
          %1177 = vmatmul.mubr.f32.gmra.mrb[0].mxu0 %v1086
          %v1178 = vpop.f32.mrb[0].mxu0
          %v1179 = vadd.f32 0.0, %v1178
          %v1180 = vpop.f32.mrb[0].mxu0
          %v1181 = vadd.f32 0.0, %v1180
          %1182 = vmatprep.mubr.f32.mxu0 0.0
          %1183 = vmatmul.mubr.f32.gmra.mrb[0].mxu0 %v1087
          %v1184 = vpop.f32.mrb[0].mxu0
          %v1185 = vadd.f32 0.0, %v1184
          %v1186 = vpop.f32.mrb[0].mxu0
          %v1187 = vadd.f32 0.0, %v1186
          %1188 = vmatprep.mubr.f32.mxu0 0.0
          %1189 = vmatmul.mubr.f32.gmra.mrb[0].mxu0 %v1088
          %v1190 = vpop.f32.mrb[0].mxu0
          %v1191 = vadd.f32 0.0, %v1190
          %v1192 = vpop.f32.mrb[0].mxu0
          %v1193 = vadd.f32 0.0, %v1192
          %1194 = vmatprep.mubr.f32.mxu0 0.0
          %1195 = vmatmul.mubr.f32.gmra.mrb[0].mxu0 %v1089
          %v1196 = vpop.f32.mrb[0].mxu0
          %v1197 = vadd.f32 0.0, %v1196
          %v1198 = vpop.f32.mrb[0].mxu0
          %v1199 = vadd.f32 0.0, %v1198
          %1200 = vmatprep.mubr.f32.mxu0 0.0
          %1201 = vmatmul.mubr.f32.gmra.mrb[0].mxu0 %v1090
          %v1202 = vpop.f32.mrb[0].mxu0
          %v1203 = vadd.f32 0.0, %v1202
          %v1204 = vpop.f32.mrb[0].mxu0
          %v1205 = vadd.f32 0.0, %v1204
          %1206 = vmatprep.mubr.f32.mxu0 0.0
          %1207 = vmatmul.mubr.f32.gmra.mrb[0].mxu0 %v1091
          %v1208 = vpop.f32.mrb[0].mxu0
          %v1209 = vadd.f32 0.0, %v1208
          %v1210 = vpop.f32.mrb[0].mxu0
          %v1211 = vadd.f32 0.0, %v1210
          %1212 = vmatprep.mubr.f32.mxu0 0.0
          %1213 = vmatmul.mubr.f32.gmra.mrb[0].mxu0 %v1092
          %v1214 = vpop.f32.mrb[0].mxu0
          %v1215 = vadd.f32 0.0, %v1214
          %v1216 = vpop.f32.mrb[0].mxu0
          %v1217 = vadd.f32 0.0, %v1216
          %1218 = vmatprep.mubr.f32.mxu0 0.0
          %1219 = vmatmul.mubr.f32.gmra.mrb[0].mxu0 %v1093
          %v1220 = vpop.f32.mrb[0].mxu0
          %v1221 = vadd.f32 0.0, %v1220
          %v1222 = vpop.f32.mrb[0].mxu0
          %v1223 = vadd.f32 0.0, %v1222
          %1224 = vmatprep.mubr.f32.mxu0 0.0
          %1225 = vmatmul.mubr.f32.gmra.mrb[0].mxu0 %v1094
          %v1226 = vpop.f32.mrb[0].mxu0
          %v1227 = vadd.f32 0.0, %v1226
          %v1228 = vpop.f32.mrb[0].mxu0
          %v1229 = vadd.f32 0.0, %v1228
          %1230 = vmatprep.mubr.f32.mxu0 0.0
          %1231 = vmatmul.mubr.f32.gmra.mrb[0].mxu0 %v1095
          %v1232 = vpop.f32.mrb[0].mxu0
          %v1233 = vadd.f32 0.0, %v1232
          %v1234 = vpop.f32.mrb[0].mxu0
          %v1235 = vadd.f32 0.0, %v1234
          %1236 = vmatprep.mubr.f32.mxu0 0.0
          %1237 = vmatmul.mubr.f32.gmra.mrb[0].mxu0 %v1096
          %v1238 = vpop.f32.mrb[0].mxu0
          %v1239 = vadd.f32 0.0, %v1238
          %v1240 = vpop.f32.mrb[0].mxu0
          %v1241 = vadd.f32 0.0, %v1240
          %1242 = vmatprep.mubr.f32.mxu0 0.0
          %1243 = vmatmul.mubr.f32.gmra.mrb[0].mxu0 %v1097
          %v1244 = vpop.f32.mrb[0].mxu0
          %v1245 = vadd.f32 0.0, %v1244
          %v1246 = vpop.f32.mrb[0].mxu0
          %v1247 = vadd.f32 0.0, %v1246
          %1248 = vmatprep.mubr.f32.mxu0 0.0
          %1249 = vmatmul.mubr.f32.gmra.mrb[0].mxu0 %v1098
          %v1250 = vpop.f32.mrb[0].mxu0
          %v1251 = vadd.f32 0.0, %v1250
          %v1252 = vpop.f32.mrb[0].mxu0
          %v1253 = vadd.f32 0.0, %v1252
          %1254 = vmatprep.mubr.f32.mxu0 0.0
          %1255 = vmatmul.mubr.f32.gmra.mrb[0].mxu0 %v1099
          %v1256 = vpop.f32.mrb[0].mxu0
          %v1257 = vadd.f32 0.0, %v1256
          %v1258 = vpop.f32.mrb[0].mxu0
          %v1259 = vadd.f32 0.0, %v1258
          %1260 = vdwg.mxu0
          %v1261 = vadd.f32 %v1167, %v1169
          %1262 = vadd.xlane.f32.xlu0 %v1261
          %v1263 = vpop.xlane.xlu0 %1262
          %v1264 = vadd.f32 %v1173, %v1175
          %1265 = vadd.xlane.f32.xlu0 %v1264
          %v1266 = vpop.xlane.xlu0 %1265
          %v1267 = vadd.f32 %v1179, %v1181
          %1268 = vadd.xlane.f32.xlu0 %v1267
          %v1269 = vpop.xlane.xlu0 %1268
          %v1270 = vadd.f32 %v1185, %v1187
          %1271 = vadd.xlane.f32.xlu0 %v1270
          %v1272 = vpop.xlane.xlu0 %1271
          %v1273 = vadd.f32 %v1191, %v1193
          %1274 = vadd.xlane.f32.xlu0 %v1273
          %v1275 = vpop.xlane.xlu0 %1274
          %v1276 = vadd.f32 %v1197, %v1199
          %1277 = vadd.xlane.f32.xlu0 %v1276
          %v1278 = vpop.xlane.xlu0 %1277
          %v1279 = vadd.f32 %v1203, %v1205
          %1280 = vadd.xlane.f32.xlu0 %v1279
          %v1281 = vpop.xlane.xlu0 %1280
          %v1282 = vadd.f32 %v1209, %v1211
          %1283 = vadd.xlane.f32.xlu0 %v1282
          %v1284 = vpop.xlane.xlu0 %1283
          %v1285 = vadd.f32 %v1215, %v1217
          %1286 = vadd.xlane.f32.xlu0 %v1285
          %v1287 = vpop.xlane.xlu0 %1286
          %v1288 = vadd.f32 %v1221, %v1223
          %1289 = vadd.xlane.f32.xlu0 %v1288
          %v1290 = vpop.xlane.xlu0 %1289
          %v1291 = vadd.f32 %v1227, %v1229
          %1292 = vadd.xlane.f32.xlu0 %v1291
          %v1293 = vpop.xlane.xlu0 %1292
          %v1294 = vadd.f32 %v1233, %v1235
          %1295 = vadd.xlane.f32.xlu0 %v1294
          %v1296 = vpop.xlane.xlu0 %1295
          %v1297 = vadd.f32 %v1239, %v1241
          %1298 = vadd.xlane.f32.xlu0 %v1297
          %v1299 = vpop.xlane.xlu0 %1298
          %v1300 = vadd.f32 %v1245, %v1247
          %1301 = vadd.xlane.f32.xlu0 %v1300
          %v1302 = vpop.xlane.xlu0 %1301
          %v1303 = vadd.f32 %v1251, %v1253
          %1304 = vadd.xlane.f32.xlu0 %v1303
          %v1305 = vpop.xlane.xlu0 %1304
          %v1306 = vadd.f32 %v1257, %v1259
          %1307 = vadd.xlane.f32.xlu0 %v1306
          %v1308 = vpop.xlane.xlu0 %1307
          %v1309 = vmul.f32 %v1263, %v874
          %v1310 = vmul.f32 %v1266, %v874
          %v1311 = vmul.f32 %v1269, %v874
          %v1312 = vmul.f32 %v1272, %v874
          %v1313 = vmul.f32 %v1275, %v874
          %v1314 = vmul.f32 %v1278, %v874
          %v1315 = vmul.f32 %v1281, %v874
          %v1316 = vmul.f32 %v1284, %v874
          %v1317 = vmul.f32 %v1287, %v874
          %v1318 = vmul.f32 %v1290, %v874
          %v1319 = vmul.f32 %v1293, %v874
          %v1320 = vmul.f32 %v1296, %v874
          %v1321 = vmul.f32 %v1299, %v874
          %v1322 = vmul.f32 %v1302, %v874
          %v1323 = vmul.f32 %v1305, %v874
          %v1324 = vmul.f32 %v1308, %v874
          %v1325 = vsub.f32 %v1167, %v1309
          %v1326 = vsub.f32 %v1169, %v1309
          %v1327 = vsub.f32 %v1173, %v1310
          %v1328 = vsub.f32 %v1175, %v1310
          %v1329 = vsub.f32 %v1179, %v1311
          %v1330 = vsub.f32 %v1181, %v1311
          %v1331 = vsub.f32 %v1185, %v1312
          %v1332 = vsub.f32 %v1187, %v1312
          %v1333 = vsub.f32 %v1191, %v1313
          %v1334 = vsub.f32 %v1193, %v1313
          %v1335 = vsub.f32 %v1197, %v1314
          %v1336 = vsub.f32 %v1199, %v1314
          %v1337 = vsub.f32 %v1203, %v1315
          %v1338 = vsub.f32 %v1205, %v1315
          %v1339 = vsub.f32 %v1209, %v1316
          %v1340 = vsub.f32 %v1211, %v1316
          %v1341 = vsub.f32 %v1215, %v1317
          %v1342 = vsub.f32 %v1217, %v1317
          %v1343 = vsub.f32 %v1221, %v1318
          %v1344 = vsub.f32 %v1223, %v1318
          %v1345 = vsub.f32 %v1227, %v1319
          %v1346 = vsub.f32 %v1229, %v1319
          %v1347 = vsub.f32 %v1233, %v1320
          %v1348 = vsub.f32 %v1235, %v1320
          %v1349 = vsub.f32 %v1239, %v1321
          %v1350 = vsub.f32 %v1241, %v1321
          %v1351 = vsub.f32 %v1245, %v1322
          %v1352 = vsub.f32 %v1247, %v1322
          %v1353 = vsub.f32 %v1251, %v1323
          %v1354 = vsub.f32 %v1253, %v1323
          %v1355 = vsub.f32 %v1257, %v1324
          %v1356 = vsub.f32 %v1259, %v1324
          %v1357 = vmul.f32 %v1325, %v1325
          %v1358 = vmul.f32 %v1326, %v1326
          %v1359 = vmul.f32 %v1327, %v1327
          %v1360 = vmul.f32 %v1328, %v1328
          %v1361 = vmul.f32 %v1329, %v1329
          %v1362 = vmul.f32 %v1330, %v1330
          %v1363 = vmul.f32 %v1331, %v1331
          %v1364 = vmul.f32 %v1332, %v1332
          %v1365 = vmul.f32 %v1333, %v1333
          %v1366 = vmul.f32 %v1334, %v1334
          %v1367 = vmul.f32 %v1335, %v1335
          %v1368 = vmul.f32 %v1336, %v1336
          %v1369 = vmul.f32 %v1337, %v1337
          %v1370 = vmul.f32 %v1338, %v1338
          %v1371 = vmul.f32 %v1339, %v1339
          %v1372 = vmul.f32 %v1340, %v1340
          %v1373 = vmul.f32 %v1341, %v1341
          %v1374 = vmul.f32 %v1342, %v1342
          %v1375 = vmul.f32 %v1343, %v1343
          %v1376 = vmul.f32 %v1344, %v1344
          %v1377 = vmul.f32 %v1345, %v1345
          %v1378 = vmul.f32 %v1346, %v1346
          %v1379 = vmul.f32 %v1347, %v1347
          %v1380 = vmul.f32 %v1348, %v1348
          %v1381 = vmul.f32 %v1349, %v1349
          %v1382 = vmul.f32 %v1350, %v1350
          %v1383 = vmul.f32 %v1351, %v1351
          %v1384 = vmul.f32 %v1352, %v1352
          %v1385 = vmul.f32 %v1353, %v1353
          %v1386 = vmul.f32 %v1354, %v1354
          %v1387 = vmul.f32 %v1355, %v1355
          %v1388 = vmul.f32 %v1356, %v1356
          %v1389 = vadd.f32 %v1357, %v1358
          %1390 = vadd.xlane.f32.xlu0 %v1389
          %v1391 = vpop.xlane.xlu0 %1390
          %v1392 = vadd.f32 %v1359, %v1360
          %1393 = vadd.xlane.f32.xlu0 %v1392
          %v1394 = vpop.xlane.xlu0 %1393
          %v1395 = vadd.f32 %v1361, %v1362
          %1396 = vadd.xlane.f32.xlu0 %v1395
          %v1397 = vpop.xlane.xlu0 %1396
          %v1398 = vadd.f32 %v1363, %v1364
          %1399 = vadd.xlane.f32.xlu0 %v1398
          %v1400 = vpop.xlane.xlu0 %1399
          %v1401 = vadd.f32 %v1365, %v1366
          %1402 = vadd.xlane.f32.xlu0 %v1401
          %v1403 = vpop.xlane.xlu0 %1402
          %v1404 = vadd.f32 %v1367, %v1368
          %1405 = vadd.xlane.f32.xlu0 %v1404
          %v1406 = vpop.xlane.xlu0 %1405
          %v1407 = vadd.f32 %v1369, %v1370
          %1408 = vadd.xlane.f32.xlu0 %v1407
          %v1409 = vpop.xlane.xlu0 %1408
          %v1410 = vadd.f32 %v1371, %v1372
          %1411 = vadd.xlane.f32.xlu0 %v1410
          %v1412 = vpop.xlane.xlu0 %1411
          %v1413 = vadd.f32 %v1373, %v1374
          %1414 = vadd.xlane.f32.xlu0 %v1413
          %v1415 = vpop.xlane.xlu0 %1414
          %v1416 = vadd.f32 %v1375, %v1376
          %1417 = vadd.xlane.f32.xlu0 %v1416
          %v1418 = vpop.xlane.xlu0 %1417
          %v1419 = vadd.f32 %v1377, %v1378
          %1420 = vadd.xlane.f32.xlu0 %v1419
          %v1421 = vpop.xlane.xlu0 %1420
          %v1422 = vadd.f32 %v1379, %v1380
          %1423 = vadd.xlane.f32.xlu0 %v1422
          %v1424 = vpop.xlane.xlu0 %1423
          %v1425 = vadd.f32 %v1381, %v1382
          %1426 = vadd.xlane.f32.xlu0 %v1425
          %v1427 = vpop.xlane.xlu0 %1426
          %v1428 = vadd.f32 %v1383, %v1384
          %1429 = vadd.xlane.f32.xlu0 %v1428
          %v1430 = vpop.xlane.xlu0 %1429
          %v1431 = vadd.f32 %v1385, %v1386
          %1432 = vadd.xlane.f32.xlu0 %v1431
          %v1433 = vpop.xlane.xlu0 %1432
          %v1434 = vadd.f32 %v1387, %v1388
          %1435 = vadd.xlane.f32.xlu0 %v1434
          %v1436 = vpop.xlane.xlu0 %1435
          %v1437 = vmul.f32 %v1391, %v874
          %v1438 = vmul.f32 %v1394, %v874
          %v1439 = vmul.f32 %v1397, %v874
          %v1440 = vmul.f32 %v1400, %v874
          %v1441 = vmul.f32 %v1403, %v874
          %v1442 = vmul.f32 %v1406, %v874
          %v1443 = vmul.f32 %v1409, %v874
          %v1444 = vmul.f32 %v1412, %v874
          %v1445 = vmul.f32 %v1415, %v874
          %v1446 = vmul.f32 %v1418, %v874
          %v1447 = vmul.f32 %v1421, %v874
          %v1448 = vmul.f32 %v1424, %v874
          %v1449 = vmul.f32 %v1427, %v874
          %v1450 = vmul.f32 %v1430, %v874
          %v1451 = vmul.f32 %v1433, %v874
          %v1452 = vmul.f32 %v1436, %v874
          %v1453 = vadd.f32 %v1437, 1e-05
          %v1454 = vadd.f32 %v1438, 1e-05
          %v1455 = vadd.f32 %v1439, 1e-05
          %v1456 = vadd.f32 %v1440, 1e-05
          %v1457 = vadd.f32 %v1441, 1e-05
          %v1458 = vadd.f32 %v1442, 1e-05
          %v1459 = vadd.f32 %v1443, 1e-05
          %v1460 = vadd.f32 %v1444, 1e-05
          %v1461 = vadd.f32 %v1445, 1e-05
          %v1462 = vadd.f32 %v1446, 1e-05
          %v1463 = vadd.f32 %v1447, 1e-05
          %v1464 = vadd.f32 %v1448, 1e-05
          %v1465 = vadd.f32 %v1449, 1e-05
          %v1466 = vadd.f32 %v1450, 1e-05
          %v1467 = vadd.f32 %v1451, 1e-05
          %v1468 = vadd.f32 %v1452, 1e-05
          %v1469 = vrsqrt.pop %v1453
          %v1470 = vrsqrt.pop %v1454
          %v1471 = vrsqrt.pop %v1455
          %v1472 = vrsqrt.pop %v1456
          %v1473 = vrsqrt.pop %v1457
          %v1474 = vrsqrt.pop %v1458
          %v1475 = vrsqrt.pop %v1459
          %v1476 = vrsqrt.pop %v1460
          %v1477 = vrsqrt.pop %v1461
          %v1478 = vrsqrt.pop %v1462
          %v1479 = vrsqrt.pop %v1463
          %v1480 = vrsqrt.pop %v1464
          %v1481 = vrsqrt.pop %v1465
          %v1482 = vrsqrt.pop %v1466
          %v1483 = vrsqrt.pop %v1467
          %v1484 = vrsqrt.pop %v1468
          %v1485 = vmul.f32 %v1325, %v1469
          %v1486 = vmul.f32 %v1326, %v1469
          %v1487 = vmul.f32 %v1327, %v1470
          %v1488 = vmul.f32 %v1328, %v1470
          %v1489 = vmul.f32 %v1329, %v1471
          %v1490 = vmul.f32 %v1330, %v1471
          %v1491 = vmul.f32 %v1331, %v1472
          %v1492 = vmul.f32 %v1332, %v1472
          %v1493 = vmul.f32 %v1333, %v1473
          %v1494 = vmul.f32 %v1334, %v1473
          %v1495 = vmul.f32 %v1335, %v1474
          %v1496 = vmul.f32 %v1336, %v1474
          %v1497 = vmul.f32 %v1337, %v1475
          %v1498 = vmul.f32 %v1338, %v1475
          %v1499 = vmul.f32 %v1339, %v1476
          %v1500 = vmul.f32 %v1340, %v1476
          %v1501 = vmul.f32 %v1341, %v1477
          %v1502 = vmul.f32 %v1342, %v1477
          %v1503 = vmul.f32 %v1343, %v1478
          %v1504 = vmul.f32 %v1344, %v1478
          %v1505 = vmul.f32 %v1345, %v1479
          %v1506 = vmul.f32 %v1346, %v1479
          %v1507 = vmul.f32 %v1347, %v1480
          %v1508 = vmul.f32 %v1348, %v1480
          %v1509 = vmul.f32 %v1349, %v1481
          %v1510 = vmul.f32 %v1350, %v1481
          %v1511 = vmul.f32 %v1351, %v1482
          %v1512 = vmul.f32 %v1352, %v1482
          %v1513 = vmul.f32 %v1353, %v1483
          %v1514 = vmul.f32 %v1354, %v1483
          %v1515 = vmul.f32 %v1355, %v1484
          %v1516 = vmul.f32 %v1356, %v1484
          %v1517 = vmax.f32 %v1485, 0.0
          %v1518 = vmax.f32 %v1486, 0.0
          %v1519 = vmax.f32 %v1487, 0.0
          %v1520 = vmax.f32 %v1488, 0.0
          %v1521 = vmax.f32 %v1489, 0.0
          %v1522 = vmax.f32 %v1490, 0.0
          %v1523 = vmax.f32 %v1491, 0.0
          %v1524 = vmax.f32 %v1492, 0.0
          %v1525 = vmax.f32 %v1493, 0.0
          %v1526 = vmax.f32 %v1494, 0.0
          %v1527 = vmax.f32 %v1495, 0.0
          %v1528 = vmax.f32 %v1496, 0.0
          %v1529 = vmax.f32 %v1497, 0.0
          %v1530 = vmax.f32 %v1498, 0.0
          %v1531 = vmax.f32 %v1499, 0.0
          %v1532 = vmax.f32 %v1500, 0.0
          %v1533 = vmax.f32 %v1501, 0.0
          %v1534 = vmax.f32 %v1502, 0.0
          %v1535 = vmax.f32 %v1503, 0.0
          %v1536 = vmax.f32 %v1504, 0.0
          %v1537 = vmax.f32 %v1505, 0.0
          %v1538 = vmax.f32 %v1506, 0.0
          %v1539 = vmax.f32 %v1507, 0.0
          %v1540 = vmax.f32 %v1508, 0.0
          %v1541 = vmax.f32 %v1509, 0.0
          %v1542 = vmax.f32 %v1510, 0.0
          %v1543 = vmax.f32 %v1511, 0.0
          %v1544 = vmax.f32 %v1512, 0.0
          %v1545 = vmax.f32 %v1513, 0.0
          %v1546 = vmax.f32 %v1514, 0.0
          %v1547 = vmax.f32 %v1515, 0.0
          %v1548 = vmax.f32 %v1516, 0.0
          %v1549 = vadd.f32 %v1517, %v615
          %v1550 = vadd.f32 %v1518, %v616
          %v1551 = vadd.f32 %v1519, %v617
          %v1552 = vadd.f32 %v1520, %v618
          %v1553 = vadd.f32 %v1521, %v619
          %v1554 = vadd.f32 %v1522, %v620
          %v1555 = vadd.f32 %v1523, %v621
          %v1556 = vadd.f32 %v1524, %v622
          %v1557 = vadd.f32 %v1525, %v623
          %v1558 = vadd.f32 %v1526, %v624
          %v1559 = vadd.f32 %v1527, %v625
          %v1560 = vadd.f32 %v1528, %v626
          %v1561 = vadd.f32 %v1529, %v627
          %v1562 = vadd.f32 %v1530, %v628
          %v1563 = vadd.f32 %v1531, %v629
          %v1564 = vadd.f32 %v1532, %v630
          %v1565 = vadd.f32 %v1533, %v631
          %v1566 = vadd.f32 %v1534, %v632
          %v1567 = vadd.f32 %v1535, %v633
          %v1568 = vadd.f32 %v1536, %v634
          %v1569 = vadd.f32 %v1537, %v635
          %v1570 = vadd.f32 %v1538, %v636
          %v1571 = vadd.f32 %v1539, %v637
          %v1572 = vadd.f32 %v1540, %v638
          %v1573 = vadd.f32 %v1541, %v639
          %v1574 = vadd.f32 %v1542, %v640
          %v1575 = vadd.f32 %v1543, %v641
          %v1576 = vadd.f32 %v1544, %v642
          %v1577 = vadd.f32 %v1545, %v643
          %v1578 = vadd.f32 %v1546, %v644
          %v1579 = vadd.f32 %v1547, %v645
          %v1580 = vadd.f32 %v1548, %v646
          %1581 = vst [vmem:[%s247] sm:$0xff] %v1549
          %1582 = vst [vmem:[%s247 + $0x8] sm:$0xff] %v1550
          %1583 = vst [vmem:[%s247 + $0x10] sm:$0xff] %v1551
          %1584 = vst [vmem:[%s247 + $0x18] sm:$0xff] %v1552
          %1585 = vst [vmem:[%s247 + $0x20] sm:$0xff] %v1553
          %1586 = vst [vmem:[%s247 + $0x28] sm:$0xff] %v1554
          %1587 = vst [vmem:[%s247 + $0x30] sm:$0xff] %v1555
          %1588 = vst [vmem:[%s247 + $0x38] sm:$0xff] %v1556
          %1589 = vst [vmem:[%s247 + $0x40] sm:$0xff] %v1557
          %1590 = vst [vmem:[%s247 + $0x48] sm:$0xff] %v1558
          %1591 = vst [vmem:[%s247 + $0x50] sm:$0xff] %v1559
          %1592 = vst [vmem:[%s247 + $0x58] sm:$0xff] %v1560
          %1593 = vst [vmem:[%s247 + $0x60] sm:$0xff] %v1561
          %1594 = vst [vmem:[%s247 + $0x68] sm:$0xff] %v1562
          %1595 = vst [vmem:[%s247 + $0x70] sm:$0xff] %v1563
          %1596 = vst [vmem:[%s247 + $0x78] sm:$0xff] %v1564
          %1597 = vst [vmem:[%s247 + $0x80] sm:$0xff] %v1565
          %1598 = vst [vmem:[%s247 + $0x88] sm:$0xff] %v1566
          %1599 = vst [vmem:[%s247 + $0x90] sm:$0xff] %v1567
          %1600 = vst [vmem:[%s247 + $0x98] sm:$0xff] %v1568
          %1601 = vst [vmem:[%s247 + $0xa0] sm:$0xff] %v1569
          %1602 = vst [vmem:[%s247 + $0xa8] sm:$0xff] %v1570
          %1603 = vst [vmem:[%s247 + $0xb0] sm:$0xff] %v1571
          %1604 = vst [vmem:[%s247 + $0xb8] sm:$0xff] %v1572
          %1605 = vst [vmem:[%s247 + $0xc0] sm:$0xff] %v1573
          %1606 = vst [vmem:[%s247 + $0xc8] sm:$0xff] %v1574
          %1607 = vst [vmem:[%s247 + $0xd0] sm:$0xff] %v1575
          %1608 = vst [vmem:[%s247 + $0xd8] sm:$0xff] %v1576
          %1609 = vst [vmem:[%s247 + $0xe0] sm:$0xff] %v1577
          %1610 = vst [vmem:[%s247 + $0xe8] sm:$0xff] %v1578
          %1611 = vst [vmem:[%s247 + $0xf0] sm:$0xff] %v1579
          %1612 = vst [vmem:[%s247 + $0xf8] sm:$0xff] %v1580
        $region53: #{tpu_custom_call.1} parent=39 // loop_footer
          %s614 = sadd.s32 1, %s610
        $region54: #{tpu_custom_call.1} parent=39 // loop_footer_branch
          %609 = sbr.rel target = $region50
        $region55: #{tpu_custom_call.1} parent=39 // loop_exit
          _
        %s1613 = sand.u32 %s139, 1
        %s1614 = scalar_lea.sflag [#allocation4], %s1613
        %s1615 = sand.u32 %s139, 1
        %s1616 = smul.addr %s1615, 256
        %s1617 = scalar_lea.vmem [#allocation7], %s1616
        // Predicated region
        $region56: #{tpu_custom_call.1} parent=39 // pred_check
          %p1618 = pneg %p149
        $region57: #{tpu_custom_call.1} parent=39 // pred_check_branch
          %1620 = sbr.rel (%p1618) target = $region59
        $region58: #{tpu_custom_call.1} parent=39 // pred_region
          %s1622 = ssub.s32 4096, 4096
          %1623 = vsyncadd %s1614, %s1622
          %s1624 = smul.addr %s21, 32
          %s1625 = smul.addr %s1624, 128
          %s1626 = scalar_lea.hbm %s5, %s1625
          %s1627 = sshll.u32 %s1617, 4
          %s1628 = int_to_ptr.vmem [resolvable:$true] %s1627
          %1633 = dma.vmem_to_hbm [thread:$0]  %s1628, 4096, %s1626, %s1614, 256, 256, 16
        $region59: #{tpu_custom_call.1} parent=39 // pred_fallthru
          _
      $region40: #{tpu_custom_call.1} parent=5 // pred_fallthru
        _
      %p1634 = scmp.le.s32.totalorder 2, %s16
      // Predicated region
      $region60: #{tpu_custom_call.1} parent=5 // pred_check
        %p1635 = pneg %p1634
      $region61: #{tpu_custom_call.1} parent=5 // pred_check_branch
        %1637 = sbr.rel (%p1635) target = $region63
      $region62: #{tpu_custom_call.1} parent=5 // pred_region
        %s1638 = ssub.s32 %s16, 2
        // Predicated region
        $region64: #{tpu_custom_call.1} parent=62 // pred_check
          %p1639 = pneg %p155
        $region65: #{tpu_custom_call.1} parent=62 // pred_check_branch
          %1641 = sbr.rel (%p1639) target = $region67
        $region66: #{tpu_custom_call.1} parent=62 // pred_region
          %s1642 = sand.u32 %s140, 1
          %s1643 = scalar_lea.sflag [#allocation4], %s1642
          %s1644 = sand.u32 %s140, 1
          %s1645 = smul.addr %s1644, 256
          %s1646 = scalar_lea.vmem [#allocation7], %s1645
          %1647 = dma.done %s1643, 4096
        $region67: #{tpu_custom_call.1} parent=62 // pred_fallthru
          _
      $region63: #{tpu_custom_call.1} parent=5 // pred_fallthru
        _
    $region6: #{tpu_custom_call.1} parent=1 // loop_footer
      %s20 = sadd.s32 1, %s16
    $region7: #{tpu_custom_call.1} parent=1 // loop_footer_branch
      %15 = sbr.rel target = $region3
    $region8: #{tpu_custom_call.1} parent=1 // loop_exit
      _
    %1648 = vsyncpa [#allocation3], 1
    %s1649 = scalar_lea.sflag [#allocation3], 1
    %1650 = vsyncpa %s1649, 1
    %1651 = vsyncpa [#allocation6], 1
    %1652 = vsyncpa [#allocation4], 1
    %s1653 = scalar_lea.sflag [#allocation4], 1
    %1654 = vsyncpa %s1653, 1

// kernel: tpu_custom_call.1
$region0: #{tpu_custom_call.1}
  #allocation0 [shape = 'u32[]', space=smem, size = 0x4, offset = 0x4, fixed_abs, tag = 'smem constant byte address 0x4 - core index']
  #allocation1 [shape = 'u32[144,128]{1,0:T(1,128)}', space=vmem, size = 0x12000, scoped, tag = 'internal scratch']
  %s0 = inlined_call_operand.vmem [shape: f32[2,8,256], index: 0, kind: input, shape index: {}]
  %s1 = inlined_call_operand.vmem [shape: f32[128,8], index: 1, kind: input, shape index: {}]
  %s2 = inlined_call_operand.vmem [shape: f32[128,1], index: 2, kind: input, shape index: {}]
  %s3 = inlined_call_operand.hbm [shape: f32[3,128,128], index: 3, kind: input, shape index: {}]
  %s4 = inlined_call_operand.hbm [shape: f32[3,128,128], index: 4, kind: input, shape index: {}]
  %s5 = inlined_call_operand.hbm [shape: f32[2,128,256], index: 5, kind: output, shape index: {}]
  %s6 = sld [smem:[#allocation0]]
  $region68: #{tpu_custom_call.1} parent=0
    _
  %s8 = ssub.s32 1, %s6
  %s9 = scalar_select 0, %s8, %s6
  $region1: #{tpu_custom_call.1} parent=0
    #allocation2 [shape = 'u8[196608]{0}', space=vmem, size = 0x30000, scoped, tag = 'input window, operand 3, single buffered']
    #allocation3 [shape = 's32[2]{0}', space=sflag, size = 0x8, scoped, tag = 'scoped memory for tpu_custom_call.1']
    #allocation4 [shape = 's32[2]{0}', space=sflag, size = 0x8, scoped, tag = 'scoped memory for tpu_custom_call.1']
    #allocation5 [shape = 'u8[196608]{0}', space=vmem, size = 0x30000, scoped, tag = 'input window, operand 4, single buffered']
    #allocation6 [shape = 's32[1]{0}', space=sflag, size = 0x4, scoped, tag = 'scoped memory for tpu_custom_call.1']
    #allocation7 [shape = 'u8[262144]{0}', space=vmem, size = 0x40000, scoped, tag = 'output window, operand 0']
    %10 = vsyncpa [#allocation3], 0
    %11 = vsyncpa [#allocation6], 0
    %12 = vsyncpa [#allocation4], 0
    %s13 = scalar_lea.sflag [#allocation4], 1
    %14 = vsyncpa %s13, 0
    loop: start=0, step=1, limit=4
    $region2: #{tpu_custom_call.1} parent=1 // loop_pre_header
      _
    $region3: #{tpu_custom_call.1} parent=1 // loop_header
      %s16 = sphi 0, %s20
      %p17 = scmp.ge.s32.totalorder %s16, 4
      %s26 = sphi 0, %s28
      %s29 = sphi 0, %s26
      %s30 = sphi 0, %s29
      %s46 = sphi 0, %s30
      %s50 = sphi 0, %s50
      %s52 = sphi 0, %s50
      %s53 = sphi 0, %s52
      %s67 = sphi 0, %s53
      %s71 = sphi 0, %s71
      %s73 = sphi 0, %s71
      %s74 = sphi 0, %s73
      %s88 = sphi 0, %s74
      %s92 = sphi 0, %s92
      %s94 = sphi 0, %s92
      %s95 = sphi 0, %s94
      %s109 = sphi 0, %s95
      %s113 = sphi 0, %s113
      %s115 = sphi 0, %s113
      %s116 = sphi 0, %s115
      %s130 = sphi 0, %s116
      %s136 = sphi 0, %s138
      %s139 = sphi 0, %s136
      %s140 = sphi 0, %s139
      %s156 = sphi 0, %s140
    $region4: #{tpu_custom_call.1} parent=1 // loop_header_branch
      %19 = sbr.rel (%p17) target = $region8
    $region5: #{tpu_custom_call.1} parent=1 // loop_body
      %s21 = ssub.s32 %s16, 1
      %s22 = ssub.s32 %s16, 2
      %s23 = sadd.s32 %s16, 1
      %s24 = ssub.s32 %s16, %s23
      %p25 = scmp.eq.s32.totalorder %s24, 0
      %s27 = sadd.s32 %s26, 1
      %s28 = scalar_select %p25, %s26, %s27
      %p31 = pneg %p25
      %p32 = scmp.eq.s32.totalorder %s16, 1
      %p33 = por %p31, %p32
      %p34 = scmp.ne.s32.totalorder %s26, %s29
      %p35 = scmp.eq.s32.totalorder %s16, 0
      %p36 = por %p34, %p35
      %p37 = scmp.ne.s32.totalorder %s26, %s29
      %p38 = scmp.eq.s32.totalorder %s21, 1
      %p39 = por %p37, %p38
      %p40 = scmp.ne.s32.totalorder %s29, %s30
      %p41 = scmp.eq.s32.totalorder %s21, 0
      %p42 = por %p40, %p41
      %p43 = scmp.ne.s32.totalorder %s29, %s30
      %p44 = scmp.eq.s32.totalorder %s22, 1
      %p45 = por %p43, %p44
      %p47 = scmp.ne.s32.totalorder %s30, %s46
      %p48 = scmp.eq.s32.totalorder %s22, 0
      %p49 = por %p47, %p48
      %s51 = sadd.s32 %s50, 1
      %p54 = scmp.eq.s32.totalorder %s16, 1
      %p55 = scmp.ne.s32.totalorder %s50, %s52
      %p56 = scmp.eq.s32.totalorder %s16, 0
      %p57 = por %p55, %p56
      %p58 = scmp.ne.s32.totalorder %s50, %s52
      %p59 = scmp.eq.s32.totalorder %s21, 1
      %p60 = por %p58, %p59
      %p61 = scmp.ne.s32.totalorder %s52, %s53
      %p62 = scmp.eq.s32.totalorder %s21, 0
      %p63 = por %p61, %p62
      %p64 = scmp.ne.s32.totalorder %s52, %s53
      %p65 = scmp.eq.s32.totalorder %s22, 1
      %p66 = por %p64, %p65
      %p68 = scmp.ne.s32.totalorder %s53, %s67
      %p69 = scmp.eq.s32.totalorder %s22, 0
      %p70 = por %p68, %p69
      %s72 = sadd.s32 %s71, 1
      %p75 = scmp.eq.s32.totalorder %s16, 1
      %p76 = scmp.ne.s32.totalorder %s71, %s73
      %p77 = scmp.eq.s32.totalorder %s16, 0
      %p78 = por %p76, %p77
      %p79 = scmp.ne.s32.totalorder %s71, %s73
      %p80 = scmp.eq.s32.totalorder %s21, 1
      %p81 = por %p79, %p80
      %p82 = scmp.ne.s32.totalorder %s73, %s74
      %p83 = scmp.eq.s32.totalorder %s21, 0
      %p84 = por %p82, %p83
      %p85 = scmp.ne.s32.totalorder %s73, %s74
      %p86 = scmp.eq.s32.totalorder %s22, 1
      %p87 = por %p85, %p86
      %p89 = scmp.ne.s32.totalorder %s74, %s88
      %p90 = scmp.eq.s32.totalorder %s22, 0
      %p91 = por %p89, %p90
      %s93 = sadd.s32 %s92, 1
      %p96 = scmp.eq.s32.totalorder %s16, 1
      %p97 = scmp.ne.s32.totalorder %s92, %s94
      %p98 = scmp.eq.s32.totalorder %s16, 0
      %p99 = por %p97, %p98
      %p100 = scmp.ne.s32.totalorder %s92, %s94
      %p101 = scmp.eq.s32.totalorder %s21, 1
      %p102 = por %p100, %p101
      %p103 = scmp.ne.s32.totalorder %s94, %s95
      %p104 = scmp.eq.s32.totalorder %s21, 0
      %p105 = por %p103, %p104
      %p106 = scmp.ne.s32.totalorder %s94, %s95
      %p107 = scmp.eq.s32.totalorder %s22, 1
      %p108 = por %p106, %p107
      %p110 = scmp.ne.s32.totalorder %s95, %s109
      %p111 = scmp.eq.s32.totalorder %s22, 0
      %p112 = por %p110, %p111
      %s114 = sadd.s32 %s113, 1
      %p117 = scmp.eq.s32.totalorder %s16, 1
      %p118 = scmp.ne.s32.totalorder %s113, %s115
      %p119 = scmp.eq.s32.totalorder %s16, 0
      %p120 = por %p118, %p119
      %p121 = scmp.ne.s32.totalorder %s113, %s115
      %p122 = scmp.eq.s32.totalorder %s21, 1
      %p123 = por %p121, %p122
      %p124 = scmp.ne.s32.totalorder %s115, %s116
      %p125 = scmp.eq.s32.totalorder %s21, 0
      %p126 = por %p124, %p125
      %p127 = scmp.ne.s32.totalorder %s115, %s116
      %p128 = scmp.eq.s32.totalorder %s22, 1
      %p129 = por %p127, %p128
      %p131 = scmp.ne.s32.totalorder %s116, %s130
      %p132 = scmp.eq.s32.totalorder %s22, 0
      %p133 = por %p131, %p132
      %s134 = ssub.s32 %s16, %s23
      %p135 = scmp.eq.s32.totalorder %s134, 0
      %s137 = sadd.s32 %s136, 1
      %s138 = scalar_select %p135, %s136, %s137
      %p141 = pneg %p135
      %p142 = scmp.eq.s32.totalorder %s16, 1
      %p143 = por %p141, %p142
      %p144 = scmp.ne.s32.totalorder %s136, %s139
      %p145 = scmp.eq.s32.totalorder %s16, 0
      %p146 = por %p144, %p145
      %p147 = scmp.ne.s32.totalorder %s136, %s139
      %p148 = scmp.eq.s32.totalorder %s21, 1
      %p149 = por %p147, %p148
      %p150 = scmp.ne.s32.totalorder %s139, %s140
      %p151 = scmp.eq.s32.totalorder %s21, 0
      %p152 = por %p150, %p151
      %p153 = scmp.ne.s32.totalorder %s139, %s140
      %p154 = scmp.eq.s32.totalorder %s22, 1
      %p155 = por %p153, %p154
      %p157 = scmp.ne.s32.totalorder %s140, %s156
      %p158 = scmp.eq.s32.totalorder %s22, 0
      %p159 = por %p157, %p158
      %p160 = scmp.le.s32.totalorder 1, %s16
      %p161 = scmp.lt.s32.totalorder %s16, 3
      %p162 = pnand %p160, %p161
      %p163 = pneg %p162
      // Predicated region
      $region9: #{tpu_custom_call.1} parent=5 // pred_check
        _
      $region10: #{tpu_custom_call.1} parent=5 // pred_check_branch
        %165 = sbr.rel (%p162) target = $region12
      $region11: #{tpu_custom_call.1} parent=5 // pred_region
        %s166 = ssub.s32 %s16, 1
        // Predicated region
        $region13: #{tpu_custom_call.1} parent=11 // pred_check
          %p167 = pneg %p63
        $region14: #{tpu_custom_call.1} parent=11 // pred_check_branch
          %169 = sbr.rel (%p167) target = $region16
        $region15: #{tpu_custom_call.1} parent=11 // pred_region
          _
        $region16: #{tpu_custom_call.1} parent=11 // pred_fallthru
          _
        // Predicated region
        $region17: #{tpu_custom_call.1} parent=11 // pred_check
          %p170 = pneg %p84
        $region18: #{tpu_custom_call.1} parent=11 // pred_check_branch
          %172 = sbr.rel (%p170) target = $region20
        $region19: #{tpu_custom_call.1} parent=11 // pred_region
          _
        $region20: #{tpu_custom_call.1} parent=11 // pred_fallthru
          _
        // Predicated region
        $region21: #{tpu_custom_call.1} parent=11 // pred_check
          %p173 = pneg %p105
        $region22: #{tpu_custom_call.1} parent=11 // pred_check_branch
          %175 = sbr.rel (%p173) target = $region24
        $region23: #{tpu_custom_call.1} parent=11 // pred_region
          %s177 = ssub.s32 6144, 6144
          %178 = vsyncadd [#allocation3], %s177
          %s179 = sshll.u32 [#allocation2], 4
          %s180 = int_to_ptr.vmem [resolvable:$true] %s179
          %185 = dma.hbm_to_vmem [thread:$0]  %s3, 6144, %s180, [#allocation3], 128, 128, 8
        $region24: #{tpu_custom_call.1} parent=11 // pred_fallthru
          _
        // Predicated region
        $region25: #{tpu_custom_call.1} parent=11 // pred_check
          %p186 = pneg %p126
        $region26: #{tpu_custom_call.1} parent=11 // pred_check_branch
          %188 = sbr.rel (%p186) target = $region28
        $region27: #{tpu_custom_call.1} parent=11 // pred_region
          %s190 = ssub.s32 6144, 6144
          %191 = vsyncadd [#allocation6], %s190
          %s192 = sshll.u32 [#allocation5], 4
          %s193 = int_to_ptr.vmem [resolvable:$true] %s192
          %198 = dma.hbm_to_vmem [thread:$0]  %s4, 6144, %s193, [#allocation6], 128, 128, 8
        $region28: #{tpu_custom_call.1} parent=11 // pred_fallthru
          _
      $region12: #{tpu_custom_call.1} parent=5 // pred_fallthru
        _
      %p199 = scmp.lt.s32.totalorder %s16, 2
      // Predicated region
      $region29: #{tpu_custom_call.1} parent=5 // pred_check
        %p200 = pneg %p199
      $region30: #{tpu_custom_call.1} parent=5 // pred_check_branch
        %202 = sbr.rel (%p200) target = $region32
      $region31: #{tpu_custom_call.1} parent=5 // pred_region
        // Predicated region
        $region33: #{tpu_custom_call.1} parent=31 // pred_check
          %p203 = pneg %p36
        $region34: #{tpu_custom_call.1} parent=31 // pred_check_branch
          %205 = sbr.rel (%p203) target = $region36
        $region35: #{tpu_custom_call.1} parent=31 // pred_region
          %p206 = scmp.lt.s32.totalorder %s16, 1
          %s207 = scalar_select %p206, %s16, 1
          %s208 = smul.addr %s207, 2
          %s209 = smul.addr %s208, 8
          %s210 = scalar_lea.vmem %s0, %s209
        $region36: #{tpu_custom_call.1} parent=31 // pred_fallthru
          _
      $region32: #{tpu_custom_call.1} parent=5 // pred_fallthru
        _
      %p211 = scmp.le.s32.totalorder 1, %s16
      %p212 = scmp.lt.s32.totalorder %s16, 3
      %p213 = pnand %p211, %p212
      %p214 = pneg %p213
      // Predicated region
      $region37: #{tpu_custom_call.1} parent=5 // pred_check
        _
      $region38: #{tpu_custom_call.1} parent=5 // pred_check_branch
        %216 = sbr.rel (%p213) target = $region40
      $region39: #{tpu_custom_call.1} parent=5 // pred_region
        %s217 = ssub.s32 %s16, 1
        // Predicated region
        $region41: #{tpu_custom_call.1} parent=39 // pred_check
          %p218 = pneg %p105
        $region42: #{tpu_custom_call.1} parent=39 // pred_check_branch
          %220 = sbr.rel (%p218) target = $region44
        $region43: #{tpu_custom_call.1} parent=39 // pred_region
          %221 = dma.done [#allocation3], 6144
        $region44: #{tpu_custom_call.1} parent=39 // pred_fallthru
          _
        // Predicated region
        $region45: #{tpu_custom_call.1} parent=39 // pred_check
          %p222 = pneg %p126
        $region46: #{tpu_custom_call.1} parent=39 // pred_check_branch
          %224 = sbr.rel (%p222) target = $region48
        $region47: #{tpu_custom_call.1} parent=39 // pred_region
          %225 = dma.done [#allocation6], 6144
        $region48: #{tpu_custom_call.1} parent=39 // pred_fallthru
          _
        %p226 = scmp.lt.s32.totalorder %s21, 1
        %s227 = scalar_select %p226, %s21, 1
        %s228 = smul.addr %s227, 2
        %s229 = smul.addr %s228, 8
        %s230 = scalar_lea.vmem %s0, %s229
        %p231 = pneg %p42
        %p232 = pneg %p39
        %p233 = pneg %p63
        %p234 = pneg %p60
        %p235 = pneg %p84
        %p236 = pneg %p81
        %p237 = pneg %p105
        %p238 = pneg %p102
        %p239 = pneg %p126
        %p240 = pneg %p123
        %p241 = pneg %p152
        %p242 = pneg %p149
        %s243 = sand.u32 %s139, 1
        %s244 = scalar_lea.sflag [#allocation4], %s243
        %s245 = sand.u32 %s139, 1
        %s246 = smul.addr %s245, 256
        %s247 = scalar_lea.vmem [#allocation7], %s246
        %p248 = scmp.lt.s32.totalorder %s21, 1
        %s249 = scalar_select %p248, %s21, 1
        %s250 = smul.addr %s249, 2
        %s251 = smul.addr %s250, 8
        %s252 = scalar_lea.vmem %s0, %s251
        %v253 = vld [vmem:[%s252] sm:$0xff]
        %v254 = vld [vmem:[%s252 + $0x8] sm:$0xff]
        %v255 = vld [vmem:[%s1] sm:$0xff]
        %v256 = vld [vmem:[%s1 + $0x8] sm:$0xff]
        %v257 = vld [vmem:[%s1 + $0x10] sm:$0xff]
        %v258 = vld [vmem:[%s1 + $0x18] sm:$0xff]
        %v259 = vld [vmem:[%s1 + $0x20] sm:$0xff]
        %v260 = vld [vmem:[%s1 + $0x28] sm:$0xff]
        %v261 = vld [vmem:[%s1 + $0x30] sm:$0xff]
        %v262 = vld [vmem:[%s1 + $0x38] sm:$0xff]
        %v263 = vld [vmem:[%s1 + $0x40] sm:$0xff]
        %v264 = vld [vmem:[%s1 + $0x48] sm:$0xff]
        %v265 = vld [vmem:[%s1 + $0x50] sm:$0xff]
        %v266 = vld [vmem:[%s1 + $0x58] sm:$0xff]
        %v267 = vld [vmem:[%s1 + $0x60] sm:$0xff]
        %v268 = vld [vmem:[%s1 + $0x68] sm:$0xff]
        %v269 = vld [vmem:[%s1 + $0x70] sm:$0xff]
        %v270 = vld [vmem:[%s1 + $0x78] sm:$0xff]
        %v271 = vld [vmem:[%s2] sm:$0xff]
        %v272 = vld [vmem:[%s2 + $0x8] sm:$0xff]
        %v273 = vld [vmem:[%s2 + $0x10] sm:$0xff]
        %v274 = vld [vmem:[%s2 + $0x18] sm:$0xff]
        %v275 = vld [vmem:[%s2 + $0x20] sm:$0xff]
        %v276 = vld [vmem:[%s2 + $0x28] sm:$0xff]
        %v277 = vld [vmem:[%s2 + $0x30] sm:$0xff]
        %v278 = vld [vmem:[%s2 + $0x38] sm:$0xff]
        %v279 = vld [vmem:[%s2 + $0x40] sm:$0xff]
        %v280 = vld [vmem:[%s2 + $0x48] sm:$0xff]
        %v281 = vld [vmem:[%s2 + $0x50] sm:$0xff]
        %v282 = vld [vmem:[%s2 + $0x58] sm:$0xff]
        %v283 = vld [vmem:[%s2 + $0x60] sm:$0xff]
        %v284 = vld [vmem:[%s2 + $0x68] sm:$0xff]
        %v285 = vld [vmem:[%s2 + $0x70] sm:$0xff]
        %v286 = vld [vmem:[%s2 + $0x78] sm:$0xff]
        %288 = vset.pattern.permute.xlu0 0
        %289 = vperm.xlu0 %288, %v271
        %v290 = vpop.permute.xlu0 %289
        %293 = vset.pattern.permute.xlu0 0
        %294 = vperm.xlu0 %293, %v272
        %v295 = vpop.permute.xlu0 %294
        %298 = vset.pattern.permute.xlu0 0
        %299 = vperm.xlu0 %298, %v273
        %v300 = vpop.permute.xlu0 %299
        %303 = vset.pattern.permute.xlu0 0
        %304 = vperm.xlu0 %303, %v274
        %v305 = vpop.permute.xlu0 %304
        %308 = vset.pattern.permute.xlu0 0
        %309 = vperm.xlu0 %308, %v275
        %v310 = vpop.permute.xlu0 %309
        %313 = vset.pattern.permute.xlu0 0
        %314 = vperm.xlu0 %313, %v276
        %v315 = vpop.permute.xlu0 %314
        %318 = vset.pattern.permute.xlu0 0
        %319 = vperm.xlu0 %318, %v277
        %v320 = vpop.permute.xlu0 %319
        %323 = vset.pattern.permute.xlu0 0
        %324 = vperm.xlu0 %323, %v278
        %v325 = vpop.permute.xlu0 %324
        %328 = vset.pattern.permute.xlu0 0
        %329 = vperm.xlu0 %328, %v279
        %v330 = vpop.permute.xlu0 %329
        %333 = vset.pattern.permute.xlu0 0
        %334 = vperm.xlu0 %333, %v280
        %v335 = vpop.permute.xlu0 %334
        %338 = vset.pattern.permute.xlu0 0
        %339 = vperm.xlu0 %338, %v281
        %v340 = vpop.permute.xlu0 %339
        %343 = vset.pattern.permute.xlu0 0
        %344 = vperm.xlu0 %343, %v282
        %v345 = vpop.permute.xlu0 %344
        %348 = vset.pattern.permute.xlu0 0
        %349 = vperm.xlu0 %348, %v283
        %v350 = vpop.permute.xlu0 %349
        %353 = vset.pattern.permute.xlu0 0
        %354 = vperm.xlu0 %353, %v284
        %v355 = vpop.permute.xlu0 %354
        %358 = vset.pattern.permute.xlu0 0
        %359 = vperm.xlu0 %358, %v285
        %v360 = vpop.permute.xlu0 %359
        %363 = vset.pattern.permute.xlu0 0
        %364 = vperm.xlu0 %363, %v286
        %v365 = vpop.permute.xlu0 %364
        %vm367 = vcmask 64512
        %v369 = vsel %vm367, %v255, 0
        %v372 = vsel %vm367, %v256, 0
        %v375 = vsel %vm367, %v257, 0
        %v378 = vsel %vm367, %v258, 0
        %v381 = vsel %vm367, %v259, 0
        %v384 = vsel %vm367, %v260, 0
        %v387 = vsel %vm367, %v261, 0
        %v390 = vsel %vm367, %v262, 0
        %v393 = vsel %vm367, %v263, 0
        %v396 = vsel %vm367, %v264, 0
        %v399 = vsel %vm367, %v265, 0
        %v402 = vsel %vm367, %v266, 0
        %v405 = vsel %vm367, %v267, 0
        %v408 = vsel %vm367, %v268, 0
        %v411 = vsel %vm367, %v269, 0
        %v414 = vsel %vm367, %v270, 0
        %416 = vmatprep.subr.mxu0 %v254
        %417 = vmatpush1.msra.mxu0 %v253
        %418 = vmatprep.subr.mxu0 0.0
        %419 = vmatpush1.msra.mxu0 0.0
        %420 = vmatprep.subr.mxu0 0.0
        %421 = vmatpush1.msra.mxu0 0.0
        %422 = vmatprep.subr.mxu0 0.0
        %423 = vmatpush1.msra.mxu0 0.0
        %424 = vmatprep.subr.mxu0 0.0
        %425 = vmatpush1.msra.mxu0 0.0
        %426 = vmatprep.subr.mxu0 0.0
        %427 = vmatpush1.msra.mxu0 0.0
        %428 = vmatprep.subr.mxu0 0.0
        %429 = vmatpush1.msra.mxu0 0.0
        %430 = vmatprep.subr.mxu0 0.0
        %431 = vmatpush1.msra.mxu0 0.0
        %432 = vmatprep.subr.mxu0 0.0
        %433 = vmatpush1.msra.mxu0 0.0
        %434 = vmatprep.subr.mxu0 0.0
        %435 = vmatpush1.msra.mxu0 0.0
        %436 = vmatprep.subr.mxu0 0.0
        %437 = vmatpush1.msra.mxu0 0.0
        %438 = vmatprep.subr.mxu0 0.0
        %439 = vmatpush1.msra.mxu0 0.0
        %440 = vmatprep.subr.mxu0 0.0
        %441 = vmatpush1.msra.mxu0 0.0
        %442 = vmatprep.subr.mxu0 0.0
        %443 = vmatpush1.msra.mxu0 0.0
        %444 = vmatprep.subr.mxu0 0.0
        %445 = vmatpush1.msra.mxu0 0.0
        %446 = vmatprep.subr.mxu0 0.0
        %447 = vmatpush1.msra.mxu0 0.0
        %448 = vmatprep.subr.mxu0 0.0
        %449 = vmatpush1.msra.mxu0 0.0
        %450 = vmatprep.subr.mxu0 0.0
        %451 = vmatpush1.msra.mxu0 0.0
        %452 = vmatprep.subr.mxu0 0.0
        %453 = vmatpush1.msra.mxu0 0.0
        %454 = vmatprep.subr.mxu0 0.0
        %455 = vmatpush1.msra.mxu0 0.0
        %456 = vmatprep.subr.mxu0 0.0
        %457 = vmatpush1.msra.mxu0 0.0
        %458 = vmatprep.subr.mxu0 0.0
        %459 = vmatpush1.msra.mxu0 0.0
        %460 = vmatprep.subr.mxu0 0.0
        %461 = vmatpush1.msra.mxu0 0.0
        %462 = vmatprep.subr.mxu0 0.0
        %463 = vmatpush1.msra.mxu0 0.0
        %464 = vmatprep.subr.mxu0 0.0
        %465 = vmatpush1.msra.mxu0 0.0
        %466 = vmatprep.subr.mxu0 0.0
        %467 = vmatpush1.msra.mxu0 0.0
        %468 = vmatprep.subr.mxu0 0.0
        %469 = vmatpush1.msra.mxu0 0.0
        %470 = vmatprep.subr.mxu0 0.0
        %471 = vmatpush1.msra.mxu0 0.0
        %472 = vmatprep.subr.mxu0 0.0
        %473 = vmatpush1.msra.mxu0 0.0
        %474 = vmatprep.subr.mxu0 0.0
        %475 = vmatpush1.msra.mxu0 0.0
        %476 = vmatprep.subr.mxu0 0.0
        %477 = vmatpush1.msra.mxu0 0.0
        %478 = vmatprep.subr.mxu0 0.0
        %479 = vmatpush1.msra.mxu0 0.0
        %480 = vmatprep.mubr.f32.mxu0 0.0
        %481 = vmatmul.mubr.f32.gmra.mrb[0].mxu0 %v369
        %v482 = vpop.f32.mrb[0].mxu0
        %v483 = vadd.f32 %v290, %v482
        %v484 = vpop.f32.mrb[0].mxu0
        %v485 = vadd.f32 %v290, %v484
        %486 = vmatprep.mubr.f32.mxu0 0.0
        %487 = vmatmul.mubr.f32.gmra.mrb[0].mxu0 %v372
        %v488 = vpop.f32.mrb[0].mxu0
        %v489 = vadd.f32 %v295, %v488
        %v490 = vpop.f32.mrb[0].mxu0
        %v491 = vadd.f32 %v295, %v490
        %492 = vmatprep.mubr.f32.mxu0 0.0
        %493 = vmatmul.mubr.f32.gmra.mrb[0].mxu0 %v375
        %v494 = vpop.f32.mrb[0].mxu0
        %v495 = vadd.f32 %v300, %v494
        %v496 = vpop.f32.mrb[0].mxu0
        %v497 = vadd.f32 %v300, %v496
        %498 = vmatprep.mubr.f32.mxu0 0.0
        %499 = vmatmul.mubr.f32.gmra.mrb[0].mxu0 %v378
        %v500 = vpop.f32.mrb[0].mxu0
        %v501 = vadd.f32 %v305, %v500
        %v502 = vpop.f32.mrb[0].mxu0
        %v503 = vadd.f32 %v305, %v502
        %504 = vmatprep.mubr.f32.mxu0 0.0
        %505 = vmatmul.mubr.f32.gmra.mrb[0].mxu0 %v381
        %v506 = vpop.f32.mrb[0].mxu0
        %v507 = vadd.f32 %v310, %v506
        %v508 = vpop.f32.mrb[0].mxu0
        %v509 = vadd.f32 %v310, %v508
        %510 = vmatprep.mubr.f32.mxu0 0.0
        %511 = vmatmul.mubr.f32.gmra.mrb[0].mxu0 %v384
        %v512 = vpop.f32.mrb[0].mxu0
        %v513 = vadd.f32 %v315, %v512
        %v514 = vpop.f32.mrb[0].mxu0
        %v515 = vadd.f32 %v315, %v514
        %516 = vmatprep.mubr.f32.mxu0 0.0
        %517 = vmatmul.mubr.f32.gmra.mrb[0].mxu0 %v387
        %v518 = vpop.f32.mrb[0].mxu0
        %v519 = vadd.f32 %v320, %v518
        %v520 = vpop.f32.mrb[0].mxu0
        %v521 = vadd.f32 %v320, %v520
        %522 = vmatprep.mubr.f32.mxu0 0.0
        %523 = vmatmul.mubr.f32.gmra.mrb[0].mxu0 %v390
        %v524 = vpop.f32.mrb[0].mxu0
        %v525 = vadd.f32 %v325, %v524
        %v526 = vpop.f32.mrb[0].mxu0
        %v527 = vadd.f32 %v325, %v526
        %528 = vmatprep.mubr.f32.mxu0 0.0
        %529 = vmatmul.mubr.f32.gmra.mrb[0].mxu0 %v393
        %v530 = vpop.f32.mrb[0].mxu0
        %v531 = vadd.f32 %v330, %v530
        %v532 = vpop.f32.mrb[0].mxu0
        %v533 = vadd.f32 %v330, %v532
        %534 = vmatprep.mubr.f32.mxu0 0.0
        %535 = vmatmul.mubr.f32.gmra.mrb[0].mxu0 %v396
        %v536 = vpop.f32.mrb[0].mxu0
        %v537 = vadd.f32 %v335, %v536
        %v538 = vpop.f32.mrb[0].mxu0
        %v539 = vadd.f32 %v335, %v538
        %540 = vmatprep.mubr.f32.mxu0 0.0
        %541 = vmatmul.mubr.f32.gmra.mrb[0].mxu0 %v399
        %v542 = vpop.f32.mrb[0].mxu0
        %v543 = vadd.f32 %v340, %v542
        %v544 = vpop.f32.mrb[0].mxu0
        %v545 = vadd.f32 %v340, %v544
        %546 = vmatprep.mubr.f32.mxu0 0.0
        %547 = vmatmul.mubr.f32.gmra.mrb[0].mxu0 %v402
        %v548 = vpop.f32.mrb[0].mxu0
        %v549 = vadd.f32 %v345, %v548
        %v550 = vpop.f32.mrb[0].mxu0
        %v551 = vadd.f32 %v345, %v550
        %552 = vmatprep.mubr.f32.mxu0 0.0
        %553 = vmatmul.mubr.f32.gmra.mrb[0].mxu0 %v405
        %v554 = vpop.f32.mrb[0].mxu0
        %v555 = vadd.f32 %v350, %v554
        %v556 = vpop.f32.mrb[0].mxu0
        %v557 = vadd.f32 %v350, %v556
        %558 = vmatprep.mubr.f32.mxu0 0.0
        %559 = vmatmul.mubr.f32.gmra.mrb[0].mxu0 %v408
        %v560 = vpop.f32.mrb[0].mxu0
        %v561 = vadd.f32 %v355, %v560
        %v562 = vpop.f32.mrb[0].mxu0
        %v563 = vadd.f32 %v355, %v562
        %564 = vmatprep.mubr.f32.mxu0 0.0
        %565 = vmatmul.mubr.f32.gmra.mrb[0].mxu0 %v411
        %v566 = vpop.f32.mrb[0].mxu0
        %v567 = vadd.f32 %v360, %v566
        %v568 = vpop.f32.mrb[0].mxu0
        %v569 = vadd.f32 %v360, %v568
        %570 = vmatprep.mubr.f32.mxu0 0.0
        %571 = vmatmul.mubr.f32.gmra.mrb[0].mxu0 %v414
        %v572 = vpop.f32.mrb[0].mxu0
        %v573 = vadd.f32 %v365, %v572
        %v574 = vpop.f32.mrb[0].mxu0
        %v575 = vadd.f32 %v365, %v574
        %576 = vdwg.mxu0
        %577 = vst [vmem:[%s247] sm:$0xff] %v483
        %578 = vst [vmem:[%s247 + $0x8] sm:$0xff] %v485
        %579 = vst [vmem:[%s247 + $0x10] sm:$0xff] %v489
        %580 = vst [vmem:[%s247 + $0x18] sm:$0xff] %v491
        %581 = vst [vmem:[%s247 + $0x20] sm:$0xff] %v495
        %582 = vst [vmem:[%s247 + $0x28] sm:$0xff] %v497
        %583 = vst [vmem:[%s247 + $0x30] sm:$0xff] %v501
        %584 = vst [vmem:[%s247 + $0x38] sm:$0xff] %v503
        %585 = vst [vmem:[%s247 + $0x40] sm:$0xff] %v507
        %586 = vst [vmem:[%s247 + $0x48] sm:$0xff] %v509
        %587 = vst [vmem:[%s247 + $0x50] sm:$0xff] %v513
        %588 = vst [vmem:[%s247 + $0x58] sm:$0xff] %v515
        %589 = vst [vmem:[%s247 + $0x60] sm:$0xff] %v519
        %590 = vst [vmem:[%s247 + $0x68] sm:$0xff] %v521
        %591 = vst [vmem:[%s247 + $0x70] sm:$0xff] %v525
        %592 = vst [vmem:[%s247 + $0x78] sm:$0xff] %v527
        %593 = vst [vmem:[%s247 + $0x80] sm:$0xff] %v531
        %594 = vst [vmem:[%s247 + $0x88] sm:$0xff] %v533
        %595 = vst [vmem:[%s247 + $0x90] sm:$0xff] %v537
        %596 = vst [vmem:[%s247 + $0x98] sm:$0xff] %v539
        %597 = vst [vmem:[%s247 + $0xa0] sm:$0xff] %v543
        %598 = vst [vmem:[%s247 + $0xa8] sm:$0xff] %v545
        %599 = vst [vmem:[%s247 + $0xb0] sm:$0xff] %v549
        %600 = vst [vmem:[%s247 + $0xb8] sm:$0xff] %v551
        %601 = vst [vmem:[%s247 + $0xc0] sm:$0xff] %v555
        %602 = vst [vmem:[%s247 + $0xc8] sm:$0xff] %v557
        %603 = vst [vmem:[%s247 + $0xd0] sm:$0xff] %v561
        %604 = vst [vmem:[%s247 + $0xd8] sm:$0xff] %v563
        %605 = vst [vmem:[%s247 + $0xe0] sm:$0xff] %v567
        %606 = vst [vmem:[%s247 + $0xe8] sm:$0xff] %v569
        %607 = vst [vmem:[%s247 + $0xf0] sm:$0xff] %v573
        %608 = vst [vmem:[%s247 + $0xf8] sm:$0xff] %v575
        loop: start=0, step=1, limit=3
        $region49: #{tpu_custom_call.1} parent=39 // loop_pre_header
          _
        $region50: #{tpu_custom_call.1} parent=39 // loop_header
          %s610 = sphi 0, %s614
          %p611 = scmp.ge.s32.totalorder %s610, 3
        $region51: #{tpu_custom_call.1} parent=39 // loop_header_branch
          %613 = sbr.rel (%p611) target = $region55
        $region52: #{tpu_custom_call.1} parent=39 // loop_body
          %v615 = vld [vmem:[%s247] sm:$0xff]
          %v616 = vld [vmem:[%s247 + $0x8] sm:$0xff]
          %v617 = vld [vmem:[%s247 + $0x10] sm:$0xff]
          %v618 = vld [vmem:[%s247 + $0x18] sm:$0xff]
          %v619 = vld [vmem:[%s247 + $0x20] sm:$0xff]
          %v620 = vld [vmem:[%s247 + $0x28] sm:$0xff]
          %v621 = vld [vmem:[%s247 + $0x30] sm:$0xff]
          %v622 = vld [vmem:[%s247 + $0x38] sm:$0xff]
          %v623 = vld [vmem:[%s247 + $0x40] sm:$0xff]
          %v624 = vld [vmem:[%s247 + $0x48] sm:$0xff]
          %v625 = vld [vmem:[%s247 + $0x50] sm:$0xff]
          %v626 = vld [vmem:[%s247 + $0x58] sm:$0xff]
          %v627 = vld [vmem:[%s247 + $0x60] sm:$0xff]
          %v628 = vld [vmem:[%s247 + $0x68] sm:$0xff]
          %v629 = vld [vmem:[%s247 + $0x70] sm:$0xff]
          %v630 = vld [vmem:[%s247 + $0x78] sm:$0xff]
          %v631 = vld [vmem:[%s247 + $0x80] sm:$0xff]
          %v632 = vld [vmem:[%s247 + $0x88] sm:$0xff]
          %v633 = vld [vmem:[%s247 + $0x90] sm:$0xff]
          %v634 = vld [vmem:[%s247 + $0x98] sm:$0xff]
          %v635 = vld [vmem:[%s247 + $0xa0] sm:$0xff]
          %v636 = vld [vmem:[%s247 + $0xa8] sm:$0xff]
          %v637 = vld [vmem:[%s247 + $0xb0] sm:$0xff]
          %v638 = vld [vmem:[%s247 + $0xb8] sm:$0xff]
          %v639 = vld [vmem:[%s247 + $0xc0] sm:$0xff]
          %v640 = vld [vmem:[%s247 + $0xc8] sm:$0xff]
          %v641 = vld [vmem:[%s247 + $0xd0] sm:$0xff]
          %v642 = vld [vmem:[%s247 + $0xd8] sm:$0xff]
          %v643 = vld [vmem:[%s247 + $0xe0] sm:$0xff]
          %v644 = vld [vmem:[%s247 + $0xe8] sm:$0xff]
          %v645 = vld [vmem:[%s247 + $0xf0] sm:$0xff]
          %v646 = vld [vmem:[%s247 + $0xf8] sm:$0xff]
          %s647 = smul.u32 %s610, 128
          %s648 = scalar_lea.vmem [#allocation2], %s647
          %v649 = vld [vmem:[%s648] sm:$0xff]
          %v650 = vld [vmem:[%s648 + $0x8] sm:$0xff]
          %v651 = vld [vmem:[%s648 + $0x10] sm:$0xff]
          %v652 = vld [vmem:[%s648 + $0x18] sm:$0xff]
          %v653 = vld [vmem:[%s648 + $0x20] sm:$0xff]
          %v654 = vld [vmem:[%s648 + $0x28] sm:$0xff]
          %v655 = vld [vmem:[%s648 + $0x30] sm:$0xff]
          %v656 = vld [vmem:[%s648 + $0x38] sm:$0xff]
          %v657 = vld [vmem:[%s648 + $0x40] sm:$0xff]
          %v658 = vld [vmem:[%s648 + $0x48] sm:$0xff]
          %v659 = vld [vmem:[%s648 + $0x50] sm:$0xff]
          %v660 = vld [vmem:[%s648 + $0x58] sm:$0xff]
          %v661 = vld [vmem:[%s648 + $0x60] sm:$0xff]
          %v662 = vld [vmem:[%s648 + $0x68] sm:$0xff]
          %v663 = vld [vmem:[%s648 + $0x70] sm:$0xff]
          %v664 = vld [vmem:[%s648 + $0x78] sm:$0xff]
          %665 = vmatprep.subr.mxu0 %v616
          %666 = vmatpush1.msra.mxu0 %v615
          %667 = vmatprep.subr.mxu0 %v618
          %668 = vmatpush1.msra.mxu0 %v617
          %669 = vmatprep.subr.mxu0 %v620
          %670 = vmatpush1.msra.mxu0 %v619
          %671 = vmatprep.subr.mxu0 %v622
          %672 = vmatpush1.msra.mxu0 %v621
          %673 = vmatprep.subr.mxu0 %v624
          %674 = vmatpush1.msra.mxu0 %v623
          %675 = vmatprep.subr.mxu0 %v626
          %676 = vmatpush1.msra.mxu0 %v625
          %677 = vmatprep.subr.mxu0 %v628
          %678 = vmatpush1.msra.mxu0 %v627
          %679 = vmatprep.subr.mxu0 %v630
          %680 = vmatpush1.msra.mxu0 %v629
          %681 = vmatprep.subr.mxu0 %v632
          %682 = vmatpush1.msra.mxu0 %v631
          %683 = vmatprep.subr.mxu0 %v634
          %684 = vmatpush1.msra.mxu0 %v633
          %685 = vmatprep.subr.mxu0 %v636
          %686 = vmatpush1.msra.mxu0 %v635
          %687 = vmatprep.subr.mxu0 %v638
          %688 = vmatpush1.msra.mxu0 %v637
          %689 = vmatprep.subr.mxu0 %v640
          %690 = vmatpush1.msra.mxu0 %v639
          %691 = vmatprep.subr.mxu0 %v642
          %692 = vmatpush1.msra.mxu0 %v641
          %693 = vmatprep.subr.mxu0 %v644
          %694 = vmatpush1.msra.mxu0 %v643
          %695 = vmatprep.subr.mxu0 %v646
          %696 = vmatpush1.msra.mxu0 %v645
          %697 = vmatprep.subr.mxu0 0.0
          %698 = vmatpush1.msra.mxu0 0.0
          %699 = vmatprep.subr.mxu0 0.0
          %700 = vmatpush1.msra.mxu0 0.0
          %701 = vmatprep.subr.mxu0 0.0
          %702 = vmatpush1.msra.mxu0 0.0
          %703 = vmatprep.subr.mxu0 0.0
          %704 = vmatpush1.msra.mxu0 0.0
          %705 = vmatprep.subr.mxu0 0.0
          %706 = vmatpush1.msra.mxu0 0.0
          %707 = vmatprep.subr.mxu0 0.0
          %708 = vmatpush1.msra.mxu0 0.0
          %709 = vmatprep.subr.mxu0 0.0
          %710 = vmatpush1.msra.mxu0 0.0
          %711 = vmatprep.subr.mxu0 0.0
          %712 = vmatpush1.msra.mxu0 0.0
          %713 = vmatprep.subr.mxu0 0.0
          %714 = vmatpush1.msra.mxu0 0.0
          %715 = vmatprep.subr.mxu0 0.0
          %716 = vmatpush1.msra.mxu0 0.0
          %717 = vmatprep.subr.mxu0 0.0
          %718 = vmatpush1.msra.mxu0 0.0
          %719 = vmatprep.subr.mxu0 0.0
          %720 = vmatpush1.msra.mxu0 0.0
          %721 = vmatprep.subr.mxu0 0.0
          %722 = vmatpush1.msra.mxu0 0.0
          %723 = vmatprep.subr.mxu0 0.0
          %724 = vmatpush1.msra.mxu0 0.0
          %725 = vmatprep.subr.mxu0 0.0
          %726 = vmatpush1.msra.mxu0 0.0
          %727 = vmatprep.subr.mxu0 0.0
          %728 = vmatpush1.msra.mxu0 0.0
          %729 = vmatprep.mubr.f32.mxu0 0.0
          %730 = vmatmul.mubr.f32.gmra.mrb[0].mxu0 %v649
          %v731 = vpop.f32.mrb[0].mxu0
          %v732 = vadd.f32 0.0, %v731
          %v733 = vpop.f32.mrb[0].mxu0
          %v734 = vadd.f32 0.0, %v733
          %735 = vmatprep.mubr.f32.mxu0 0.0
          %736 = vmatmul.mubr.f32.gmra.mrb[0].mxu0 %v650
          %v737 = vpop.f32.mrb[0].mxu0
          %v738 = vadd.f32 0.0, %v737
          %v739 = vpop.f32.mrb[0].mxu0
          %v740 = vadd.f32 0.0, %v739
          %741 = vmatprep.mubr.f32.mxu0 0.0
          %742 = vmatmul.mubr.f32.gmra.mrb[0].mxu0 %v651
          %v743 = vpop.f32.mrb[0].mxu0
          %v744 = vadd.f32 0.0, %v743
          %v745 = vpop.f32.mrb[0].mxu0
          %v746 = vadd.f32 0.0, %v745
          %747 = vmatprep.mubr.f32.mxu0 0.0
          %748 = vmatmul.mubr.f32.gmra.mrb[0].mxu0 %v652
          %v749 = vpop.f32.mrb[0].mxu0
          %v750 = vadd.f32 0.0, %v749
          %v751 = vpop.f32.mrb[0].mxu0
          %v752 = vadd.f32 0.0, %v751
          %753 = vmatprep.mubr.f32.mxu0 0.0
          %754 = vmatmul.mubr.f32.gmra.mrb[0].mxu0 %v653
          %v755 = vpop.f32.mrb[0].mxu0
          %v756 = vadd.f32 0.0, %v755
          %v757 = vpop.f32.mrb[0].mxu0
          %v758 = vadd.f32 0.0, %v757
          %759 = vmatprep.mubr.f32.mxu0 0.0
          %760 = vmatmul.mubr.f32.gmra.mrb[0].mxu0 %v654
          %v761 = vpop.f32.mrb[0].mxu0
          %v762 = vadd.f32 0.0, %v761
          %v763 = vpop.f32.mrb[0].mxu0
          %v764 = vadd.f32 0.0, %v763
          %765 = vmatprep.mubr.f32.mxu0 0.0
          %766 = vmatmul.mubr.f32.gmra.mrb[0].mxu0 %v655
          %v767 = vpop.f32.mrb[0].mxu0
          %v768 = vadd.f32 0.0, %v767
          %v769 = vpop.f32.mrb[0].mxu0
          %v770 = vadd.f32 0.0, %v769
          %771 = vmatprep.mubr.f32.mxu0 0.0
          %772 = vmatmul.mubr.f32.gmra.mrb[0].mxu0 %v656
          %v773 = vpop.f32.mrb[0].mxu0
          %v774 = vadd.f32 0.0, %v773
          %v775 = vpop.f32.mrb[0].mxu0
          %v776 = vadd.f32 0.0, %v775
          %777 = vmatprep.mubr.f32.mxu0 0.0
          %778 = vmatmul.mubr.f32.gmra.mrb[0].mxu0 %v657
          %v779 = vpop.f32.mrb[0].mxu0
          %v780 = vadd.f32 0.0, %v779
          %v781 = vpop.f32.mrb[0].mxu0
          %v782 = vadd.f32 0.0, %v781
          %783 = vmatprep.mubr.f32.mxu0 0.0
          %784 = vmatmul.mubr.f32.gmra.mrb[0].mxu0 %v658
          %v785 = vpop.f32.mrb[0].mxu0
          %v786 = vadd.f32 0.0, %v785
          %v787 = vpop.f32.mrb[0].mxu0
          %v788 = vadd.f32 0.0, %v787
          %789 = vmatprep.mubr.f32.mxu0 0.0
          %790 = vmatmul.mubr.f32.gmra.mrb[0].mxu0 %v659
          %v791 = vpop.f32.mrb[0].mxu0
          %v792 = vadd.f32 0.0, %v791
          %v793 = vpop.f32.mrb[0].mxu0
          %v794 = vadd.f32 0.0, %v793
          %795 = vmatprep.mubr.f32.mxu0 0.0
          %796 = vmatmul.mubr.f32.gmra.mrb[0].mxu0 %v660
          %v797 = vpop.f32.mrb[0].mxu0
          %v798 = vadd.f32 0.0, %v797
          %v799 = vpop.f32.mrb[0].mxu0
          %v800 = vadd.f32 0.0, %v799
          %801 = vmatprep.mubr.f32.mxu0 0.0
          %802 = vmatmul.mubr.f32.gmra.mrb[0].mxu0 %v661
          %v803 = vpop.f32.mrb[0].mxu0
          %v804 = vadd.f32 0.0, %v803
          %v805 = vpop.f32.mrb[0].mxu0
          %v806 = vadd.f32 0.0, %v805
          %807 = vmatprep.mubr.f32.mxu0 0.0
          %808 = vmatmul.mubr.f32.gmra.mrb[0].mxu0 %v662
          %v809 = vpop.f32.mrb[0].mxu0
          %v810 = vadd.f32 0.0, %v809
          %v811 = vpop.f32.mrb[0].mxu0
          %v812 = vadd.f32 0.0, %v811
          %813 = vmatprep.mubr.f32.mxu0 0.0
          %814 = vmatmul.mubr.f32.gmra.mrb[0].mxu0 %v663
          %v815 = vpop.f32.mrb[0].mxu0
          %v816 = vadd.f32 0.0, %v815
          %v817 = vpop.f32.mrb[0].mxu0
          %v818 = vadd.f32 0.0, %v817
          %819 = vmatprep.mubr.f32.mxu0 0.0
          %820 = vmatmul.mubr.f32.gmra.mrb[0].mxu0 %v664
          %v821 = vpop.f32.mrb[0].mxu0
          %v822 = vadd.f32 0.0, %v821
          %v823 = vpop.f32.mrb[0].mxu0
          %v824 = vadd.f32 0.0, %v823
          %825 = vdwg.mxu0
          %v826 = vadd.f32 %v732, %v734
          %827 = vadd.xlane.f32.xlu0 %v826
          %v828 = vpop.xlane.xlu0 %827
          %v829 = vadd.f32 %v738, %v740
          %830 = vadd.xlane.f32.xlu0 %v829
          %v831 = vpop.xlane.xlu0 %830
          %v832 = vadd.f32 %v744, %v746
          %833 = vadd.xlane.f32.xlu0 %v832
          %v834 = vpop.xlane.xlu0 %833
          %v835 = vadd.f32 %v750, %v752
          %836 = vadd.xlane.f32.xlu0 %v835
          %v837 = vpop.xlane.xlu0 %836
          %v838 = vadd.f32 %v756, %v758
          %839 = vadd.xlane.f32.xlu0 %v838
          %v840 = vpop.xlane.xlu0 %839
          %v841 = vadd.f32 %v762, %v764
          %842 = vadd.xlane.f32.xlu0 %v841
          %v843 = vpop.xlane.xlu0 %842
          %v844 = vadd.f32 %v768, %v770
          %845 = vadd.xlane.f32.xlu0 %v844
          %v846 = vpop.xlane.xlu0 %845
          %v847 = vadd.f32 %v774, %v776
          %848 = vadd.xlane.f32.xlu0 %v847
          %v849 = vpop.xlane.xlu0 %848
          %v850 = vadd.f32 %v780, %v782
          %851 = vadd.xlane.f32.xlu0 %v850
          %v852 = vpop.xlane.xlu0 %851
          %v853 = vadd.f32 %v786, %v788
          %854 = vadd.xlane.f32.xlu0 %v853
          %v855 = vpop.xlane.xlu0 %854
          %v856 = vadd.f32 %v792, %v794
          %857 = vadd.xlane.f32.xlu0 %v856
          %v858 = vpop.xlane.xlu0 %857
          %v859 = vadd.f32 %v798, %v800
          %860 = vadd.xlane.f32.xlu0 %v859
          %v861 = vpop.xlane.xlu0 %860
          %v862 = vadd.f32 %v804, %v806
          %863 = vadd.xlane.f32.xlu0 %v862
          %v864 = vpop.xlane.xlu0 %863
          %v865 = vadd.f32 %v810, %v812
          %866 = vadd.xlane.f32.xlu0 %v865
          %v867 = vpop.xlane.xlu0 %866
          %v868 = vadd.f32 %v816, %v818
          %869 = vadd.xlane.f32.xlu0 %v868
          %v870 = vpop.xlane.xlu0 %869
          %v871 = vadd.f32 %v822, %v824
          %872 = vadd.xlane.f32.xlu0 %v871
          %v873 = vpop.xlane.xlu0 %872
          %v874 = vrcp.pop 256.0
          %v875 = vmul.f32 %v828, %v874
          %v876 = vmul.f32 %v831, %v874
          %v877 = vmul.f32 %v834, %v874
          %v878 = vmul.f32 %v837, %v874
          %v879 = vmul.f32 %v840, %v874
          %v880 = vmul.f32 %v843, %v874
          %v881 = vmul.f32 %v846, %v874
          %v882 = vmul.f32 %v849, %v874
          %v883 = vmul.f32 %v852, %v874
          %v884 = vmul.f32 %v855, %v874
          %v885 = vmul.f32 %v858, %v874
          %v886 = vmul.f32 %v861, %v874
          %v887 = vmul.f32 %v864, %v874
          %v888 = vmul.f32 %v867, %v874
          %v889 = vmul.f32 %v870, %v874
          %v890 = vmul.f32 %v873, %v874
          %v891 = vsub.f32 %v732, %v875
          %v892 = vsub.f32 %v734, %v875
          %v893 = vsub.f32 %v738, %v876
          %v894 = vsub.f32 %v740, %v876
          %v895 = vsub.f32 %v744, %v877
          %v896 = vsub.f32 %v746, %v877
          %v897 = vsub.f32 %v750, %v878
          %v898 = vsub.f32 %v752, %v878
          %v899 = vsub.f32 %v756, %v879
          %v900 = vsub.f32 %v758, %v879
          %v901 = vsub.f32 %v762, %v880
          %v902 = vsub.f32 %v764, %v880
          %v903 = vsub.f32 %v768, %v881
          %v904 = vsub.f32 %v770, %v881
          %v905 = vsub.f32 %v774, %v882
          %v906 = vsub.f32 %v776, %v882
          %v907 = vsub.f32 %v780, %v883
          %v908 = vsub.f32 %v782, %v883
          %v909 = vsub.f32 %v786, %v884
          %v910 = vsub.f32 %v788, %v884
          %v911 = vsub.f32 %v792, %v885
          %v912 = vsub.f32 %v794, %v885
          %v913 = vsub.f32 %v798, %v886
          %v914 = vsub.f32 %v800, %v886
          %v915 = vsub.f32 %v804, %v887
          %v916 = vsub.f32 %v806, %v887
          %v917 = vsub.f32 %v810, %v888
          %v918 = vsub.f32 %v812, %v888
          %v919 = vsub.f32 %v816, %v889
          %v920 = vsub.f32 %v818, %v889
          %v921 = vsub.f32 %v822, %v890
          %v922 = vsub.f32 %v824, %v890
          %v923 = vmul.f32 %v891, %v891
          %v924 = vmul.f32 %v892, %v892
          %v925 = vmul.f32 %v893, %v893
          %v926 = vmul.f32 %v894, %v894
          %v927 = vmul.f32 %v895, %v895
          %v928 = vmul.f32 %v896, %v896
          %v929 = vmul.f32 %v897, %v897
          %v930 = vmul.f32 %v898, %v898
          %v931 = vmul.f32 %v899, %v899
          %v932 = vmul.f32 %v900, %v900
          %v933 = vmul.f32 %v901, %v901
          %v934 = vmul.f32 %v902, %v902
          %v935 = vmul.f32 %v903, %v903
          %v936 = vmul.f32 %v904, %v904
          %v937 = vmul.f32 %v905, %v905
          %v938 = vmul.f32 %v906, %v906
          %v939 = vmul.f32 %v907, %v907
          %v940 = vmul.f32 %v908, %v908
          %v941 = vmul.f32 %v909, %v909
          %v942 = vmul.f32 %v910, %v910
          %v943 = vmul.f32 %v911, %v911
          %v944 = vmul.f32 %v912, %v912
          %v945 = vmul.f32 %v913, %v913
          %v946 = vmul.f32 %v914, %v914
          %v947 = vmul.f32 %v915, %v915
          %v948 = vmul.f32 %v916, %v916
          %v949 = vmul.f32 %v917, %v917
          %v950 = vmul.f32 %v918, %v918
          %v951 = vmul.f32 %v919, %v919
          %v952 = vmul.f32 %v920, %v920
          %v953 = vmul.f32 %v921, %v921
          %v954 = vmul.f32 %v922, %v922
          %v955 = vadd.f32 %v923, %v924
          %956 = vadd.xlane.f32.xlu0 %v955
          %v957 = vpop.xlane.xlu0 %956
          %v958 = vadd.f32 %v925, %v926
          %959 = vadd.xlane.f32.xlu0 %v958
          %v960 = vpop.xlane.xlu0 %959
          %v961 = vadd.f32 %v927, %v928
          %962 = vadd.xlane.f32.xlu0 %v961
          %v963 = vpop.xlane.xlu0 %962
          %v964 = vadd.f32 %v929, %v930
          %965 = vadd.xlane.f32.xlu0 %v964
          %v966 = vpop.xlane.xlu0 %965
          %v967 = vadd.f32 %v931, %v932
          %968 = vadd.xlane.f32.xlu0 %v967
          %v969 = vpop.xlane.xlu0 %968
          %v970 = vadd.f32 %v933, %v934
          %971 = vadd.xlane.f32.xlu0 %v970
          %v972 = vpop.xlane.xlu0 %971
          %v973 = vadd.f32 %v935, %v936
          %974 = vadd.xlane.f32.xlu0 %v973
          %v975 = vpop.xlane.xlu0 %974
          %v976 = vadd.f32 %v937, %v938
          %977 = vadd.xlane.f32.xlu0 %v976
          %v978 = vpop.xlane.xlu0 %977
          %v979 = vadd.f32 %v939, %v940
          %980 = vadd.xlane.f32.xlu0 %v979
          %v981 = vpop.xlane.xlu0 %980
          %v982 = vadd.f32 %v941, %v942
          %983 = vadd.xlane.f32.xlu0 %v982
          %v984 = vpop.xlane.xlu0 %983
          %v985 = vadd.f32 %v943, %v944
          %986 = vadd.xlane.f32.xlu0 %v985
          %v987 = vpop.xlane.xlu0 %986
          %v988 = vadd.f32 %v945, %v946
          %989 = vadd.xlane.f32.xlu0 %v988
          %v990 = vpop.xlane.xlu0 %989
          %v991 = vadd.f32 %v947, %v948
          %992 = vadd.xlane.f32.xlu0 %v991
          %v993 = vpop.xlane.xlu0 %992
          %v994 = vadd.f32 %v949, %v950
          %995 = vadd.xlane.f32.xlu0 %v994
          %v996 = vpop.xlane.xlu0 %995
          %v997 = vadd.f32 %v951, %v952
          %998 = vadd.xlane.f32.xlu0 %v997
          %v999 = vpop.xlane.xlu0 %998
          %v1000 = vadd.f32 %v953, %v954
          %1001 = vadd.xlane.f32.xlu0 %v1000
          %v1002 = vpop.xlane.xlu0 %1001
          %v1003 = vmul.f32 %v957, %v874
          %v1004 = vmul.f32 %v960, %v874
          %v1005 = vmul.f32 %v963, %v874
          %v1006 = vmul.f32 %v966, %v874
          %v1007 = vmul.f32 %v969, %v874
          %v1008 = vmul.f32 %v972, %v874
          %v1009 = vmul.f32 %v975, %v874
          %v1010 = vmul.f32 %v978, %v874
          %v1011 = vmul.f32 %v981, %v874
          %v1012 = vmul.f32 %v984, %v874
          %v1013 = vmul.f32 %v987, %v874
          %v1014 = vmul.f32 %v990, %v874
          %v1015 = vmul.f32 %v993, %v874
          %v1016 = vmul.f32 %v996, %v874
          %v1017 = vmul.f32 %v999, %v874
          %v1018 = vmul.f32 %v1002, %v874
          %v1019 = vadd.f32 %v1003, 1e-05
          %v1020 = vadd.f32 %v1004, 1e-05
          %v1021 = vadd.f32 %v1005, 1e-05
          %v1022 = vadd.f32 %v1006, 1e-05
          %v1023 = vadd.f32 %v1007, 1e-05
          %v1024 = vadd.f32 %v1008, 1e-05
          %v1025 = vadd.f32 %v1009, 1e-05
          %v1026 = vadd.f32 %v1010, 1e-05
          %v1027 = vadd.f32 %v1011, 1e-05
          %v1028 = vadd.f32 %v1012, 1e-05
          %v1029 = vadd.f32 %v1013, 1e-05
          %v1030 = vadd.f32 %v1014, 1e-05
          %v1031 = vadd.f32 %v1015, 1e-05
          %v1032 = vadd.f32 %v1016, 1e-05
          %v1033 = vadd.f32 %v1017, 1e-05
          %v1034 = vadd.f32 %v1018, 1e-05
          %v1035 = vrsqrt.pop %v1019
          %v1036 = vrsqrt.pop %v1020
          %v1037 = vrsqrt.pop %v1021
          %v1038 = vrsqrt.pop %v1022
          %v1039 = vrsqrt.pop %v1023
          %v1040 = vrsqrt.pop %v1024
          %v1041 = vrsqrt.pop %v1025
          %v1042 = vrsqrt.pop %v1026
          %v1043 = vrsqrt.pop %v1027
          %v1044 = vrsqrt.pop %v1028
          %v1045 = vrsqrt.pop %v1029
          %v1046 = vrsqrt.pop %v1030
          %v1047 = vrsqrt.pop %v1031
          %v1048 = vrsqrt.pop %v1032
          %v1049 = vrsqrt.pop %v1033
          %v1050 = vrsqrt.pop %v1034
          %v1051 = vmul.f32 %v891, %v1035
          %v1052 = vmul.f32 %v892, %v1035
          %v1053 = vmul.f32 %v893, %v1036
          %v1054 = vmul.f32 %v894, %v1036
          %v1055 = vmul.f32 %v895, %v1037
          %v1056 = vmul.f32 %v896, %v1037
          %v1057 = vmul.f32 %v897, %v1038
          %v1058 = vmul.f32 %v898, %v1038
          %v1059 = vmul.f32 %v899, %v1039
          %v1060 = vmul.f32 %v900, %v1039
          %v1061 = vmul.f32 %v901, %v1040
          %v1062 = vmul.f32 %v902, %v1040
          %v1063 = vmul.f32 %v903, %v1041
          %v1064 = vmul.f32 %v904, %v1041
          %v1065 = vmul.f32 %v905, %v1042
          %v1066 = vmul.f32 %v906, %v1042
          %v1067 = vmul.f32 %v907, %v1043
          %v1068 = vmul.f32 %v908, %v1043
          %v1069 = vmul.f32 %v909, %v1044
          %v1070 = vmul.f32 %v910, %v1044
          %v1071 = vmul.f32 %v911, %v1045
          %v1072 = vmul.f32 %v912, %v1045
          %v1073 = vmul.f32 %v913, %v1046
          %v1074 = vmul.f32 %v914, %v1046
          %v1075 = vmul.f32 %v915, %v1047
          %v1076 = vmul.f32 %v916, %v1047
          %v1077 = vmul.f32 %v917, %v1048
          %v1078 = vmul.f32 %v918, %v1048
          %v1079 = vmul.f32 %v919, %v1049
          %v1080 = vmul.f32 %v920, %v1049
          %v1081 = vmul.f32 %v921, %v1050
          %v1082 = vmul.f32 %v922, %v1050
          %s1083 = scalar_lea.vmem [#allocation5], %s647
          %v1084 = vld [vmem:[%s1083] sm:$0xff]
          %v1085 = vld [vmem:[%s1083 + $0x8] sm:$0xff]
          %v1086 = vld [vmem:[%s1083 + $0x10] sm:$0xff]
          %v1087 = vld [vmem:[%s1083 + $0x18] sm:$0xff]
          %v1088 = vld [vmem:[%s1083 + $0x20] sm:$0xff]
          %v1089 = vld [vmem:[%s1083 + $0x28] sm:$0xff]
          %v1090 = vld [vmem:[%s1083 + $0x30] sm:$0xff]
          %v1091 = vld [vmem:[%s1083 + $0x38] sm:$0xff]
          %v1092 = vld [vmem:[%s1083 + $0x40] sm:$0xff]
          %v1093 = vld [vmem:[%s1083 + $0x48] sm:$0xff]
          %v1094 = vld [vmem:[%s1083 + $0x50] sm:$0xff]
          %v1095 = vld [vmem:[%s1083 + $0x58] sm:$0xff]
          %v1096 = vld [vmem:[%s1083 + $0x60] sm:$0xff]
          %v1097 = vld [vmem:[%s1083 + $0x68] sm:$0xff]
          %v1098 = vld [vmem:[%s1083 + $0x70] sm:$0xff]
          %v1099 = vld [vmem:[%s1083 + $0x78] sm:$0xff]
          %1100 = vmatprep.subr.mxu0 %v1052
          %1101 = vmatpush1.msra.mxu0 %v1051
          %1102 = vmatprep.subr.mxu0 %v1054
          %1103 = vmatpush1.msra.mxu0 %v1053
          %1104 = vmatprep.subr.mxu0 %v1056
          %1105 = vmatpush1.msra.mxu0 %v1055
          %1106 = vmatprep.subr.mxu0 %v1058
          %1107 = vmatpush1.msra.mxu0 %v1057
          %1108 = vmatprep.subr.mxu0 %v1060
          %1109 = vmatpush1.msra.mxu0 %v1059
          %1110 = vmatprep.subr.mxu0 %v1062
          %1111 = vmatpush1.msra.mxu0 %v1061
          %1112 = vmatprep.subr.mxu0 %v1064
          %1113 = vmatpush1.msra.mxu0 %v1063
          %1114 = vmatprep.subr.mxu0 %v1066
          %1115 = vmatpush1.msra.mxu0 %v1065
          %1116 = vmatprep.subr.mxu0 %v1068
          %1117 = vmatpush1.msra.mxu0 %v1067
          %1118 = vmatprep.subr.mxu0 %v1070
          %1119 = vmatpush1.msra.mxu0 %v1069
          %1120 = vmatprep.subr.mxu0 %v1072
          %1121 = vmatpush1.msra.mxu0 %v1071
          %1122 = vmatprep.subr.mxu0 %v1074
          %1123 = vmatpush1.msra.mxu0 %v1073
          %1124 = vmatprep.subr.mxu0 %v1076
          %1125 = vmatpush1.msra.mxu0 %v1075
          %1126 = vmatprep.subr.mxu0 %v1078
          %1127 = vmatpush1.msra.mxu0 %v1077
          %1128 = vmatprep.subr.mxu0 %v1080
          %1129 = vmatpush1.msra.mxu0 %v1079
          %1130 = vmatprep.subr.mxu0 %v1082
          %1131 = vmatpush1.msra.mxu0 %v1081
          %1132 = vmatprep.subr.mxu0 0.0
          %1133 = vmatpush1.msra.mxu0 0.0
          %1134 = vmatprep.subr.mxu0 0.0
          %1135 = vmatpush1.msra.mxu0 0.0
          %1136 = vmatprep.subr.mxu0 0.0
          %1137 = vmatpush1.msra.mxu0 0.0
          %1138 = vmatprep.subr.mxu0 0.0
          %1139 = vmatpush1.msra.mxu0 0.0
          %1140 = vmatprep.subr.mxu0 0.0
          %1141 = vmatpush1.msra.mxu0 0.0
          %1142 = vmatprep.subr.mxu0 0.0
          %1143 = vmatpush1.msra.mxu0 0.0
          %1144 = vmatprep.subr.mxu0 0.0
          %1145 = vmatpush1.msra.mxu0 0.0
          %1146 = vmatprep.subr.mxu0 0.0
          %1147 = vmatpush1.msra.mxu0 0.0
          %1148 = vmatprep.subr.mxu0 0.0
          %1149 = vmatpush1.msra.mxu0 0.0
          %1150 = vmatprep.subr.mxu0 0.0
          %1151 = vmatpush1.msra.mxu0 0.0
          %1152 = vmatprep.subr.mxu0 0.0
          %1153 = vmatpush1.msra.mxu0 0.0
          %1154 = vmatprep.subr.mxu0 0.0
          %1155 = vmatpush1.msra.mxu0 0.0
          %1156 = vmatprep.subr.mxu0 0.0
          %1157 = vmatpush1.msra.mxu0 0.0
          %1158 = vmatprep.subr.mxu0 0.0
          %1159 = vmatpush1.msra.mxu0 0.0
          %1160 = vmatprep.subr.mxu0 0.0
          %1161 = vmatpush1.msra.mxu0 0.0
          %1162 = vmatprep.subr.mxu0 0.0
          %1163 = vmatpush1.msra.mxu0 0.0
          %1164 = vmatprep.mubr.f32.mxu0 0.0
          %1165 = vmatmul.mubr.f32.gmra.mrb[0].mxu0 %v1084
          %v1166 = vpop.f32.mrb[0].mxu0
          %v1167 = vadd.f32 0.0, %v1166
          %v1168 = vpop.f32.mrb[0].mxu0
          %v1169 = vadd.f32 0.0, %v1168
          %1170 = vmatprep.mubr.f32.mxu0 0.0
          %1171 = vmatmul.mubr.f32.gmra.mrb[0].mxu0 %v1085
          %v1172 = vpop.f32.mrb[0].mxu0
          %v1173 = vadd.f32 0.0, %v1172
          %v1174 = vpop.f32.mrb[0].mxu0
          %v1175 = vadd.f32 0.0, %v1174
          %1176 = vmatprep.mubr.f32.mxu0 0.0
          %1177 = vmatmul.mubr.f32.gmra.mrb[0].mxu0 %v1086
          %v1178 = vpop.f32.mrb[0].mxu0
          %v1179 = vadd.f32 0.0, %v1178
          %v1180 = vpop.f32.mrb[0].mxu0
          %v1181 = vadd.f32 0.0, %v1180
          %1182 = vmatprep.mubr.f32.mxu0 0.0
          %1183 = vmatmul.mubr.f32.gmra.mrb[0].mxu0 %v1087
          %v1184 = vpop.f32.mrb[0].mxu0
          %v1185 = vadd.f32 0.0, %v1184
          %v1186 = vpop.f32.mrb[0].mxu0
          %v1187 = vadd.f32 0.0, %v1186
          %1188 = vmatprep.mubr.f32.mxu0 0.0
          %1189 = vmatmul.mubr.f32.gmra.mrb[0].mxu0 %v1088
          %v1190 = vpop.f32.mrb[0].mxu0
          %v1191 = vadd.f32 0.0, %v1190
          %v1192 = vpop.f32.mrb[0].mxu0
          %v1193 = vadd.f32 0.0, %v1192
          %1194 = vmatprep.mubr.f32.mxu0 0.0
          %1195 = vmatmul.mubr.f32.gmra.mrb[0].mxu0 %v1089
          %v1196 = vpop.f32.mrb[0].mxu0
          %v1197 = vadd.f32 0.0, %v1196
          %v1198 = vpop.f32.mrb[0].mxu0
          %v1199 = vadd.f32 0.0, %v1198
          %1200 = vmatprep.mubr.f32.mxu0 0.0
          %1201 = vmatmul.mubr.f32.gmra.mrb[0].mxu0 %v1090
          %v1202 = vpop.f32.mrb[0].mxu0
          %v1203 = vadd.f32 0.0, %v1202
          %v1204 = vpop.f32.mrb[0].mxu0
          %v1205 = vadd.f32 0.0, %v1204
          %1206 = vmatprep.mubr.f32.mxu0 0.0
          %1207 = vmatmul.mubr.f32.gmra.mrb[0].mxu0 %v1091
          %v1208 = vpop.f32.mrb[0].mxu0
          %v1209 = vadd.f32 0.0, %v1208
          %v1210 = vpop.f32.mrb[0].mxu0
          %v1211 = vadd.f32 0.0, %v1210
          %1212 = vmatprep.mubr.f32.mxu0 0.0
          %1213 = vmatmul.mubr.f32.gmra.mrb[0].mxu0 %v1092
          %v1214 = vpop.f32.mrb[0].mxu0
          %v1215 = vadd.f32 0.0, %v1214
          %v1216 = vpop.f32.mrb[0].mxu0
          %v1217 = vadd.f32 0.0, %v1216
          %1218 = vmatprep.mubr.f32.mxu0 0.0
          %1219 = vmatmul.mubr.f32.gmra.mrb[0].mxu0 %v1093
          %v1220 = vpop.f32.mrb[0].mxu0
          %v1221 = vadd.f32 0.0, %v1220
          %v1222 = vpop.f32.mrb[0].mxu0
          %v1223 = vadd.f32 0.0, %v1222
          %1224 = vmatprep.mubr.f32.mxu0 0.0
          %1225 = vmatmul.mubr.f32.gmra.mrb[0].mxu0 %v1094
          %v1226 = vpop.f32.mrb[0].mxu0
          %v1227 = vadd.f32 0.0, %v1226
          %v1228 = vpop.f32.mrb[0].mxu0
          %v1229 = vadd.f32 0.0, %v1228
          %1230 = vmatprep.mubr.f32.mxu0 0.0
          %1231 = vmatmul.mubr.f32.gmra.mrb[0].mxu0 %v1095
          %v1232 = vpop.f32.mrb[0].mxu0
          %v1233 = vadd.f32 0.0, %v1232
          %v1234 = vpop.f32.mrb[0].mxu0
          %v1235 = vadd.f32 0.0, %v1234
          %1236 = vmatprep.mubr.f32.mxu0 0.0
          %1237 = vmatmul.mubr.f32.gmra.mrb[0].mxu0 %v1096
          %v1238 = vpop.f32.mrb[0].mxu0
          %v1239 = vadd.f32 0.0, %v1238
          %v1240 = vpop.f32.mrb[0].mxu0
          %v1241 = vadd.f32 0.0, %v1240
          %1242 = vmatprep.mubr.f32.mxu0 0.0
          %1243 = vmatmul.mubr.f32.gmra.mrb[0].mxu0 %v1097
          %v1244 = vpop.f32.mrb[0].mxu0
          %v1245 = vadd.f32 0.0, %v1244
          %v1246 = vpop.f32.mrb[0].mxu0
          %v1247 = vadd.f32 0.0, %v1246
          %1248 = vmatprep.mubr.f32.mxu0 0.0
          %1249 = vmatmul.mubr.f32.gmra.mrb[0].mxu0 %v1098
          %v1250 = vpop.f32.mrb[0].mxu0
          %v1251 = vadd.f32 0.0, %v1250
          %v1252 = vpop.f32.mrb[0].mxu0
          %v1253 = vadd.f32 0.0, %v1252
          %1254 = vmatprep.mubr.f32.mxu0 0.0
          %1255 = vmatmul.mubr.f32.gmra.mrb[0].mxu0 %v1099
          %v1256 = vpop.f32.mrb[0].mxu0
          %v1257 = vadd.f32 0.0, %v1256
          %v1258 = vpop.f32.mrb[0].mxu0
          %v1259 = vadd.f32 0.0, %v1258
          %1260 = vdwg.mxu0
          %v1261 = vadd.f32 %v1167, %v1169
          %1262 = vadd.xlane.f32.xlu0 %v1261
          %v1263 = vpop.xlane.xlu0 %1262
          %v1264 = vadd.f32 %v1173, %v1175
          %1265 = vadd.xlane.f32.xlu0 %v1264
          %v1266 = vpop.xlane.xlu0 %1265
          %v1267 = vadd.f32 %v1179, %v1181
          %1268 = vadd.xlane.f32.xlu0 %v1267
          %v1269 = vpop.xlane.xlu0 %1268
          %v1270 = vadd.f32 %v1185, %v1187
          %1271 = vadd.xlane.f32.xlu0 %v1270
          %v1272 = vpop.xlane.xlu0 %1271
          %v1273 = vadd.f32 %v1191, %v1193
          %1274 = vadd.xlane.f32.xlu0 %v1273
          %v1275 = vpop.xlane.xlu0 %1274
          %v1276 = vadd.f32 %v1197, %v1199
          %1277 = vadd.xlane.f32.xlu0 %v1276
          %v1278 = vpop.xlane.xlu0 %1277
          %v1279 = vadd.f32 %v1203, %v1205
          %1280 = vadd.xlane.f32.xlu0 %v1279
          %v1281 = vpop.xlane.xlu0 %1280
          %v1282 = vadd.f32 %v1209, %v1211
          %1283 = vadd.xlane.f32.xlu0 %v1282
          %v1284 = vpop.xlane.xlu0 %1283
          %v1285 = vadd.f32 %v1215, %v1217
          %1286 = vadd.xlane.f32.xlu0 %v1285
          %v1287 = vpop.xlane.xlu0 %1286
          %v1288 = vadd.f32 %v1221, %v1223
          %1289 = vadd.xlane.f32.xlu0 %v1288
          %v1290 = vpop.xlane.xlu0 %1289
          %v1291 = vadd.f32 %v1227, %v1229
          %1292 = vadd.xlane.f32.xlu0 %v1291
          %v1293 = vpop.xlane.xlu0 %1292
          %v1294 = vadd.f32 %v1233, %v1235
          %1295 = vadd.xlane.f32.xlu0 %v1294
          %v1296 = vpop.xlane.xlu0 %1295
          %v1297 = vadd.f32 %v1239, %v1241
          %1298 = vadd.xlane.f32.xlu0 %v1297
          %v1299 = vpop.xlane.xlu0 %1298
          %v1300 = vadd.f32 %v1245, %v1247
          %1301 = vadd.xlane.f32.xlu0 %v1300
          %v1302 = vpop.xlane.xlu0 %1301
          %v1303 = vadd.f32 %v1251, %v1253
          %1304 = vadd.xlane.f32.xlu0 %v1303
          %v1305 = vpop.xlane.xlu0 %1304
          %v1306 = vadd.f32 %v1257, %v1259
          %1307 = vadd.xlane.f32.xlu0 %v1306
          %v1308 = vpop.xlane.xlu0 %1307
          %v1309 = vmul.f32 %v1263, %v874
          %v1310 = vmul.f32 %v1266, %v874
          %v1311 = vmul.f32 %v1269, %v874
          %v1312 = vmul.f32 %v1272, %v874
          %v1313 = vmul.f32 %v1275, %v874
          %v1314 = vmul.f32 %v1278, %v874
          %v1315 = vmul.f32 %v1281, %v874
          %v1316 = vmul.f32 %v1284, %v874
          %v1317 = vmul.f32 %v1287, %v874
          %v1318 = vmul.f32 %v1290, %v874
          %v1319 = vmul.f32 %v1293, %v874
          %v1320 = vmul.f32 %v1296, %v874
          %v1321 = vmul.f32 %v1299, %v874
          %v1322 = vmul.f32 %v1302, %v874
          %v1323 = vmul.f32 %v1305, %v874
          %v1324 = vmul.f32 %v1308, %v874
          %v1325 = vsub.f32 %v1167, %v1309
          %v1326 = vsub.f32 %v1169, %v1309
          %v1327 = vsub.f32 %v1173, %v1310
          %v1328 = vsub.f32 %v1175, %v1310
          %v1329 = vsub.f32 %v1179, %v1311
          %v1330 = vsub.f32 %v1181, %v1311
          %v1331 = vsub.f32 %v1185, %v1312
          %v1332 = vsub.f32 %v1187, %v1312
          %v1333 = vsub.f32 %v1191, %v1313
          %v1334 = vsub.f32 %v1193, %v1313
          %v1335 = vsub.f32 %v1197, %v1314
          %v1336 = vsub.f32 %v1199, %v1314
          %v1337 = vsub.f32 %v1203, %v1315
          %v1338 = vsub.f32 %v1205, %v1315
          %v1339 = vsub.f32 %v1209, %v1316
          %v1340 = vsub.f32 %v1211, %v1316
          %v1341 = vsub.f32 %v1215, %v1317
          %v1342 = vsub.f32 %v1217, %v1317
          %v1343 = vsub.f32 %v1221, %v1318
          %v1344 = vsub.f32 %v1223, %v1318
          %v1345 = vsub.f32 %v1227, %v1319
          %v1346 = vsub.f32 %v1229, %v1319
          %v1347 = vsub.f32 %v1233, %v1320
          %v1348 = vsub.f32 %v1235, %v1320
          %v1349 = vsub.f32 %v1239, %v1321
          %v1350 = vsub.f32 %v1241, %v1321
          %v1351 = vsub.f32 %v1245, %v1322
          %v1352 = vsub.f32 %v1247, %v1322
          %v1353 = vsub.f32 %v1251, %v1323
          %v1354 = vsub.f32 %v1253, %v1323
          %v1355 = vsub.f32 %v1257, %v1324
          %v1356 = vsub.f32 %v1259, %v1324
          %v1357 = vmul.f32 %v1325, %v1325
          %v1358 = vmul.f32 %v1326, %v1326
          %v1359 = vmul.f32 %v1327, %v1327
          %v1360 = vmul.f32 %v1328, %v1328
          %v1361 = vmul.f32 %v1329, %v1329
          %v1362 = vmul.f32 %v1330, %v1330
          %v1363 = vmul.f32 %v1331, %v1331
          %v1364 = vmul.f32 %v1332, %v1332
          %v1365 = vmul.f32 %v1333, %v1333
          %v1366 = vmul.f32 %v1334, %v1334
          %v1367 = vmul.f32 %v1335, %v1335
          %v1368 = vmul.f32 %v1336, %v1336
          %v1369 = vmul.f32 %v1337, %v1337
          %v1370 = vmul.f32 %v1338, %v1338
          %v1371 = vmul.f32 %v1339, %v1339
          %v1372 = vmul.f32 %v1340, %v1340
          %v1373 = vmul.f32 %v1341, %v1341
          %v1374 = vmul.f32 %v1342, %v1342
          %v1375 = vmul.f32 %v1343, %v1343
          %v1376 = vmul.f32 %v1344, %v1344
          %v1377 = vmul.f32 %v1345, %v1345
          %v1378 = vmul.f32 %v1346, %v1346
          %v1379 = vmul.f32 %v1347, %v1347
          %v1380 = vmul.f32 %v1348, %v1348
          %v1381 = vmul.f32 %v1349, %v1349
          %v1382 = vmul.f32 %v1350, %v1350
          %v1383 = vmul.f32 %v1351, %v1351
          %v1384 = vmul.f32 %v1352, %v1352
          %v1385 = vmul.f32 %v1353, %v1353
          %v1386 = vmul.f32 %v1354, %v1354
          %v1387 = vmul.f32 %v1355, %v1355
          %v1388 = vmul.f32 %v1356, %v1356
          %v1389 = vadd.f32 %v1357, %v1358
          %1390 = vadd.xlane.f32.xlu0 %v1389
          %v1391 = vpop.xlane.xlu0 %1390
          %v1392 = vadd.f32 %v1359, %v1360
          %1393 = vadd.xlane.f32.xlu0 %v1392
          %v1394 = vpop.xlane.xlu0 %1393
          %v1395 = vadd.f32 %v1361, %v1362
          %1396 = vadd.xlane.f32.xlu0 %v1395
          %v1397 = vpop.xlane.xlu0 %1396
          %v1398 = vadd.f32 %v1363, %v1364
          %1399 = vadd.xlane.f32.xlu0 %v1398
          %v1400 = vpop.xlane.xlu0 %1399
          %v1401 = vadd.f32 %v1365, %v1366
          %1402 = vadd.xlane.f32.xlu0 %v1401
          %v1403 = vpop.xlane.xlu0 %1402
          %v1404 = vadd.f32 %v1367, %v1368
          %1405 = vadd.xlane.f32.xlu0 %v1404
          %v1406 = vpop.xlane.xlu0 %1405
          %v1407 = vadd.f32 %v1369, %v1370
          %1408 = vadd.xlane.f32.xlu0 %v1407
          %v1409 = vpop.xlane.xlu0 %1408
          %v1410 = vadd.f32 %v1371, %v1372
          %1411 = vadd.xlane.f32.xlu0 %v1410
          %v1412 = vpop.xlane.xlu0 %1411
          %v1413 = vadd.f32 %v1373, %v1374
          %1414 = vadd.xlane.f32.xlu0 %v1413
          %v1415 = vpop.xlane.xlu0 %1414
          %v1416 = vadd.f32 %v1375, %v1376
          %1417 = vadd.xlane.f32.xlu0 %v1416
          %v1418 = vpop.xlane.xlu0 %1417
          %v1419 = vadd.f32 %v1377, %v1378
          %1420 = vadd.xlane.f32.xlu0 %v1419
          %v1421 = vpop.xlane.xlu0 %1420
          %v1422 = vadd.f32 %v1379, %v1380
          %1423 = vadd.xlane.f32.xlu0 %v1422
          %v1424 = vpop.xlane.xlu0 %1423
          %v1425 = vadd.f32 %v1381, %v1382
          %1426 = vadd.xlane.f32.xlu0 %v1425
          %v1427 = vpop.xlane.xlu0 %1426
          %v1428 = vadd.f32 %v1383, %v1384
          %1429 = vadd.xlane.f32.xlu0 %v1428
          %v1430 = vpop.xlane.xlu0 %1429
          %v1431 = vadd.f32 %v1385, %v1386
          %1432 = vadd.xlane.f32.xlu0 %v1431
          %v1433 = vpop.xlane.xlu0 %1432
          %v1434 = vadd.f32 %v1387, %v1388
          %1435 = vadd.xlane.f32.xlu0 %v1434
          %v1436 = vpop.xlane.xlu0 %1435
          %v1437 = vmul.f32 %v1391, %v874
          %v1438 = vmul.f32 %v1394, %v874
          %v1439 = vmul.f32 %v1397, %v874
          %v1440 = vmul.f32 %v1400, %v874
          %v1441 = vmul.f32 %v1403, %v874
          %v1442 = vmul.f32 %v1406, %v874
          %v1443 = vmul.f32 %v1409, %v874
          %v1444 = vmul.f32 %v1412, %v874
          %v1445 = vmul.f32 %v1415, %v874
          %v1446 = vmul.f32 %v1418, %v874
          %v1447 = vmul.f32 %v1421, %v874
          %v1448 = vmul.f32 %v1424, %v874
          %v1449 = vmul.f32 %v1427, %v874
          %v1450 = vmul.f32 %v1430, %v874
          %v1451 = vmul.f32 %v1433, %v874
          %v1452 = vmul.f32 %v1436, %v874
          %v1453 = vadd.f32 %v1437, 1e-05
          %v1454 = vadd.f32 %v1438, 1e-05
          %v1455 = vadd.f32 %v1439, 1e-05
          %v1456 = vadd.f32 %v1440, 1e-05
          %v1457 = vadd.f32 %v1441, 1e-05
          %v1458 = vadd.f32 %v1442, 1e-05
          %v1459 = vadd.f32 %v1443, 1e-05
          %v1460 = vadd.f32 %v1444, 1e-05
          %v1461 = vadd.f32 %v1445, 1e-05
          %v1462 = vadd.f32 %v1446, 1e-05
          %v1463 = vadd.f32 %v1447, 1e-05
          %v1464 = vadd.f32 %v1448, 1e-05
          %v1465 = vadd.f32 %v1449, 1e-05
          %v1466 = vadd.f32 %v1450, 1e-05
          %v1467 = vadd.f32 %v1451, 1e-05
          %v1468 = vadd.f32 %v1452, 1e-05
          %v1469 = vrsqrt.pop %v1453
          %v1470 = vrsqrt.pop %v1454
          %v1471 = vrsqrt.pop %v1455
          %v1472 = vrsqrt.pop %v1456
          %v1473 = vrsqrt.pop %v1457
          %v1474 = vrsqrt.pop %v1458
          %v1475 = vrsqrt.pop %v1459
          %v1476 = vrsqrt.pop %v1460
          %v1477 = vrsqrt.pop %v1461
          %v1478 = vrsqrt.pop %v1462
          %v1479 = vrsqrt.pop %v1463
          %v1480 = vrsqrt.pop %v1464
          %v1481 = vrsqrt.pop %v1465
          %v1482 = vrsqrt.pop %v1466
          %v1483 = vrsqrt.pop %v1467
          %v1484 = vrsqrt.pop %v1468
          %v1485 = vmul.f32 %v1325, %v1469
          %v1486 = vmul.f32 %v1326, %v1469
          %v1487 = vmul.f32 %v1327, %v1470
          %v1488 = vmul.f32 %v1328, %v1470
          %v1489 = vmul.f32 %v1329, %v1471
          %v1490 = vmul.f32 %v1330, %v1471
          %v1491 = vmul.f32 %v1331, %v1472
          %v1492 = vmul.f32 %v1332, %v1472
          %v1493 = vmul.f32 %v1333, %v1473
          %v1494 = vmul.f32 %v1334, %v1473
          %v1495 = vmul.f32 %v1335, %v1474
          %v1496 = vmul.f32 %v1336, %v1474
          %v1497 = vmul.f32 %v1337, %v1475
          %v1498 = vmul.f32 %v1338, %v1475
          %v1499 = vmul.f32 %v1339, %v1476
          %v1500 = vmul.f32 %v1340, %v1476
          %v1501 = vmul.f32 %v1341, %v1477
          %v1502 = vmul.f32 %v1342, %v1477
          %v1503 = vmul.f32 %v1343, %v1478
          %v1504 = vmul.f32 %v1344, %v1478
          %v1505 = vmul.f32 %v1345, %v1479
          %v1506 = vmul.f32 %v1346, %v1479
          %v1507 = vmul.f32 %v1347, %v1480
          %v1508 = vmul.f32 %v1348, %v1480
          %v1509 = vmul.f32 %v1349, %v1481
          %v1510 = vmul.f32 %v1350, %v1481
          %v1511 = vmul.f32 %v1351, %v1482
          %v1512 = vmul.f32 %v1352, %v1482
          %v1513 = vmul.f32 %v1353, %v1483
          %v1514 = vmul.f32 %v1354, %v1483
          %v1515 = vmul.f32 %v1355, %v1484
          %v1516 = vmul.f32 %v1356, %v1484
          %v1517 = vmax.f32 %v1485, 0.0
          %v1518 = vmax.f32 %v1486, 0.0
          %v1519 = vmax.f32 %v1487, 0.0
          %v1520 = vmax.f32 %v1488, 0.0
          %v1521 = vmax.f32 %v1489, 0.0
          %v1522 = vmax.f32 %v1490, 0.0
          %v1523 = vmax.f32 %v1491, 0.0
          %v1524 = vmax.f32 %v1492, 0.0
          %v1525 = vmax.f32 %v1493, 0.0
          %v1526 = vmax.f32 %v1494, 0.0
          %v1527 = vmax.f32 %v1495, 0.0
          %v1528 = vmax.f32 %v1496, 0.0
          %v1529 = vmax.f32 %v1497, 0.0
          %v1530 = vmax.f32 %v1498, 0.0
          %v1531 = vmax.f32 %v1499, 0.0
          %v1532 = vmax.f32 %v1500, 0.0
          %v1533 = vmax.f32 %v1501, 0.0
          %v1534 = vmax.f32 %v1502, 0.0
          %v1535 = vmax.f32 %v1503, 0.0
          %v1536 = vmax.f32 %v1504, 0.0
          %v1537 = vmax.f32 %v1505, 0.0
          %v1538 = vmax.f32 %v1506, 0.0
          %v1539 = vmax.f32 %v1507, 0.0
          %v1540 = vmax.f32 %v1508, 0.0
          %v1541 = vmax.f32 %v1509, 0.0
          %v1542 = vmax.f32 %v1510, 0.0
          %v1543 = vmax.f32 %v1511, 0.0
          %v1544 = vmax.f32 %v1512, 0.0
          %v1545 = vmax.f32 %v1513, 0.0
          %v1546 = vmax.f32 %v1514, 0.0
          %v1547 = vmax.f32 %v1515, 0.0
          %v1548 = vmax.f32 %v1516, 0.0
          %v1549 = vadd.f32 %v1517, %v615
          %v1550 = vadd.f32 %v1518, %v616
          %v1551 = vadd.f32 %v1519, %v617
          %v1552 = vadd.f32 %v1520, %v618
          %v1553 = vadd.f32 %v1521, %v619
          %v1554 = vadd.f32 %v1522, %v620
          %v1555 = vadd.f32 %v1523, %v621
          %v1556 = vadd.f32 %v1524, %v622
          %v1557 = vadd.f32 %v1525, %v623
          %v1558 = vadd.f32 %v1526, %v624
          %v1559 = vadd.f32 %v1527, %v625
          %v1560 = vadd.f32 %v1528, %v626
          %v1561 = vadd.f32 %v1529, %v627
          %v1562 = vadd.f32 %v1530, %v628
          %v1563 = vadd.f32 %v1531, %v629
          %v1564 = vadd.f32 %v1532, %v630
          %v1565 = vadd.f32 %v1533, %v631
          %v1566 = vadd.f32 %v1534, %v632
          %v1567 = vadd.f32 %v1535, %v633
          %v1568 = vadd.f32 %v1536, %v634
          %v1569 = vadd.f32 %v1537, %v635
          %v1570 = vadd.f32 %v1538, %v636
          %v1571 = vadd.f32 %v1539, %v637
          %v1572 = vadd.f32 %v1540, %v638
          %v1573 = vadd.f32 %v1541, %v639
          %v1574 = vadd.f32 %v1542, %v640
          %v1575 = vadd.f32 %v1543, %v641
          %v1576 = vadd.f32 %v1544, %v642
          %v1577 = vadd.f32 %v1545, %v643
          %v1578 = vadd.f32 %v1546, %v644
          %v1579 = vadd.f32 %v1547, %v645
          %v1580 = vadd.f32 %v1548, %v646
          %1581 = vst [vmem:[%s247] sm:$0xff] %v1549
          %1582 = vst [vmem:[%s247 + $0x8] sm:$0xff] %v1550
          %1583 = vst [vmem:[%s247 + $0x10] sm:$0xff] %v1551
          %1584 = vst [vmem:[%s247 + $0x18] sm:$0xff] %v1552
          %1585 = vst [vmem:[%s247 + $0x20] sm:$0xff] %v1553
          %1586 = vst [vmem:[%s247 + $0x28] sm:$0xff] %v1554
          %1587 = vst [vmem:[%s247 + $0x30] sm:$0xff] %v1555
          %1588 = vst [vmem:[%s247 + $0x38] sm:$0xff] %v1556
          %1589 = vst [vmem:[%s247 + $0x40] sm:$0xff] %v1557
          %1590 = vst [vmem:[%s247 + $0x48] sm:$0xff] %v1558
          %1591 = vst [vmem:[%s247 + $0x50] sm:$0xff] %v1559
          %1592 = vst [vmem:[%s247 + $0x58] sm:$0xff] %v1560
          %1593 = vst [vmem:[%s247 + $0x60] sm:$0xff] %v1561
          %1594 = vst [vmem:[%s247 + $0x68] sm:$0xff] %v1562
          %1595 = vst [vmem:[%s247 + $0x70] sm:$0xff] %v1563
          %1596 = vst [vmem:[%s247 + $0x78] sm:$0xff] %v1564
          %1597 = vst [vmem:[%s247 + $0x80] sm:$0xff] %v1565
          %1598 = vst [vmem:[%s247 + $0x88] sm:$0xff] %v1566
          %1599 = vst [vmem:[%s247 + $0x90] sm:$0xff] %v1567
          %1600 = vst [vmem:[%s247 + $0x98] sm:$0xff] %v1568
          %1601 = vst [vmem:[%s247 + $0xa0] sm:$0xff] %v1569
          %1602 = vst [vmem:[%s247 + $0xa8] sm:$0xff] %v1570
          %1603 = vst [vmem:[%s247 + $0xb0] sm:$0xff] %v1571
          %1604 = vst [vmem:[%s247 + $0xb8] sm:$0xff] %v1572
          %1605 = vst [vmem:[%s247 + $0xc0] sm:$0xff] %v1573
          %1606 = vst [vmem:[%s247 + $0xc8] sm:$0xff] %v1574
          %1607 = vst [vmem:[%s247 + $0xd0] sm:$0xff] %v1575
          %1608 = vst [vmem:[%s247 + $0xd8] sm:$0xff] %v1576
          %1609 = vst [vmem:[%s247 + $0xe0] sm:$0xff] %v1577
          %1610 = vst [vmem:[%s247 + $0xe8] sm:$0xff] %v1578
          %1611 = vst [vmem:[%s247 + $0xf0] sm:$0xff] %v1579
          %1612 = vst [vmem:[%s247 + $0xf8] sm:$0xff] %v1580
        $region53: #{tpu_custom_call.1} parent=39 // loop_footer
          %s614 = sadd.s32 1, %s610
        $region54: #{tpu_custom_call.1} parent=39 // loop_footer_branch
          %609 = sbr.rel target = $region50
        $region55: #{tpu_custom_call.1} parent=39 // loop_exit
          _
        %s1613 = sand.u32 %s139, 1
        %s1614 = scalar_lea.sflag [#allocation4], %s1613
        %s1615 = sand.u32 %s139, 1
        %s1616 = smul.addr %s1615, 256
        %s1617 = scalar_lea.vmem [#allocation7], %s1616
        // Predicated region
        $region56: #{tpu_custom_call.1} parent=39 // pred_check
          %p1618 = pneg %p149
        $region57: #{tpu_custom_call.1} parent=39 // pred_check_branch
          %1620 = sbr.rel (%p1618) target = $region59
        $region58: #{tpu_custom_call.1} parent=39 // pred_region
          %s1622 = ssub.s32 4096, 4096
          %1623 = vsyncadd %s1614, %s1622
          %s1624 = smul.addr %s21, 32
          %s1625 = smul.addr %s1624, 128
          %s1626 = scalar_lea.hbm %s5, %s1625
          %s1627 = sshll.u32 %s1617, 4
          %s1628 = int_to_ptr.vmem [resolvable:$true] %s1627
          %1633 = dma.vmem_to_hbm [thread:$0]  %s1628, 4096, %s1626, %s1614, 256, 256, 16
        $region59: #{tpu_custom_call.1} parent=39 // pred_fallthru
          _
      $region40: #{tpu_custom_call.1} parent=5 // pred_fallthru
        _
      %p1634 = scmp.le.s32.totalorder 2, %s16
      // Predicated region
      $region60: #{tpu_custom_call.1} parent=5 // pred_check
        %p1635 = pneg %p1634
      $region61: #{tpu_custom_call.1} parent=5 // pred_check_branch
        %1637 = sbr.rel (%p1635) target = $region63
      $region62: #{tpu_custom_call.1} parent=5 // pred_region
        %s1638 = ssub.s32 %s16, 2
        // Predicated region
        $region64: #{tpu_custom_call.1} parent=62 // pred_check
          %p1639 = pneg %p155
        $region65: #{tpu_custom_call.1} parent=62 // pred_check_branch
          %1641 = sbr.rel (%p1639) target = $region67
        $region66: #{tpu_custom_call.1} parent=62 // pred_region
          %s1642 = sand.u32 %s140, 1
          %s1643 = scalar_lea.sflag [#allocation4], %s1642
          %s1644 = sand.u32 %s140, 1
          %s1645 = smul.addr %s1644, 256
          %s1646 = scalar_lea.vmem [#allocation7], %s1645
          %1647 = dma.done %s1643, 4096
        $region67: #{tpu_custom_call.1} parent=62 // pred_fallthru
          _
      $region63: #{tpu_custom_call.1} parent=5 // pred_fallthru
        _
    $region6: #{tpu_custom_call.1} parent=1 // loop_footer
      %s20 = sadd.s32 1, %s16
    $region7: #{tpu_custom_call.1} parent=1 // loop_footer_branch
      %15 = sbr.rel target = $region3
    $region8: #{tpu_custom_call.1} parent=1 // loop_exit
      _
    %1648 = vsyncpa [#allocation3], 1
    %s1649 = scalar_lea.sflag [#allocation3], 1
    %1650 = vsyncpa %s1649, 1
    %1651 = vsyncpa [#allocation6], 1
    %1652 = vsyncpa [#allocation4], 1
    %s1653 = scalar_lea.sflag [#allocation4], 1
    %1654 = vsyncpa %s1653, 1

</llo_original>
